<compile_context>
chip_gen: v5e
topology: v5e:2x2
jax: 0.10.0
libtpu: 0.0.40
codegen_flags: <defaults>
</compile_context>

<pallas_src>
import jax
import jax.numpy as jnp
import numpy as np
from jax.experimental import pallas as pl
from jax.experimental.pallas import tpu as pltpu


_DEFAULT_TM = 1024                   # base-pixel rows per grid step (review #3)
_VMEM_LIMIT = 48 * 1024 * 1024       # headroom below v7x's 64 MiB physical VMEM


def _pick_tm(m):
    return m if m <= _DEFAULT_TM else _DEFAULT_TM


def _compiler_params():
    return pltpu.CompilerParams(
        dimension_semantics=("parallel",),   # independent pixel-row tiles
        vmem_limit_bytes=_VMEM_LIMIT,
    )


# ----------------------------------------------------------------------------
# Fused decoder kernel: per base pixel, the whole decoder is computed in VMEM.
# Offset conventions (kernel==stride==2 everywhere):
#   o1 = a1*2 + b1   (upsample_1 offset, 2x resolution)
#   o2 = a2*2 + b2   (upsample_2 offset, 4x resolution)
#   o3 = a3*2 + b3   (upsample_3 offset, 8x resolution)
#   final output column = o1*16 + o2*4 + o3  ->  8x8 block per base pixel.
# ----------------------------------------------------------------------------
def _decoder_fused_kernel(x_ref, p4_ref, p3_ref,
                          w8a_ref, b8a_ref, w8b_ref, b8b_ref,
                          w1_ref, b1_ref,
                          w2m_ref, w2s_ref, b2_ref,
                          w3m_bd_ref, w3s_bd_ref, b3_ref,
                          o_ref):
    f32 = jnp.float32
    cdt = x_ref.dtype
    c1 = w2m_ref.shape[0]            # upsample_1 out channels (main path of upsample_2)
    cs2 = w2s_ref.shape[0]           # pool_4 channels (skip path of upsample_2)
    nsub = w3m_bd_ref.shape[1]       # 16 = (a2,b2) x (a3,b3) output columns per (a1,b1)

    x = x_ref[...]

    # conv_8_column: 1x1 conv -> ReLU -> Dropout(p=0.8, identity at inference) -> 1x1 conv
    h = jnp.dot(x, w8a_ref[...], preferred_element_type=f32)
    h = jnp.maximum(h + b8a_ref[...], 0.0).astype(cdt)           # f32 epilogue, bf16 out
    x8 = (jnp.dot(h, w8b_ref[...], preferred_element_type=f32) + b8b_ref[...]).astype(cdt)

    # upsample_1_column (ConvTranspose2d k=s=2) as one matmul; columns are
    # (a1,b1)-offset blocks of c1 channels.
    z1 = (jnp.dot(x8, w1_ref[...], preferred_element_type=f32) + b1_ref[...]).astype(cdt)

    p4 = p4_ref[...]
    # pool_3 skip of upsample_3 for all 16 4x-offsets in one block-diagonal matmul.
    skip3 = jnp.dot(p3_ref[...], w3s_bd_ref[...], preferred_element_type=f32)

    # upsample_2_column (+ pool_4 skip) and upsample_3_column, per (a1,b1) offset block.
    outs = []
    for o1 in range(4):
        z2 = jnp.dot(z1[:, o1 * c1:(o1 + 1) * c1], w2m_ref[...],
                     preferred_element_type=f32)
        # pool_4 skip: tiny-K matmul (K=8).  Cheap in bytes; see review item #7.
        z2 = z2 + jnp.dot(p4[:, o1 * cs2:(o1 + 1) * cs2], w2s_ref[...],
                          preferred_element_type=f32)
        z2 = (z2 + b2_ref[...]).astype(cdt)                       # [tm, 4*256] bf16
        # upsample_3 main path: block-diagonal weight -> all 16 output columns at once.
        y = jnp.dot(z2, w3m_bd_ref[...], preferred_element_type=f32)
        y = y + skip3[:, o1 * nsub:(o1 + 1) * nsub] + b3_ref[...]
        outs.append(y)
    o_ref[...] = jnp.concatenate(outs, axis=-1).astype(o_ref.dtype)


def decoder_fused(x_rows, p4_rows, p3_rows, pp, out_dtype=jnp.float32):
    """x_rows: [M,256] bf16, p4_rows: [M,4*c4] bf16, p3_rows: [M,16*c3] bf16
       -> [M, 64] out_dtype (8x8 output block per base pixel)."""
    m, cin = x_rows.shape
    c4 = p4_rows.shape[1]
    c3 = p3_rows.shape[1]
    tm = _pick_tm(m)

    w8a, b8a = pp["w8a"], pp["b8a"]
    w8b, b8b = pp["w8b"], pp["b8b"]
    w1, b1 = pp["w1"], pp["b1"]
    w2m, w2s, b2 = pp["w2m"], pp["w2s"], pp["b2"]
    w3m_bd, w3s_bd, b3 = pp["w3m_bd"], pp["w3s_bd"], pp["b3"]

    n_out = 4 * w3m_bd.shape[1]                  # 64 output columns per base pixel
    assert w3s_bd.shape[1] == n_out

    flops = 2 * m * (
        w8a.shape[0] * w8a.shape[1]
        + w8b.shape[0] * w8b.shape[1]
        + w1.shape[0] * w1.shape[1]
        + 4 * (w2m.shape[0] + w2s.shape[0]) * w2m.shape[1]
        + 4 * w3m_bd.shape[0] * w3m_bd.shape[1]
        + w3s_bd.shape[0] * w3s_bd.shape[1]
    )
    w_bytes = sum(int(np.prod(a.shape)) * a.dtype.itemsize
                  for a in (w8a, b8a, w8b, b8b, w1, b1, w2m, w2s, b2,
                            w3m_bd, w3s_bd, b3))
    cost = pl.CostEstimate(
        flops=flops,
        transcendentals=0,
        bytes_accessed=m * (cin + c4 + c3) * x_rows.dtype.itemsize
        + w_bytes + m * n_out * np.dtype(out_dtype).itemsize,
    )

    def row_spec(cols):
        return pl.BlockSpec((tm, cols), lambda i: (i, 0))

    def full_spec(a):
        return pl.BlockSpec(a.shape, lambda i: (0, 0))   # constant index -> VMEM-resident

    return pl.pallas_call(
        _decoder_fused_kernel,
        out_shape=jax.ShapeDtypeStruct((m, n_out), out_dtype),
        grid=(pl.cdiv(m, tm),),
        in_specs=[
            row_spec(cin), row_spec(c4), row_spec(c3),
            full_spec(w8a), full_spec(b8a), full_spec(w8b), full_spec(b8b),
            full_spec(w1), full_spec(b1),
            full_spec(w2m), full_spec(w2s), full_spec(b2),
            full_spec(w3m_bd), full_spec(w3s_bd), full_spec(b3),
        ],
        out_specs=pl.BlockSpec((tm, n_out), lambda i: (i, 0)),
        compiler_params=_compiler_params(),
        cost_estimate=cost,
    )(x_rows, p4_rows, p3_rows,
      w8a, b8a, w8b, b8b, w1, b1, w2m, w2s, b2, w3m_bd, w3s_bd, b3)


# ----------------------------------------------------------------------------
# Parameter preprocessing (done ONCE, outside the forward pass)
# ----------------------------------------------------------------------------
def prepare_params(params, kernels, strides, channels):
    """PyTorch-layout params -> matmul-ready bf16 weights / f32 bias rows."""
    assert kernels[0] == 1 and strides[0] == 1, "conv_8_column assumed 1x1/stride1"
    assert tuple(kernels[1:]) == (2, 2, 2) and tuple(strides[1:]) == (2, 2, 2), \
        "fused decoder implemented for ConvTranspose2d kernel==stride==2"
    # TODO(synk): general kernel==stride!=2 (and overlapping kernel!=stride) paths.

    bf16 = jnp.bfloat16

    def conv1x1_w(w):                       # [Cout, Cin, 1, 1] -> [Cin, Cout]
        cout, cin = w.shape[0], w.shape[1]
        return jnp.asarray(jnp.asarray(w).reshape(cout, cin).T, bf16)

    def convT_w(w):                         # [Cin, Cout, 2, 2] -> [Cin, 4*Cout], cols=(a,b,co)
        w = jnp.asarray(w)
        cin, cout = w.shape[0], w.shape[1]
        return jnp.asarray(jnp.transpose(w, (0, 2, 3, 1)).reshape(cin, 4 * cout), bf16)

    def bias_row(b):
        return jnp.asarray(b, jnp.float32).reshape(1, -1)

    c1 = params["w_up1"].shape[1]                      # 128 (upsample_1 out channels)
    c2 = params["w_up2"].shape[1]                      # 256 (upsample_2 out channels)
    cs2 = params["w_up2"].shape[0] - c1                # pool_4 channels
    cs3 = params["w_up3"].shape[0] - c2                # pool_3 channels
    assert cs2 == channels[0] and cs3 == channels[1]

    w_up2 = jnp.asarray(params["w_up2"])
    w_up3 = jnp.asarray(params["w_up3"])

    # upsample_3 (Cout == 1): build block-diagonal weights once so the 16 tiny-N
    # matmuls collapse into one [4*c2,16] (per 2x-offset block) and one [16*cs3,64]
    # matmul per row tile.
    w3m = jnp.asarray(w_up3[:c2].reshape(c2, 4), jnp.float32)
    w3s = jnp.asarray(w_up3[c2:].reshape(cs3, 4), jnp.float32)
    w3m_bd = jnp.asarray(jnp.kron(jnp.eye(4, dtype=jnp.float32), w3m), bf16)    # [4*c2, 16]
    w3s_bd = jnp.asarray(jnp.kron(jnp.eye(16, dtype=jnp.float32), w3s), bf16)   # [16*cs3, 64]

    return {
        "w8a": conv1x1_w(params["w8a"]), "b8a": bias_row(params["b8a"]),
        "w8b": conv1x1_w(params["w8b"]), "b8b": bias_row(params["b8b"]),
        "w1": convT_w(params["w_up1"]),
        "b1": bias_row(jnp.tile(jnp.asarray(params["b_up1"], jnp.float32), 4)),
        "w2m": convT_w(w_up2[:c1]),
        "w2s": convT_w(w_up2[c1:]),
        "b2": bias_row(jnp.tile(jnp.asarray(params["b_up2"], jnp.float32), 4)),
        "w3m_bd": w3m_bd,
        "w3s_bd": w3s_bd,
        "b3": bias_row(jnp.tile(jnp.repeat(jnp.asarray(params["b_up3"], jnp.float32), 4), 4)),
    }


# ----------------------------------------------------------------------------
# ColumnDecoder forward (inference)
# ----------------------------------------------------------------------------
def column_decoder_forward(prepared, x_nchw, pool_3_nchw, pool_4_nchw, kernels):
    assert kernels[0] == 1 and tuple(kernels[1:]) == (2, 2, 2)
    n, _, h, w = x_nchw.shape
    bf16 = jnp.bfloat16

    # Boundary layout: cast to bf16 FIRST (halves the transpose's HBM traffic), then
    # one XLA transpose per external tensor.  The skip tensors are pixel-unshuffled so
    # their rows line up with base pixels (fused into the same transpose).
    x = jnp.transpose(x_nchw.astype(bf16), (0, 2, 3, 1)).reshape(n * h * w, -1)

    c4 = pool_4_nchw.shape[1]
    p4 = pool_4_nchw.astype(bf16).reshape(n, c4, h, 2, w, 2)
    p4 = jnp.transpose(p4, (0, 2, 4, 3, 5, 1)).reshape(n * h * w, 4 * c4)

    c3 = pool_3_nchw.shape[1]
    p3 = pool_3_nchw.astype(bf16).reshape(n, c3, h, 2, 2, w, 2, 2)
    p3 = jnp.transpose(p3, (0, 2, 5, 3, 6, 4, 7, 1)).reshape(n * h * w, 16 * c3)

    # Single fused kernel: conv8 -> up1 -> up2(+pool_4) -> up3(+pool_3).
    y = decoder_fused(x, p4, p3, prepared, out_dtype=jnp.float32)   # [n*h*w, 64]

    # Final pixel-shuffle of each base pixel's 8x8 block into NCHW (one XLA transpose).
    # TODO(synk): fold this interleave into the kernel's out_spec store pattern so the
    #             [M, 64] block never round-trips HBM.
    y = y.reshape(n, h, w, 2, 2, 2, 2, 2, 2)         # (a1, b1, a2, b2, a3, b3)
    y = jnp.transpose(y, (0, 1, 3, 5, 7, 2, 4, 6, 8))
    return y.reshape(n, 1, 8 * h, 8 * w)


# ----------------------------------------------------------------------------
# Pure-jnp f32 reference (same math as the PyTorch module, inference mode)
# ----------------------------------------------------------------------------
def _ref_forward(params, x, pool_3_out, pool_4_out, kernels):
    def conv1x1(x, w, b):
        n, cin, h, wd = x.shape
        cout = w.shape[0]
        xf = jnp.transpose(x, (0, 2, 3, 1)).reshape(n * h * wd, cin)
        y = xf @ w.reshape(cout, cin).T + b[None, :]
        return jnp.transpose(y.reshape(n, h, wd, cout), (0, 3, 1, 2))

    def convT(x, w, b, k):
        n, cin, h, wd = x.shape
        cout = w.shape[1]
        xf = jnp.transpose(x, (0, 2, 3, 1)).reshape(n * h * wd, cin)
        y = xf @ w.reshape(cin, cout * k * k) + jnp.repeat(b, k * k)[None, :]
        y = y.reshape(n, h, wd, cout, k, k)
        return jnp.transpose(y, (0, 3, 1, 4, 2, 5)).reshape(n, cout, h * k, wd * k)

    x = conv1x1(x, params["w8a"], params["b8a"])
    x = jnp.maximum(x, 0.0)            # ReLU; Dropout(0.8) is identity in eval mode
    x = conv1x1(x, params["w8b"], params["b8b"])
    out = convT(x, params["w_up1"], params["b_up1"], kernels[1])
    out = jnp.concatenate([out, pool_4_out], axis=1)
    out = convT(out, params["w_up2"], params["b_up2"], kernels[2])
    out = jnp.concatenate([out, pool_3_out], axis=1)
    out = convT(out, params["w_up3"], params["b_up3"], kernels[3])
    return out


# ----------------------------------------------------------------------------
if __name__ == "__main__":
    channels = (8, 8)                 # (pool_4 channels, pool_3 channels)
    kernels = (1, 2, 2, 2)
    strides = (1, 2, 2, 2)
    N, H, W = 2, 4, 4

    key = jax.random.PRNGKey(0)
    ks = jax.random.split(key, 13)
    s = 0.05

    params = {
        "w8a":   s * jax.random.normal(ks[0], (256, 256, 1, 1), jnp.float32),
        "b8a":   s * jax.random.normal(ks[1], (256,), jnp.float32),
        "w8b":   s * jax.random.normal(ks[2], (256, 256, 1, 1), jnp.float32),
        "b8b":   s * jax.random.normal(ks[3], (256,), jnp.float32),
        "w_up1": s * jax.random.normal(ks[4], (256, 128, kernels[1], kernels[1]), jnp.float32),
        "b_up1": s * jax.random.normal(ks[5], (128,), jnp.float32),
        "w_up2": s * jax.random.normal(ks[6], (128 + channels[0], 256, kernels[2], kernels[2]), jnp.float32),
        "b_up2": s * jax.random.normal(ks[7], (256,), jnp.float32),
        "w_up3": s * jax.random.normal(ks[8], (256 + channels[1], 1, kernels[3], kernels[3]), jnp.float32),
        "b_up3": s * jax.random.normal(ks[9], (1,), jnp.float32),
    }

    x = jax.random.normal(ks[10], (N, 256, H, W), jnp.float32)
    pool_4_out = jax.random.normal(ks[11], (N, channels[0], 2 * H, 2 * W), jnp.float32)
    pool_3_out = jax.random.normal(ks[12], (N, channels[1], 4 * H, 4 * W), jnp.float32)

    prepared = prepare_params(params, kernels, strides, channels)
    fwd = jax.jit(column_decoder_forward, static_argnums=(4,))

    out = jax.block_until_ready(fwd(prepared, x, pool_3_out, pool_4_out, kernels))
    assert out.shape == (N, 1, 8 * H, 8 * W), out.shape

    ref = jax.block_until_ready(_ref_forward(params, x, pool_3_out, pool_4_out, kernels))
    # bf16 matmul operands with f32 accumulation -> loosened tolerance vs f32 reference.
    np.testing.assert_allclose(np.asarray(out), np.asarray(ref), rtol=2e-2, atol=2e-2)

    print("KERNEL_OK")
</pallas_src>

<mosaic_0001>
module attributes {stable_mosaic.version = 11 : i64} {
  func.func @_decoder_fused_kernel(%arg0: i32, %arg1: memref<32x256xbf16, #tpu.memory_space<vmem>>, %arg2: memref<32x32xbf16, #tpu.memory_space<vmem>>, %arg3: memref<32x128xbf16, #tpu.memory_space<vmem>>, %arg4: memref<256x256xbf16, #tpu.memory_space<vmem>>, %arg5: memref<1x256xf32, #tpu.memory_space<vmem>>, %arg6: memref<256x256xbf16, #tpu.memory_space<vmem>>, %arg7: memref<1x256xf32, #tpu.memory_space<vmem>>, %arg8: memref<256x512xbf16, #tpu.memory_space<vmem>>, %arg9: memref<1x512xf32, #tpu.memory_space<vmem>>, %arg10: memref<128x1024xbf16, #tpu.memory_space<vmem>>, %arg11: memref<8x1024xbf16, #tpu.memory_space<vmem>>, %arg12: memref<1x1024xf32, #tpu.memory_space<vmem>>, %arg13: memref<1024x16xbf16, #tpu.memory_space<vmem>>, %arg14: memref<128x64xbf16, #tpu.memory_space<vmem>>, %arg15: memref<1x16xf32, #tpu.memory_space<vmem>>, %arg16: memref<32x64xf32, #tpu.memory_space<vmem>>) attributes {dimension_semantics = [#tpu.dimension_semantics<parallel>], iteration_bounds = array<i64: 1>, scalar_prefetch = 0 : i64, scratch_operands = 0 : i64, tpu.core_type = #tpu.core_type<tc>, window_params = [{transform_indices = @transform_0, window_bounds = array<i64: 32, 256>}, {transform_indices = @transform_1, window_bounds = array<i64: 32, 32>}, {transform_indices = @transform_2, window_bounds = array<i64: 32, 128>}, {pipeline_mode = #tpu.pipeline_mode<synchronous>, transform_indices = @transform_3, window_bounds = array<i64: 256, 256>}, {pipeline_mode = #tpu.pipeline_mode<synchronous>, transform_indices = @transform_4, window_bounds = array<i64: 1, 256>}, {pipeline_mode = #tpu.pipeline_mode<synchronous>, transform_indices = @transform_5, window_bounds = array<i64: 256, 256>}, {pipeline_mode = #tpu.pipeline_mode<synchronous>, transform_indices = @transform_6, window_bounds = array<i64: 1, 256>}, {pipeline_mode = #tpu.pipeline_mode<synchronous>, transform_indices = @transform_7, window_bounds = array<i64: 256, 512>}, {pipeline_mode = #tpu.pipeline_mode<synchronous>, transform_indices = @transform_8, window_bounds = array<i64: 1, 512>}, {pipeline_mode = #tpu.pipeline_mode<synchronous>, transform_indices = @transform_9, window_bounds = array<i64: 128, 1024>}, {pipeline_mode = #tpu.pipeline_mode<synchronous>, transform_indices = @transform_10, window_bounds = array<i64: 8, 1024>}, {pipeline_mode = #tpu.pipeline_mode<synchronous>, transform_indices = @transform_11, window_bounds = array<i64: 1, 1024>}, {pipeline_mode = #tpu.pipeline_mode<synchronous>, transform_indices = @transform_12, window_bounds = array<i64: 1024, 16>}, {pipeline_mode = #tpu.pipeline_mode<synchronous>, transform_indices = @transform_13, window_bounds = array<i64: 128, 64>}, {pipeline_mode = #tpu.pipeline_mode<synchronous>, transform_indices = @transform_14, window_bounds = array<i64: 1, 16>}, {transform_indices = @transform_15, window_bounds = array<i64: 32, 64>}]} {
    %c0 = arith.constant 0 : index
    %c0_0 = arith.constant 0 : index
    %0 = vector.load %arg1[%c0, %c0_0] : memref<32x256xbf16, #tpu.memory_space<vmem>>, vector<32x256xbf16>
    %c0_1 = arith.constant 0 : index
    %c0_2 = arith.constant 0 : index
    %1 = vector.load %arg4[%c0_1, %c0_2] : memref<256x256xbf16, #tpu.memory_space<vmem>>, vector<256x256xbf16>
    %cst = arith.constant dense<0.000000e+00> : vector<32x256xf32>
    %2 = tpu.matmul %0, %1, %cst {dimension_numbers = #tpu.dot_dimension_numbers<[1], [0], [0], [1], [0, 0, 1, 1], [], []>} : vector<32x256xbf16>, vector<256x256xbf16>, vector<32x256xf32> -> vector<32x256xf32>
    %c0_3 = arith.constant 0 : index
    %c0_4 = arith.constant 0 : index
    %3 = vector.load %arg5[%c0_3, %c0_4] : memref<1x256xf32, #tpu.memory_space<vmem>>, vector<1x256xf32>
    %4 = vector.broadcast %3 : vector<1x256xf32> to vector<32x256xf32>
    %5 = arith.addf %2, %4 : vector<32x256xf32>
    %cst_5 = arith.constant 0.000000e+00 : f32
    %6 = vector.broadcast %cst_5 : f32 to vector<32x256xf32>
    %7 = arith.maximumf %5, %6 : vector<32x256xf32>
    %8 = arith.truncf %7 : vector<32x256xf32> to vector<32x256xbf16>
    %c0_6 = arith.constant 0 : index
    %c0_7 = arith.constant 0 : index
    %9 = vector.load %arg6[%c0_6, %c0_7] : memref<256x256xbf16, #tpu.memory_space<vmem>>, vector<256x256xbf16>
    %cst_8 = arith.constant dense<0.000000e+00> : vector<32x256xf32>
    %10 = tpu.matmul %8, %9, %cst_8 {dimension_numbers = #tpu.dot_dimension_numbers<[1], [0], [0], [1], [0, 0, 1, 1], [], []>} : vector<32x256xbf16>, vector<256x256xbf16>, vector<32x256xf32> -> vector<32x256xf32>
    %c0_9 = arith.constant 0 : index
    %c0_10 = arith.constant 0 : index
    %11 = vector.load %arg7[%c0_9, %c0_10] : memref<1x256xf32, #tpu.memory_space<vmem>>, vector<1x256xf32>
    %12 = vector.broadcast %11 : vector<1x256xf32> to vector<32x256xf32>
    %13 = arith.addf %10, %12 : vector<32x256xf32>
    %14 = arith.truncf %13 : vector<32x256xf32> to vector<32x256xbf16>
    %c0_11 = arith.constant 0 : index
    %c0_12 = arith.constant 0 : index
    %15 = vector.load %arg8[%c0_11, %c0_12] : memref<256x512xbf16, #tpu.memory_space<vmem>>, vector<256x512xbf16>
    %cst_13 = arith.constant dense<0.000000e+00> : vector<32x512xf32>
    %16 = tpu.matmul %14, %15, %cst_13 {dimension_numbers = #tpu.dot_dimension_numbers<[1], [0], [0], [1], [0, 0, 1, 1], [], []>} : vector<32x256xbf16>, vector<256x512xbf16>, vector<32x512xf32> -> vector<32x512xf32>
    %c0_14 = arith.constant 0 : index
    %c0_15 = arith.constant 0 : index
    %17 = vector.load %arg9[%c0_14, %c0_15] : memref<1x512xf32, #tpu.memory_space<vmem>>, vector<1x512xf32>
    %18 = vector.broadcast %17 : vector<1x512xf32> to vector<32x512xf32>
    %19 = arith.addf %16, %18 : vector<32x512xf32>
    %20 = arith.truncf %19 : vector<32x512xf32> to vector<32x512xbf16>
    %c0_16 = arith.constant 0 : index
    %c0_17 = arith.constant 0 : index
    %21 = vector.load %arg2[%c0_16, %c0_17] : memref<32x32xbf16, #tpu.memory_space<vmem>>, vector<32x32xbf16>
    %c0_18 = arith.constant 0 : index
    %c0_19 = arith.constant 0 : index
    %22 = vector.load %arg3[%c0_18, %c0_19] : memref<32x128xbf16, #tpu.memory_space<vmem>>, vector<32x128xbf16>
    %c0_20 = arith.constant 0 : index
    %c0_21 = arith.constant 0 : index
    %23 = vector.load %arg14[%c0_20, %c0_21] : memref<128x64xbf16, #tpu.memory_space<vmem>>, vector<128x64xbf16>
    %cst_22 = arith.constant dense<0.000000e+00> : vector<32x64xf32>
    %24 = tpu.matmul %22, %23, %cst_22 {dimension_numbers = #tpu.dot_dimension_numbers<[1], [0], [0], [1], [0, 0, 1, 1], [], []>} : vector<32x128xbf16>, vector<128x64xbf16>, vector<32x64xf32> -> vector<32x64xf32>
    %25 = vector.extract_strided_slice %20 {offsets = [0, 0], sizes = [32, 128], strides = [1, 1]} : vector<32x512xbf16> to vector<32x128xbf16>
    %c0_23 = arith.constant 0 : index
    %c0_24 = arith.constant 0 : index
    %26 = vector.load %arg10[%c0_23, %c0_24] : memref<128x1024xbf16, #tpu.memory_space<vmem>>, vector<128x1024xbf16>
    %cst_25 = arith.constant dense<0.000000e+00> : vector<32x1024xf32>
    %27 = tpu.matmul %25, %26, %cst_25 {dimension_numbers = #tpu.dot_dimension_numbers<[1], [0], [0], [1], [0, 0, 1, 1], [], []>} : vector<32x128xbf16>, vector<128x1024xbf16>, vector<32x1024xf32> -> vector<32x1024xf32>
    %28 = vector.extract_strided_slice %21 {offsets = [0, 0], sizes = [32, 8], strides = [1, 1]} : vector<32x32xbf16> to vector<32x8xbf16>
    %c0_26 = arith.constant 0 : index
    %c0_27 = arith.constant 0 : index
    %29 = vector.load %arg11[%c0_26, %c0_27] : memref<8x1024xbf16, #tpu.memory_space<vmem>>, vector<8x1024xbf16>
    %cst_28 = arith.constant dense<0.000000e+00> : vector<32x1024xf32>
    %30 = tpu.matmul %28, %29, %cst_28 {dimension_numbers = #tpu.dot_dimension_numbers<[1], [0], [0], [1], [0, 0, 1, 1], [], []>} : vector<32x8xbf16>, vector<8x1024xbf16>, vector<32x1024xf32> -> vector<32x1024xf32>
    %31 = arith.addf %27, %30 : vector<32x1024xf32>
    %c0_29 = arith.constant 0 : index
    %c0_30 = arith.constant 0 : index
    %32 = vector.load %arg12[%c0_29, %c0_30] : memref<1x1024xf32, #tpu.memory_space<vmem>>, vector<1x1024xf32>
    %33 = vector.broadcast %32 : vector<1x1024xf32> to vector<32x1024xf32>
    %34 = arith.addf %31, %33 : vector<32x1024xf32>
    %35 = arith.truncf %34 : vector<32x1024xf32> to vector<32x1024xbf16>
    %c0_31 = arith.constant 0 : index
    %c0_32 = arith.constant 0 : index
    %36 = vector.load %arg13[%c0_31, %c0_32] : memref<1024x16xbf16, #tpu.memory_space<vmem>>, vector<1024x16xbf16>
    %cst_33 = arith.constant dense<0.000000e+00> : vector<32x16xf32>
    %37 = tpu.matmul %35, %36, %cst_33 {dimension_numbers = #tpu.dot_dimension_numbers<[1], [0], [0], [1], [0, 0, 1, 1], [], []>} : vector<32x1024xbf16>, vector<1024x16xbf16>, vector<32x16xf32> -> vector<32x16xf32>
    %38 = vector.extract_strided_slice %24 {offsets = [0, 0], sizes = [32, 16], strides = [1, 1]} : vector<32x64xf32> to vector<32x16xf32>
    %39 = arith.addf %37, %38 : vector<32x16xf32>
    %c0_34 = arith.constant 0 : index
    %c0_35 = arith.constant 0 : index
    %40 = vector.load %arg15[%c0_34, %c0_35] : memref<1x16xf32, #tpu.memory_space<vmem>>, vector<1x16xf32>
    %41 = vector.broadcast %40 : vector<1x16xf32> to vector<32x16xf32>
    %42 = arith.addf %39, %41 : vector<32x16xf32>
    %43 = vector.extract_strided_slice %20 {offsets = [0, 128], sizes = [32, 128], strides = [1, 1]} : vector<32x512xbf16> to vector<32x128xbf16>
    %c0_36 = arith.constant 0 : index
    %c0_37 = arith.constant 0 : index
    %44 = vector.load %arg10[%c0_36, %c0_37] : memref<128x1024xbf16, #tpu.memory_space<vmem>>, vector<128x1024xbf16>
    %cst_38 = arith.constant dense<0.000000e+00> : vector<32x1024xf32>
    %45 = tpu.matmul %43, %44, %cst_38 {dimension_numbers = #tpu.dot_dimension_numbers<[1], [0], [0], [1], [0, 0, 1, 1], [], []>} : vector<32x128xbf16>, vector<128x1024xbf16>, vector<32x1024xf32> -> vector<32x1024xf32>
    %46 = vector.extract_strided_slice %21 {offsets = [0, 8], sizes = [32, 8], strides = [1, 1]} : vector<32x32xbf16> to vector<32x8xbf16>
    %c0_39 = arith.constant 0 : index
    %c0_40 = arith.constant 0 : index
    %47 = vector.load %arg11[%c0_39, %c0_40] : memref<8x1024xbf16, #tpu.memory_space<vmem>>, vector<8x1024xbf16>
    %cst_41 = arith.constant dense<0.000000e+00> : vector<32x1024xf32>
    %48 = tpu.matmul %46, %47, %cst_41 {dimension_numbers = #tpu.dot_dimension_numbers<[1], [0], [0], [1], [0, 0, 1, 1], [], []>} : vector<32x8xbf16>, vector<8x1024xbf16>, vector<32x1024xf32> -> vector<32x1024xf32>
    %49 = arith.addf %45, %48 : vector<32x1024xf32>
    %c0_42 = arith.constant 0 : index
    %c0_43 = arith.constant 0 : index
    %50 = vector.load %arg12[%c0_42, %c0_43] : memref<1x1024xf32, #tpu.memory_space<vmem>>, vector<1x1024xf32>
    %51 = vector.broadcast %50 : vector<1x1024xf32> to vector<32x1024xf32>
    %52 = arith.addf %49, %51 : vector<32x1024xf32>
    %53 = arith.truncf %52 : vector<32x1024xf32> to vector<32x1024xbf16>
    %c0_44 = arith.constant 0 : index
    %c0_45 = arith.constant 0 : index
    %54 = vector.load %arg13[%c0_44, %c0_45] : memref<1024x16xbf16, #tpu.memory_space<vmem>>, vector<1024x16xbf16>
    %cst_46 = arith.constant dense<0.000000e+00> : vector<32x16xf32>
    %55 = tpu.matmul %53, %54, %cst_46 {dimension_numbers = #tpu.dot_dimension_numbers<[1], [0], [0], [1], [0, 0, 1, 1], [], []>} : vector<32x1024xbf16>, vector<1024x16xbf16>, vector<32x16xf32> -> vector<32x16xf32>
    %56 = vector.extract_strided_slice %24 {offsets = [0, 16], sizes = [32, 16], strides = [1, 1]} : vector<32x64xf32> to vector<32x16xf32>
    %57 = arith.addf %55, %56 : vector<32x16xf32>
    %c0_47 = arith.constant 0 : index
    %c0_48 = arith.constant 0 : index
    %58 = vector.load %arg15[%c0_47, %c0_48] : memref<1x16xf32, #tpu.memory_space<vmem>>, vector<1x16xf32>
    %59 = vector.broadcast %58 : vector<1x16xf32> to vector<32x16xf32>
    %60 = arith.addf %57, %59 : vector<32x16xf32>
    %61 = vector.extract_strided_slice %20 {offsets = [0, 256], sizes = [32, 128], strides = [1, 1]} : vector<32x512xbf16> to vector<32x128xbf16>
    %c0_49 = arith.constant 0 : index
    %c0_50 = arith.constant 0 : index
    %62 = vector.load %arg10[%c0_49, %c0_50] : memref<128x1024xbf16, #tpu.memory_space<vmem>>, vector<128x1024xbf16>
    %cst_51 = arith.constant dense<0.000000e+00> : vector<32x1024xf32>
    %63 = tpu.matmul %61, %62, %cst_51 {dimension_numbers = #tpu.dot_dimension_numbers<[1], [0], [0], [1], [0, 0, 1, 1], [], []>} : vector<32x128xbf16>, vector<128x1024xbf16>, vector<32x1024xf32> -> vector<32x1024xf32>
    %64 = vector.extract_strided_slice %21 {offsets = [0, 16], sizes = [32, 8], strides = [1, 1]} : vector<32x32xbf16> to vector<32x8xbf16>
    %c0_52 = arith.constant 0 : index
    %c0_53 = arith.constant 0 : index
    %65 = vector.load %arg11[%c0_52, %c0_53] : memref<8x1024xbf16, #tpu.memory_space<vmem>>, vector<8x1024xbf16>
    %cst_54 = arith.constant dense<0.000000e+00> : vector<32x1024xf32>
    %66 = tpu.matmul %64, %65, %cst_54 {dimension_numbers = #tpu.dot_dimension_numbers<[1], [0], [0], [1], [0, 0, 1, 1], [], []>} : vector<32x8xbf16>, vector<8x1024xbf16>, vector<32x1024xf32> -> vector<32x1024xf32>
    %67 = arith.addf %63, %66 : vector<32x1024xf32>
    %c0_55 = arith.constant 0 : index
    %c0_56 = arith.constant 0 : index
    %68 = vector.load %arg12[%c0_55, %c0_56] : memref<1x1024xf32, #tpu.memory_space<vmem>>, vector<1x1024xf32>
    %69 = vector.broadcast %68 : vector<1x1024xf32> to vector<32x1024xf32>
    %70 = arith.addf %67, %69 : vector<32x1024xf32>
    %71 = arith.truncf %70 : vector<32x1024xf32> to vector<32x1024xbf16>
    %c0_57 = arith.constant 0 : index
    %c0_58 = arith.constant 0 : index
    %72 = vector.load %arg13[%c0_57, %c0_58] : memref<1024x16xbf16, #tpu.memory_space<vmem>>, vector<1024x16xbf16>
    %cst_59 = arith.constant dense<0.000000e+00> : vector<32x16xf32>
    %73 = tpu.matmul %71, %72, %cst_59 {dimension_numbers = #tpu.dot_dimension_numbers<[1], [0], [0], [1], [0, 0, 1, 1], [], []>} : vector<32x1024xbf16>, vector<1024x16xbf16>, vector<32x16xf32> -> vector<32x16xf32>
    %74 = vector.extract_strided_slice %24 {offsets = [0, 32], sizes = [32, 16], strides = [1, 1]} : vector<32x64xf32> to vector<32x16xf32>
    %75 = arith.addf %73, %74 : vector<32x16xf32>
    %c0_60 = arith.constant 0 : index
    %c0_61 = arith.constant 0 : index
    %76 = vector.load %arg15[%c0_60, %c0_61] : memref<1x16xf32, #tpu.memory_space<vmem>>, vector<1x16xf32>
    %77 = vector.broadcast %76 : vector<1x16xf32> to vector<32x16xf32>
    %78 = arith.addf %75, %77 : vector<32x16xf32>
    %79 = vector.extract_strided_slice %20 {offsets = [0, 384], sizes = [32, 128], strides = [1, 1]} : vector<32x512xbf16> to vector<32x128xbf16>
    %c0_62 = arith.constant 0 : index
    %c0_63 = arith.constant 0 : index
    %80 = vector.load %arg10[%c0_62, %c0_63] : memref<128x1024xbf16, #tpu.memory_space<vmem>>, vector<128x1024xbf16>
    %cst_64 = arith.constant dense<0.000000e+00> : vector<32x1024xf32>
    %81 = tpu.matmul %79, %80, %cst_64 {dimension_numbers = #tpu.dot_dimension_numbers<[1], [0], [0], [1], [0, 0, 1, 1], [], []>} : vector<32x128xbf16>, vector<128x1024xbf16>, vector<32x1024xf32> -> vector<32x1024xf32>
    %82 = vector.extract_strided_slice %21 {offsets = [0, 24], sizes = [32, 8], strides = [1, 1]} : vector<32x32xbf16> to vector<32x8xbf16>
    %c0_65 = arith.constant 0 : index
    %c0_66 = arith.constant 0 : index
    %83 = vector.load %arg11[%c0_65, %c0_66] : memref<8x1024xbf16, #tpu.memory_space<vmem>>, vector<8x1024xbf16>
    %cst_67 = arith.constant dense<0.000000e+00> : vector<32x1024xf32>
    %84 = tpu.matmul %82, %83, %cst_67 {dimension_numbers = #tpu.dot_dimension_numbers<[1], [0], [0], [1], [0, 0, 1, 1], [], []>} : vector<32x8xbf16>, vector<8x1024xbf16>, vector<32x1024xf32> -> vector<32x1024xf32>
    %85 = arith.addf %81, %84 : vector<32x1024xf32>
    %c0_68 = arith.constant 0 : index
    %c0_69 = arith.constant 0 : index
    %86 = vector.load %arg12[%c0_68, %c0_69] : memref<1x1024xf32, #tpu.memory_space<vmem>>, vector<1x1024xf32>
    %87 = vector.broadcast %86 : vector<1x1024xf32> to vector<32x1024xf32>
    %88 = arith.addf %85, %87 : vector<32x1024xf32>
    %89 = arith.truncf %88 : vector<32x1024xf32> to vector<32x1024xbf16>
    %c0_70 = arith.constant 0 : index
    %c0_71 = arith.constant 0 : index
    %90 = vector.load %arg13[%c0_70, %c0_71] : memref<1024x16xbf16, #tpu.memory_space<vmem>>, vector<1024x16xbf16>
    %cst_72 = arith.constant dense<0.000000e+00> : vector<32x16xf32>
    %91 = tpu.matmul %89, %90, %cst_72 {dimension_numbers = #tpu.dot_dimension_numbers<[1], [0], [0], [1], [0, 0, 1, 1], [], []>} : vector<32x1024xbf16>, vector<1024x16xbf16>, vector<32x16xf32> -> vector<32x16xf32>
    %92 = vector.extract_strided_slice %24 {offsets = [0, 48], sizes = [32, 16], strides = [1, 1]} : vector<32x64xf32> to vector<32x16xf32>
    %93 = arith.addf %91, %92 : vector<32x16xf32>
    %c0_73 = arith.constant 0 : index
    %c0_74 = arith.constant 0 : index
    %94 = vector.load %arg15[%c0_73, %c0_74] : memref<1x16xf32, #tpu.memory_space<vmem>>, vector<1x16xf32>
    %95 = vector.broadcast %94 : vector<1x16xf32> to vector<32x16xf32>
    %96 = arith.addf %93, %95 : vector<32x16xf32>
    %97 = tpu.concatenate %42, %60, %78, %96 in 1 : vector<32x16xf32>, vector<32x16xf32>, vector<32x16xf32>, vector<32x16xf32> -> vector<32x64xf32>
    %c0_75 = arith.constant 0 : index
    %c0_76 = arith.constant 0 : index
    %98 = vector.load %arg16[%c0_75, %c0_76] : memref<32x64xf32, #tpu.memory_space<vmem>>, vector<32x64xf32>
    tpu.vector_store %arg16[%c0_75, %c0_76], %97 {strides = array<i32>} : memref<32x64xf32, #tpu.memory_space<vmem>>, vector<32x64xf32>,
    return
  }
  func.func @transform_0(%arg0: i32) -> (i32, i32) {
    %c0_i32 = arith.constant 0 : i32
    %c0_i32_0 = arith.constant 0 : i32
    return %arg0, %c0_i32 : i32, i32
  }
  func.func @transform_1(%arg0: i32) -> (i32, i32) {
    %c0_i32 = arith.constant 0 : i32
    %c0_i32_0 = arith.constant 0 : i32
    return %arg0, %c0_i32 : i32, i32
  }
  func.func @transform_2(%arg0: i32) -> (i32, i32) {
    %c0_i32 = arith.constant 0 : i32
    %c0_i32_0 = arith.constant 0 : i32
    return %arg0, %c0_i32 : i32, i32
  }
  func.func @transform_3(%arg0: i32) -> (i32, i32) {
    %c0_i32 = arith.constant 0 : i32
    %c0_i32_0 = arith.constant 0 : i32
    %c0_i32_1 = arith.constant 0 : i32
    return %c0_i32, %c0_i32_0 : i32, i32
  }
  func.func @transform_4(%arg0: i32) -> (i32, i32) {
    %c0_i32 = arith.constant 0 : i32
    %c0_i32_0 = arith.constant 0 : i32
    %c0_i32_1 = arith.constant 0 : i32
    return %c0_i32, %c0_i32_0 : i32, i32
  }
  func.func @transform_5(%arg0: i32) -> (i32, i32) {
    %c0_i32 = arith.constant 0 : i32
    %c0_i32_0 = arith.constant 0 : i32
    %c0_i32_1 = arith.constant 0 : i32
    return %c0_i32, %c0_i32_0 : i32, i32
  }
  func.func @transform_6(%arg0: i32) -> (i32, i32) {
    %c0_i32 = arith.constant 0 : i32
    %c0_i32_0 = arith.constant 0 : i32
    %c0_i32_1 = arith.constant 0 : i32
    return %c0_i32, %c0_i32_0 : i32, i32
  }
  func.func @transform_7(%arg0: i32) -> (i32, i32) {
    %c0_i32 = arith.constant 0 : i32
    %c0_i32_0 = arith.constant 0 : i32
    %c0_i32_1 = arith.constant 0 : i32
    return %c0_i32, %c0_i32_0 : i32, i32
  }
  func.func @transform_8(%arg0: i32) -> (i32, i32) {
    %c0_i32 = arith.constant 0 : i32
    %c0_i32_0 = arith.constant 0 : i32
    %c0_i32_1 = arith.constant 0 : i32
    return %c0_i32, %c0_i32_0 : i32, i32
  }
  func.func @transform_9(%arg0: i32) -> (i32, i32) {
    %c0_i32 = arith.constant 0 : i32
    %c0_i32_0 = arith.constant 0 : i32
    %c0_i32_1 = arith.constant 0 : i32
    return %c0_i32, %c0_i32_0 : i32, i32
  }
  func.func @transform_10(%arg0: i32) -> (i32, i32) {
    %c0_i32 = arith.constant 0 : i32
    %c0_i32_0 = arith.constant 0 : i32
    %c0_i32_1 = arith.constant 0 : i32
    return %c0_i32, %c0_i32_0 : i32, i32
  }
  func.func @transform_11(%arg0: i32) -> (i32, i32) {
    %c0_i32 = arith.constant 0 : i32
    %c0_i32_0 = arith.constant 0 : i32
    %c0_i32_1 = arith.constant 0 : i32
    return %c0_i32, %c0_i32_0 : i32, i32
  }
  func.func @transform_12(%arg0: i32) -> (i32, i32) {
    %c0_i32 = arith.constant 0 : i32
    %c0_i32_0 = arith.constant 0 : i32
    %c0_i32_1 = arith.constant 0 : i32
    return %c0_i32, %c0_i32_0 : i32, i32
  }
  func.func @transform_13(%arg0: i32) -> (i32, i32) {
    %c0_i32 = arith.constant 0 : i32
    %c0_i32_0 = arith.constant 0 : i32
    %c0_i32_1 = arith.constant 0 : i32
    return %c0_i32, %c0_i32_0 : i32, i32
  }
  func.func @transform_14(%arg0: i32) -> (i32, i32) {
    %c0_i32 = arith.constant 0 : i32
    %c0_i32_0 = arith.constant 0 : i32
    %c0_i32_1 = arith.constant 0 : i32
    return %c0_i32, %c0_i32_0 : i32, i32
  }
  func.func @transform_15(%arg0: i32) -> (i32, i32) {
    %c0_i32 = arith.constant 0 : i32
    %c0_i32_0 = arith.constant 0 : i32
    return %arg0, %c0_i32 : i32, i32
  }
}

</mosaic_0001>

<llo_original>
// kernel: column_decoder_forward.1
$region0: #{column_decoder_forward.1}
  #allocation0 [shape = 'u32[]', space=smem, size = 0x4, offset = 0x4, fixed_abs, tag = 'smem constant byte address 0x4 - core index']
  #allocation1 [shape = 'u32[72,128]{1,0:T(1,128)}', space=vmem, size = 0x9000, scoped, tag = 'internal scratch']
  %s0 = inlined_call_operand.vmem [shape: bf16[32,256], index: 0, kind: input, shape index: {}]
  %s1 = inlined_call_operand.vmem [shape: bf16[32,32], index: 1, kind: input, shape index: {}]
  %s2 = inlined_call_operand.vmem [shape: bf16[32,128], index: 2, kind: input, shape index: {}]
  %s3 = inlined_call_operand.vmem [shape: bf16[256,256], index: 3, kind: input, shape index: {}]
  %s4 = inlined_call_operand.vmem [shape: f32[1,256], index: 4, kind: input, shape index: {}]
  %s5 = inlined_call_operand.vmem [shape: bf16[256,256], index: 5, kind: input, shape index: {}]
  %s6 = inlined_call_operand.vmem [shape: f32[1,256], index: 6, kind: input, shape index: {}]
  %s7 = inlined_call_operand.vmem [shape: bf16[256,512], index: 7, kind: input, shape index: {}]
  %s8 = inlined_call_operand.vmem [shape: f32[1,512], index: 8, kind: input, shape index: {}]
  %s9 = inlined_call_operand.vmem [shape: bf16[128,1024], index: 9, kind: input, shape index: {}]
  %s10 = inlined_call_operand.vmem [shape: bf16[8,1024], index: 10, kind: input, shape index: {}]
  %s11 = inlined_call_operand.vmem [shape: f32[1,1024], index: 11, kind: input, shape index: {}]
  %s12 = inlined_call_operand.vmem [shape: bf16[1024,16], index: 12, kind: input, shape index: {}]
  %s13 = inlined_call_operand.vmem [shape: bf16[128,64], index: 13, kind: input, shape index: {}]
  %s14 = inlined_call_operand.vmem [shape: f32[1,16], index: 14, kind: input, shape index: {}]
  %s15 = inlined_call_operand.vmem [shape: f32[32,64], index: 15, kind: output, shape index: {}]
  %s16 = sld [smem:[#allocation0]]
  $region70: #{column_decoder_forward.1} parent=0
    _
  %s18 = ssub.s32 1, %s16
  %s19 = scalar_select 0, %s18, %s16
  // Predicated region
  $region2: #{column_decoder_forward.1} parent=0 // pred_check
    _
  $region3: #{column_decoder_forward.1} parent=0 // pred_check_branch
    %21 = sbr.rel (0) target = $region5
  $region4: #{column_decoder_forward.1} parent=0 // pred_region
    _
  $region5: #{column_decoder_forward.1} parent=0 // pred_fallthru
    _
  // Predicated region
  $region6: #{column_decoder_forward.1} parent=0 // pred_check
    _
  $region7: #{column_decoder_forward.1} parent=0 // pred_check_branch
    %23 = sbr.rel (0) target = $region9
  $region8: #{column_decoder_forward.1} parent=0 // pred_region
    _
  $region9: #{column_decoder_forward.1} parent=0 // pred_fallthru
    _
  // Predicated region
  $region10: #{column_decoder_forward.1} parent=0 // pred_check
    _
  $region11: #{column_decoder_forward.1} parent=0 // pred_check_branch
    %25 = sbr.rel (0) target = $region13
  $region12: #{column_decoder_forward.1} parent=0 // pred_region
    _
  $region13: #{column_decoder_forward.1} parent=0 // pred_fallthru
    _
  // Predicated region
  $region14: #{column_decoder_forward.1} parent=0 // pred_check
    _
  $region15: #{column_decoder_forward.1} parent=0 // pred_check_branch
    %27 = sbr.rel (0) target = $region17
  $region16: #{column_decoder_forward.1} parent=0 // pred_region
    _
  $region17: #{column_decoder_forward.1} parent=0 // pred_fallthru
    _
  // Predicated region
  $region18: #{column_decoder_forward.1} parent=0 // pred_check
    _
  $region19: #{column_decoder_forward.1} parent=0 // pred_check_branch
    %29 = sbr.rel (0) target = $region21
  $region20: #{column_decoder_forward.1} parent=0 // pred_region
    _
  $region21: #{column_decoder_forward.1} parent=0 // pred_fallthru
    _
  // Predicated region
  $region22: #{column_decoder_forward.1} parent=0 // pred_check
    _
  $region23: #{column_decoder_forward.1} parent=0 // pred_check_branch
    %31 = sbr.rel (0) target = $region25
  $region24: #{column_decoder_forward.1} parent=0 // pred_region
    _
  $region25: #{column_decoder_forward.1} parent=0 // pred_fallthru
    _
  // Predicated region
  $region26: #{column_decoder_forward.1} parent=0 // pred_check
    _
  $region27: #{column_decoder_forward.1} parent=0 // pred_check_branch
    %33 = sbr.rel (0) target = $region29
  $region28: #{column_decoder_forward.1} parent=0 // pred_region
    _
  $region29: #{column_decoder_forward.1} parent=0 // pred_fallthru
    _
  // Predicated region
  $region30: #{column_decoder_forward.1} parent=0 // pred_check
    _
  $region31: #{column_decoder_forward.1} parent=0 // pred_check_branch
    %35 = sbr.rel (0) target = $region33
  $region32: #{column_decoder_forward.1} parent=0 // pred_region
    _
  $region33: #{column_decoder_forward.1} parent=0 // pred_fallthru
    _
  // Predicated region
  $region34: #{column_decoder_forward.1} parent=0 // pred_check
    _
  $region35: #{column_decoder_forward.1} parent=0 // pred_check_branch
    %37 = sbr.rel (0) target = $region37
  $region36: #{column_decoder_forward.1} parent=0 // pred_region
    _
  $region37: #{column_decoder_forward.1} parent=0 // pred_fallthru
    _
  // Predicated region
  $region38: #{column_decoder_forward.1} parent=0 // pred_check
    _
  $region39: #{column_decoder_forward.1} parent=0 // pred_check_branch
    %39 = sbr.rel (0) target = $region41
  $region40: #{column_decoder_forward.1} parent=0 // pred_region
    _
  $region41: #{column_decoder_forward.1} parent=0 // pred_fallthru
    _
  // Predicated region
  $region42: #{column_decoder_forward.1} parent=0 // pred_check
    _
  $region43: #{column_decoder_forward.1} parent=0 // pred_check_branch
    %41 = sbr.rel (0) target = $region45
  $region44: #{column_decoder_forward.1} parent=0 // pred_region
    _
  $region45: #{column_decoder_forward.1} parent=0 // pred_fallthru
    _
  // Predicated region
  $region46: #{column_decoder_forward.1} parent=0 // pred_check
    _
  $region47: #{column_decoder_forward.1} parent=0 // pred_check_branch
    %43 = sbr.rel (0) target = $region49
  $region48: #{column_decoder_forward.1} parent=0 // pred_region
    _
  $region49: #{column_decoder_forward.1} parent=0 // pred_fallthru
    _
  // Predicated region
  $region50: #{column_decoder_forward.1} parent=0 // pred_check
    _
  $region51: #{column_decoder_forward.1} parent=0 // pred_check_branch
    %45 = sbr.rel (0) target = $region53
  $region52: #{column_decoder_forward.1} parent=0 // pred_region
    _
  $region53: #{column_decoder_forward.1} parent=0 // pred_fallthru
    _
  // Predicated region
  $region54: #{column_decoder_forward.1} parent=0 // pred_check
    _
  $region55: #{column_decoder_forward.1} parent=0 // pred_check_branch
    %47 = sbr.rel (0) target = $region57
  $region56: #{column_decoder_forward.1} parent=0 // pred_region
    _
  $region57: #{column_decoder_forward.1} parent=0 // pred_fallthru
    _
  // Predicated region
  $region58: #{column_decoder_forward.1} parent=0 // pred_check
    _
  $region59: #{column_decoder_forward.1} parent=0 // pred_check_branch
    %49 = sbr.rel (0) target = $region61
  $region60: #{column_decoder_forward.1} parent=0 // pred_region
    _
  $region61: #{column_decoder_forward.1} parent=0 // pred_fallthru
    _
  %v51 = vld [vmem:[%s0] sm:$0xff]
  %v52 = vld [vmem:[%s0 + $0x8] sm:$0xff]
  %v53 = vld [vmem:[%s0 + $0x10] sm:$0xff]
  %v54 = vld [vmem:[%s0 + $0x18] sm:$0xff]
  %v55 = vld [vmem:[%s3] sm:$0xff]
  %v56 = vld [vmem:[%s3 + $0x8] sm:$0xff]
  %v57 = vld [vmem:[%s3 + $0x10] sm:$0xff]
  %v58 = vld [vmem:[%s3 + $0x18] sm:$0xff]
  %v59 = vld [vmem:[%s3 + $0x20] sm:$0xff]
  %v60 = vld [vmem:[%s3 + $0x28] sm:$0xff]
  %v61 = vld [vmem:[%s3 + $0x30] sm:$0xff]
  %v62 = vld [vmem:[%s3 + $0x38] sm:$0xff]
  %v63 = vld [vmem:[%s3 + $0x40] sm:$0xff]
  %v64 = vld [vmem:[%s3 + $0x48] sm:$0xff]
  %v65 = vld [vmem:[%s3 + $0x50] sm:$0xff]
  %v66 = vld [vmem:[%s3 + $0x58] sm:$0xff]
  %v67 = vld [vmem:[%s3 + $0x60] sm:$0xff]
  %v68 = vld [vmem:[%s3 + $0x68] sm:$0xff]
  %v69 = vld [vmem:[%s3 + $0x70] sm:$0xff]
  %v70 = vld [vmem:[%s3 + $0x78] sm:$0xff]
  %v71 = vld [vmem:[%s3 + $0x80] sm:$0xff]
  %v72 = vld [vmem:[%s3 + $0x88] sm:$0xff]
  %v73 = vld [vmem:[%s3 + $0x90] sm:$0xff]
  %v74 = vld [vmem:[%s3 + $0x98] sm:$0xff]
  %v75 = vld [vmem:[%s3 + $0xa0] sm:$0xff]
  %v76 = vld [vmem:[%s3 + $0xa8] sm:$0xff]
  %v77 = vld [vmem:[%s3 + $0xb0] sm:$0xff]
  %v78 = vld [vmem:[%s3 + $0xb8] sm:$0xff]
  %v79 = vld [vmem:[%s3 + $0xc0] sm:$0xff]
  %v80 = vld [vmem:[%s3 + $0xc8] sm:$0xff]
  %v81 = vld [vmem:[%s3 + $0xd0] sm:$0xff]
  %v82 = vld [vmem:[%s3 + $0xd8] sm:$0xff]
  %v83 = vld [vmem:[%s3 + $0xe0] sm:$0xff]
  %v84 = vld [vmem:[%s3 + $0xe8] sm:$0xff]
  %v85 = vld [vmem:[%s3 + $0xf0] sm:$0xff]
  %v86 = vld [vmem:[%s3 + $0xf8] sm:$0xff]
  %v87 = vld [vmem:[%s4] sm:$0x3]
  %v89 = vperm.slane %v87, 0
  %v90 = vperm.slane %v87, 1
  %v97 = vunpack.c.l.b16 %v51
  %v98 = vunpack.c.h.b16 %v51
  %v99 = vunpack.c.l.b16 %v52
  %v100 = vunpack.c.h.b16 %v52
  %v101 = vunpack.c.l.b16 %v53
  %v102 = vunpack.c.h.b16 %v53
  %v103 = vunpack.c.l.b16 %v54
  %v104 = vunpack.c.h.b16 %v54
  %v105 = vpack.c.b16 %v99, %v97
  %v106 = vpack.c.b16 %v100, %v98
  %v107 = vpack.c.b16 %v103, %v101
  %v108 = vpack.c.b16 %v104, %v102
  %v145 = vunpack.c.l.b16 %v55
  %v146 = vunpack.c.h.b16 %v55
  %v147 = vunpack.c.l.b16 %v56
  %v148 = vunpack.c.h.b16 %v56
  %v149 = vunpack.c.l.b16 %v57
  %v150 = vunpack.c.h.b16 %v57
  %v151 = vunpack.c.l.b16 %v58
  %v152 = vunpack.c.h.b16 %v58
  %v153 = vunpack.c.l.b16 %v59
  %v154 = vunpack.c.h.b16 %v59
  %v155 = vunpack.c.l.b16 %v60
  %v156 = vunpack.c.h.b16 %v60
  %v157 = vunpack.c.l.b16 %v61
  %v158 = vunpack.c.h.b16 %v61
  %v159 = vunpack.c.l.b16 %v62
  %v160 = vunpack.c.h.b16 %v62
  %v161 = vunpack.c.l.b16 %v63
  %v162 = vunpack.c.h.b16 %v63
  %v163 = vunpack.c.l.b16 %v64
  %v164 = vunpack.c.h.b16 %v64
  %v165 = vunpack.c.l.b16 %v65
  %v166 = vunpack.c.h.b16 %v65
  %v167 = vunpack.c.l.b16 %v66
  %v168 = vunpack.c.h.b16 %v66
  %v169 = vunpack.c.l.b16 %v67
  %v170 = vunpack.c.h.b16 %v67
  %v171 = vunpack.c.l.b16 %v68
  %v172 = vunpack.c.h.b16 %v68
  %v173 = vunpack.c.l.b16 %v69
  %v174 = vunpack.c.h.b16 %v69
  %v175 = vunpack.c.l.b16 %v70
  %v176 = vunpack.c.h.b16 %v70
  %v177 = vunpack.c.l.b16 %v71
  %v178 = vunpack.c.h.b16 %v71
  %v179 = vunpack.c.l.b16 %v72
  %v180 = vunpack.c.h.b16 %v72
  %v181 = vunpack.c.l.b16 %v73
  %v182 = vunpack.c.h.b16 %v73
  %v183 = vunpack.c.l.b16 %v74
  %v184 = vunpack.c.h.b16 %v74
  %v185 = vunpack.c.l.b16 %v75
  %v186 = vunpack.c.h.b16 %v75
  %v187 = vunpack.c.l.b16 %v76
  %v188 = vunpack.c.h.b16 %v76
  %v189 = vunpack.c.l.b16 %v77
  %v190 = vunpack.c.h.b16 %v77
  %v191 = vunpack.c.l.b16 %v78
  %v192 = vunpack.c.h.b16 %v78
  %v193 = vunpack.c.l.b16 %v79
  %v194 = vunpack.c.h.b16 %v79
  %v195 = vunpack.c.l.b16 %v80
  %v196 = vunpack.c.h.b16 %v80
  %v197 = vunpack.c.l.b16 %v81
  %v198 = vunpack.c.h.b16 %v81
  %v199 = vunpack.c.l.b16 %v82
  %v200 = vunpack.c.h.b16 %v82
  %v201 = vunpack.c.l.b16 %v83
  %v202 = vunpack.c.h.b16 %v83
  %v203 = vunpack.c.l.b16 %v84
  %v204 = vunpack.c.h.b16 %v84
  %v205 = vunpack.c.l.b16 %v85
  %v206 = vunpack.c.h.b16 %v85
  %v207 = vunpack.c.l.b16 %v86
  %v208 = vunpack.c.h.b16 %v86
  %v209 = vpack.c.b16 %v147, %v145
  %v210 = vpack.c.b16 %v148, %v146
  %v211 = vpack.c.b16 %v151, %v149
  %v212 = vpack.c.b16 %v152, %v150
  %v213 = vpack.c.b16 %v155, %v153
  %v214 = vpack.c.b16 %v156, %v154
  %v215 = vpack.c.b16 %v159, %v157
  %v216 = vpack.c.b16 %v160, %v158
  %v217 = vpack.c.b16 %v163, %v161
  %v218 = vpack.c.b16 %v164, %v162
  %v219 = vpack.c.b16 %v167, %v165
  %v220 = vpack.c.b16 %v168, %v166
  %v221 = vpack.c.b16 %v171, %v169
  %v222 = vpack.c.b16 %v172, %v170
  %v223 = vpack.c.b16 %v175, %v173
  %v224 = vpack.c.b16 %v176, %v174
  %v225 = vpack.c.b16 %v179, %v177
  %v226 = vpack.c.b16 %v180, %v178
  %v227 = vpack.c.b16 %v183, %v181
  %v228 = vpack.c.b16 %v184, %v182
  %v229 = vpack.c.b16 %v187, %v185
  %v230 = vpack.c.b16 %v188, %v186
  %v231 = vpack.c.b16 %v191, %v189
  %v232 = vpack.c.b16 %v192, %v190
  %v233 = vpack.c.b16 %v195, %v193
  %v234 = vpack.c.b16 %v196, %v194
  %v235 = vpack.c.b16 %v199, %v197
  %v236 = vpack.c.b16 %v200, %v198
  %v237 = vpack.c.b16 %v203, %v201
  %v238 = vpack.c.b16 %v204, %v202
  %v239 = vpack.c.b16 %v207, %v205
  %v240 = vpack.c.b16 %v208, %v206
  %273 = vmatpush.bf16.msra.mxu0 %v223
  %274 = vmatpush.bf16.msra.mxu0 %v221
  %275 = vmatpush.bf16.msra.mxu0 %v219
  %276 = vmatpush.bf16.msra.mxu0 %v217
  %277 = vmatpush.bf16.msra.mxu0 %v215
  %278 = vmatpush.bf16.msra.mxu0 %v213
  %279 = vmatpush.bf16.msra.mxu0 %v211
  %280 = vmatpush.bf16.msra.mxu0 %v209
  %281 = vmatmul.bf16.gmra.mxu0 %v105
  %v282 = vpop.f32.mrf.mxu0
  %v283 = vadd.f32 %v89, %v282
  %v284 = vpop.f32.mrf.mxu0
  %v285 = vadd.f32 %v89, %v284
  %286 = vmatmul.bf16.gmra.mxu0 %v107
  %v287 = vpop.f32.mrf.mxu0
  %v288 = vadd.f32 %v89, %v287
  %v289 = vpop.f32.mrf.mxu0
  %v290 = vadd.f32 %v89, %v289
  %291 = vdwg.mxu0
  %292 = vmatpush.bf16.msra.mxu0 %v239
  %293 = vmatpush.bf16.msra.mxu0 %v237
  %294 = vmatpush.bf16.msra.mxu0 %v235
  %295 = vmatpush.bf16.msra.mxu0 %v233
  %296 = vmatpush.bf16.msra.mxu0 %v231
  %297 = vmatpush.bf16.msra.mxu0 %v229
  %298 = vmatpush.bf16.msra.mxu0 %v227
  %299 = vmatpush.bf16.msra.mxu0 %v225
  %300 = vmatmul.bf16.gmra.mxu0 %v106
  %v301 = vpop.f32.mrf.mxu0
  %v302 = vadd.f32 %v283, %v301
  %v303 = vpop.f32.mrf.mxu0
  %v304 = vadd.f32 %v285, %v303
  %305 = vmatmul.bf16.gmra.mxu0 %v108
  %v306 = vpop.f32.mrf.mxu0
  %v307 = vadd.f32 %v288, %v306
  %v308 = vpop.f32.mrf.mxu0
  %v309 = vadd.f32 %v290, %v308
  %310 = vdwg.mxu0
  %311 = vmatpush.bf16.msra.mxu0 %v224
  %312 = vmatpush.bf16.msra.mxu0 %v222
  %313 = vmatpush.bf16.msra.mxu0 %v220
  %314 = vmatpush.bf16.msra.mxu0 %v218
  %315 = vmatpush.bf16.msra.mxu0 %v216
  %316 = vmatpush.bf16.msra.mxu0 %v214
  %317 = vmatpush.bf16.msra.mxu0 %v212
  %318 = vmatpush.bf16.msra.mxu0 %v210
  %319 = vmatmul.bf16.gmra.mxu0 %v105
  %v320 = vpop.f32.mrf.mxu0
  %v321 = vadd.f32 %v90, %v320
  %v322 = vpop.f32.mrf.mxu0
  %v323 = vadd.f32 %v90, %v322
  %324 = vmatmul.bf16.gmra.mxu0 %v107
  %v325 = vpop.f32.mrf.mxu0
  %v326 = vadd.f32 %v90, %v325
  %v327 = vpop.f32.mrf.mxu0
  %v328 = vadd.f32 %v90, %v327
  %329 = vdwg.mxu0
  %330 = vmatpush.bf16.msra.mxu0 %v240
  %331 = vmatpush.bf16.msra.mxu0 %v238
  %332 = vmatpush.bf16.msra.mxu0 %v236
  %333 = vmatpush.bf16.msra.mxu0 %v234
  %334 = vmatpush.bf16.msra.mxu0 %v232
  %335 = vmatpush.bf16.msra.mxu0 %v230
  %336 = vmatpush.bf16.msra.mxu0 %v228
  %337 = vmatpush.bf16.msra.mxu0 %v226
  %338 = vmatmul.bf16.gmra.mxu0 %v106
  %v339 = vpop.f32.mrf.mxu0
  %v340 = vadd.f32 %v321, %v339
  %v341 = vpop.f32.mrf.mxu0
  %v342 = vadd.f32 %v323, %v341
  %343 = vmatmul.bf16.gmra.mxu0 %v108
  %v344 = vpop.f32.mrf.mxu0
  %v345 = vadd.f32 %v326, %v344
  %v346 = vpop.f32.mrf.mxu0
  %v347 = vadd.f32 %v328, %v346
  %348 = vdwg.mxu0
  %v349 = vmax.f32 %v302, 0.0
  %v350 = vmax.f32 %v340, 0.0
  %v351 = vmax.f32 %v304, 0.0
  %v352 = vmax.f32 %v342, 0.0
  %v353 = vmax.f32 %v307, 0.0
  %v354 = vmax.f32 %v345, 0.0
  %v355 = vmax.f32 %v309, 0.0
  %v356 = vmax.f32 %v347, 0.0
  %v357 = vpack.c.bf16 %v351, %v349
  %v358 = vpack.c.bf16 %v352, %v350
  %v359 = vpack.c.bf16 %v355, %v353
  %v360 = vpack.c.bf16 %v356, %v354
  %v361 = vld [vmem:[%s5] sm:$0xff]
  %v362 = vld [vmem:[%s5 + $0x8] sm:$0xff]
  %v363 = vld [vmem:[%s5 + $0x10] sm:$0xff]
  %v364 = vld [vmem:[%s5 + $0x18] sm:$0xff]
  %v365 = vld [vmem:[%s5 + $0x20] sm:$0xff]
  %v366 = vld [vmem:[%s5 + $0x28] sm:$0xff]
  %v367 = vld [vmem:[%s5 + $0x30] sm:$0xff]
  %v368 = vld [vmem:[%s5 + $0x38] sm:$0xff]
  %v369 = vld [vmem:[%s5 + $0x40] sm:$0xff]
  %v370 = vld [vmem:[%s5 + $0x48] sm:$0xff]
  %v371 = vld [vmem:[%s5 + $0x50] sm:$0xff]
  %v372 = vld [vmem:[%s5 + $0x58] sm:$0xff]
  %v373 = vld [vmem:[%s5 + $0x60] sm:$0xff]
  %v374 = vld [vmem:[%s5 + $0x68] sm:$0xff]
  %v375 = vld [vmem:[%s5 + $0x70] sm:$0xff]
  %v376 = vld [vmem:[%s5 + $0x78] sm:$0xff]
  %v377 = vld [vmem:[%s5 + $0x80] sm:$0xff]
  %v378 = vld [vmem:[%s5 + $0x88] sm:$0xff]
  %v379 = vld [vmem:[%s5 + $0x90] sm:$0xff]
  %v380 = vld [vmem:[%s5 + $0x98] sm:$0xff]
  %v381 = vld [vmem:[%s5 + $0xa0] sm:$0xff]
  %v382 = vld [vmem:[%s5 + $0xa8] sm:$0xff]
  %v383 = vld [vmem:[%s5 + $0xb0] sm:$0xff]
  %v384 = vld [vmem:[%s5 + $0xb8] sm:$0xff]
  %v385 = vld [vmem:[%s5 + $0xc0] sm:$0xff]
  %v386 = vld [vmem:[%s5 + $0xc8] sm:$0xff]
  %v387 = vld [vmem:[%s5 + $0xd0] sm:$0xff]
  %v388 = vld [vmem:[%s5 + $0xd8] sm:$0xff]
  %v389 = vld [vmem:[%s5 + $0xe0] sm:$0xff]
  %v390 = vld [vmem:[%s5 + $0xe8] sm:$0xff]
  %v391 = vld [vmem:[%s5 + $0xf0] sm:$0xff]
  %v392 = vld [vmem:[%s5 + $0xf8] sm:$0xff]
  %v393 = vld [vmem:[%s6] sm:$0x3]
  %v395 = vperm.slane %v393, 0
  %v396 = vperm.slane %v393, 1
  %v431 = vunpack.c.l.b16 %v361
  %v432 = vunpack.c.h.b16 %v361
  %v433 = vunpack.c.l.b16 %v362
  %v434 = vunpack.c.h.b16 %v362
  %v435 = vunpack.c.l.b16 %v363
  %v436 = vunpack.c.h.b16 %v363
  %v437 = vunpack.c.l.b16 %v364
  %v438 = vunpack.c.h.b16 %v364
  %v439 = vunpack.c.l.b16 %v365
  %v440 = vunpack.c.h.b16 %v365
  %v441 = vunpack.c.l.b16 %v366
  %v442 = vunpack.c.h.b16 %v366
  %v443 = vunpack.c.l.b16 %v367
  %v444 = vunpack.c.h.b16 %v367
  %v445 = vunpack.c.l.b16 %v368
  %v446 = vunpack.c.h.b16 %v368
  %v447 = vunpack.c.l.b16 %v369
  %v448 = vunpack.c.h.b16 %v369
  %v449 = vunpack.c.l.b16 %v370
  %v450 = vunpack.c.h.b16 %v370
  %v451 = vunpack.c.l.b16 %v371
  %v452 = vunpack.c.h.b16 %v371
  %v453 = vunpack.c.l.b16 %v372
  %v454 = vunpack.c.h.b16 %v372
  %v455 = vunpack.c.l.b16 %v373
  %v456 = vunpack.c.h.b16 %v373
  %v457 = vunpack.c.l.b16 %v374
  %v458 = vunpack.c.h.b16 %v374
  %v459 = vunpack.c.l.b16 %v375
  %v460 = vunpack.c.h.b16 %v375
  %v461 = vunpack.c.l.b16 %v376
  %v462 = vunpack.c.h.b16 %v376
  %v463 = vunpack.c.l.b16 %v377
  %v464 = vunpack.c.h.b16 %v377
  %v465 = vunpack.c.l.b16 %v378
  %v466 = vunpack.c.h.b16 %v378
  %v467 = vunpack.c.l.b16 %v379
  %v468 = vunpack.c.h.b16 %v379
  %v469 = vunpack.c.l.b16 %v380
  %v470 = vunpack.c.h.b16 %v380
  %v471 = vunpack.c.l.b16 %v381
  %v472 = vunpack.c.h.b16 %v381
  %v473 = vunpack.c.l.b16 %v382
  %v474 = vunpack.c.h.b16 %v382
  %v475 = vunpack.c.l.b16 %v383
  %v476 = vunpack.c.h.b16 %v383
  %v477 = vunpack.c.l.b16 %v384
  %v478 = vunpack.c.h.b16 %v384
  %v479 = vunpack.c.l.b16 %v385
  %v480 = vunpack.c.h.b16 %v385
  %v481 = vunpack.c.l.b16 %v386
  %v482 = vunpack.c.h.b16 %v386
  %v483 = vunpack.c.l.b16 %v387
  %v484 = vunpack.c.h.b16 %v387
  %v485 = vunpack.c.l.b16 %v388
  %v486 = vunpack.c.h.b16 %v388
  %v487 = vunpack.c.l.b16 %v389
  %v488 = vunpack.c.h.b16 %v389
  %v489 = vunpack.c.l.b16 %v390
  %v490 = vunpack.c.h.b16 %v390
  %v491 = vunpack.c.l.b16 %v391
  %v492 = vunpack.c.h.b16 %v391
  %v493 = vunpack.c.l.b16 %v392
  %v494 = vunpack.c.h.b16 %v392
  %v495 = vpack.c.b16 %v433, %v431
  %v496 = vpack.c.b16 %v434, %v432
  %v497 = vpack.c.b16 %v437, %v435
  %v498 = vpack.c.b16 %v438, %v436
  %v499 = vpack.c.b16 %v441, %v439
  %v500 = vpack.c.b16 %v442, %v440
  %v501 = vpack.c.b16 %v445, %v443
  %v502 = vpack.c.b16 %v446, %v444
  %v503 = vpack.c.b16 %v449, %v447
  %v504 = vpack.c.b16 %v450, %v448
  %v505 = vpack.c.b16 %v453, %v451
  %v506 = vpack.c.b16 %v454, %v452
  %v507 = vpack.c.b16 %v457, %v455
  %v508 = vpack.c.b16 %v458, %v456
  %v509 = vpack.c.b16 %v461, %v459
  %v510 = vpack.c.b16 %v462, %v460
  %v511 = vpack.c.b16 %v465, %v463
  %v512 = vpack.c.b16 %v466, %v464
  %v513 = vpack.c.b16 %v469, %v467
  %v514 = vpack.c.b16 %v470, %v468
  %v515 = vpack.c.b16 %v473, %v471
  %v516 = vpack.c.b16 %v474, %v472
  %v517 = vpack.c.b16 %v477, %v475
  %v518 = vpack.c.b16 %v478, %v476
  %v519 = vpack.c.b16 %v481, %v479
  %v520 = vpack.c.b16 %v482, %v480
  %v521 = vpack.c.b16 %v485, %v483
  %v522 = vpack.c.b16 %v486, %v484
  %v523 = vpack.c.b16 %v489, %v487
  %v524 = vpack.c.b16 %v490, %v488
  %v525 = vpack.c.b16 %v493, %v491
  %v526 = vpack.c.b16 %v494, %v492
  %559 = vmatpush.bf16.msra.mxu0 %v509
  %560 = vmatpush.bf16.msra.mxu0 %v507
  %561 = vmatpush.bf16.msra.mxu0 %v505
  %562 = vmatpush.bf16.msra.mxu0 %v503
  %563 = vmatpush.bf16.msra.mxu0 %v501
  %564 = vmatpush.bf16.msra.mxu0 %v499
  %565 = vmatpush.bf16.msra.mxu0 %v497
  %566 = vmatpush.bf16.msra.mxu0 %v495
  %567 = vmatmul.bf16.gmra.mxu0 %v357
  %v568 = vpop.f32.mrf.mxu0
  %v569 = vadd.f32 %v395, %v568
  %v570 = vpop.f32.mrf.mxu0
  %v571 = vadd.f32 %v395, %v570
  %572 = vmatmul.bf16.gmra.mxu0 %v359
  %v573 = vpop.f32.mrf.mxu0
  %v574 = vadd.f32 %v395, %v573
  %v575 = vpop.f32.mrf.mxu0
  %v576 = vadd.f32 %v395, %v575
  %577 = vdwg.mxu0
  %578 = vmatpush.bf16.msra.mxu0 %v525
  %579 = vmatpush.bf16.msra.mxu0 %v523
  %580 = vmatpush.bf16.msra.mxu0 %v521
  %581 = vmatpush.bf16.msra.mxu0 %v519
  %582 = vmatpush.bf16.msra.mxu0 %v517
  %583 = vmatpush.bf16.msra.mxu0 %v515
  %584 = vmatpush.bf16.msra.mxu0 %v513
  %585 = vmatpush.bf16.msra.mxu0 %v511
  %586 = vmatmul.bf16.gmra.mxu0 %v358
  %v587 = vpop.f32.mrf.mxu0
  %v588 = vadd.f32 %v569, %v587
  %v589 = vpop.f32.mrf.mxu0
  %v590 = vadd.f32 %v571, %v589
  %591 = vmatmul.bf16.gmra.mxu0 %v360
  %v592 = vpop.f32.mrf.mxu0
  %v593 = vadd.f32 %v574, %v592
  %v594 = vpop.f32.mrf.mxu0
  %v595 = vadd.f32 %v576, %v594
  %596 = vdwg.mxu0
  %597 = vmatpush.bf16.msra.mxu0 %v510
  %598 = vmatpush.bf16.msra.mxu0 %v508
  %599 = vmatpush.bf16.msra.mxu0 %v506
  %600 = vmatpush.bf16.msra.mxu0 %v504
  %601 = vmatpush.bf16.msra.mxu0 %v502
  %602 = vmatpush.bf16.msra.mxu0 %v500
  %603 = vmatpush.bf16.msra.mxu0 %v498
  %604 = vmatpush.bf16.msra.mxu0 %v496
  %605 = vmatmul.bf16.gmra.mxu0 %v357
  %v606 = vpop.f32.mrf.mxu0
  %v607 = vadd.f32 %v396, %v606
  %v608 = vpop.f32.mrf.mxu0
  %v609 = vadd.f32 %v396, %v608
  %610 = vmatmul.bf16.gmra.mxu0 %v359
  %v611 = vpop.f32.mrf.mxu0
  %v612 = vadd.f32 %v396, %v611
  %v613 = vpop.f32.mrf.mxu0
  %v614 = vadd.f32 %v396, %v613
  %615 = vdwg.mxu0
  %616 = vmatpush.bf16.msra.mxu0 %v526
  %617 = vmatpush.bf16.msra.mxu0 %v524
  %618 = vmatpush.bf16.msra.mxu0 %v522
  %619 = vmatpush.bf16.msra.mxu0 %v520
  %620 = vmatpush.bf16.msra.mxu0 %v518
  %621 = vmatpush.bf16.msra.mxu0 %v516
  %622 = vmatpush.bf16.msra.mxu0 %v514
  %623 = vmatpush.bf16.msra.mxu0 %v512
  %624 = vmatmul.bf16.gmra.mxu0 %v358
  %v625 = vpop.f32.mrf.mxu0
  %v626 = vadd.f32 %v607, %v625
  %v627 = vpop.f32.mrf.mxu0
  %v628 = vadd.f32 %v609, %v627
  %629 = vmatmul.bf16.gmra.mxu0 %v360
  %v630 = vpop.f32.mrf.mxu0
  %v631 = vadd.f32 %v612, %v630
  %v632 = vpop.f32.mrf.mxu0
  %v633 = vadd.f32 %v614, %v632
  %634 = vdwg.mxu0
  %v635 = vpack.c.bf16 %v590, %v588
  %v636 = vpack.c.bf16 %v628, %v626
  %v637 = vpack.c.bf16 %v595, %v593
  %v638 = vpack.c.bf16 %v633, %v631
  %v639 = vld [vmem:[%s7] sm:$0xff]
  %v640 = vld [vmem:[%s7 + $0x8] sm:$0xff]
  %v641 = vld [vmem:[%s7 + $0x10] sm:$0xff]
  %v642 = vld [vmem:[%s7 + $0x18] sm:$0xff]
  %v643 = vld [vmem:[%s7 + $0x20] sm:$0xff]
  %v644 = vld [vmem:[%s7 + $0x28] sm:$0xff]
  %v645 = vld [vmem:[%s7 + $0x30] sm:$0xff]
  %v646 = vld [vmem:[%s7 + $0x38] sm:$0xff]
  %v647 = vld [vmem:[%s7 + $0x40] sm:$0xff]
  %v648 = vld [vmem:[%s7 + $0x48] sm:$0xff]
  %v649 = vld [vmem:[%s7 + $0x50] sm:$0xff]
  %v650 = vld [vmem:[%s7 + $0x58] sm:$0xff]
  %v651 = vld [vmem:[%s7 + $0x60] sm:$0xff]
  %v652 = vld [vmem:[%s7 + $0x68] sm:$0xff]
  %v653 = vld [vmem:[%s7 + $0x70] sm:$0xff]
  %v654 = vld [vmem:[%s7 + $0x78] sm:$0xff]
  %v655 = vld [vmem:[%s7 + $0x80] sm:$0xff]
  %v656 = vld [vmem:[%s7 + $0x88] sm:$0xff]
  %v657 = vld [vmem:[%s7 + $0x90] sm:$0xff]
  %v658 = vld [vmem:[%s7 + $0x98] sm:$0xff]
  %v659 = vld [vmem:[%s7 + $0xa0] sm:$0xff]
  %v660 = vld [vmem:[%s7 + $0xa8] sm:$0xff]
  %v661 = vld [vmem:[%s7 + $0xb0] sm:$0xff]
  %v662 = vld [vmem:[%s7 + $0xb8] sm:$0xff]
  %v663 = vld [vmem:[%s7 + $0xc0] sm:$0xff]
  %v664 = vld [vmem:[%s7 + $0xc8] sm:$0xff]
  %v665 = vld [vmem:[%s7 + $0xd0] sm:$0xff]
  %v666 = vld [vmem:[%s7 + $0xd8] sm:$0xff]
  %v667 = vld [vmem:[%s7 + $0xe0] sm:$0xff]
  %v668 = vld [vmem:[%s7 + $0xe8] sm:$0xff]
  %v669 = vld [vmem:[%s7 + $0xf0] sm:$0xff]
  %v670 = vld [vmem:[%s7 + $0xf8] sm:$0xff]
  %v671 = vld [vmem:[%s7 + $0x100] sm:$0xff]
  %v672 = vld [vmem:[%s7 + $0x108] sm:$0xff]
  %v673 = vld [vmem:[%s7 + $0x110] sm:$0xff]
  %v674 = vld [vmem:[%s7 + $0x118] sm:$0xff]
  %v675 = vld [vmem:[%s7 + $0x120] sm:$0xff]
  %v676 = vld [vmem:[%s7 + $0x128] sm:$0xff]
  %v677 = vld [vmem:[%s7 + $0x130] sm:$0xff]
  %v678 = vld [vmem:[%s7 + $0x138] sm:$0xff]
  %v679 = vld [vmem:[%s7 + $0x140] sm:$0xff]
  %v680 = vld [vmem:[%s7 + $0x148] sm:$0xff]
  %v681 = vld [vmem:[%s7 + $0x150] sm:$0xff]
  %v682 = vld [vmem:[%s7 + $0x158] sm:$0xff]
  %v683 = vld [vmem:[%s7 + $0x160] sm:$0xff]
  %v684 = vld [vmem:[%s7 + $0x168] sm:$0xff]
  %v685 = vld [vmem:[%s7 + $0x170] sm:$0xff]
  %v686 = vld [vmem:[%s7 + $0x178] sm:$0xff]
  %v687 = vld [vmem:[%s7 + $0x180] sm:$0xff]
  %v688 = vld [vmem:[%s7 + $0x188] sm:$0xff]
  %v689 = vld [vmem:[%s7 + $0x190] sm:$0xff]
  %v690 = vld [vmem:[%s7 + $0x198] sm:$0xff]
  %v691 = vld [vmem:[%s7 + $0x1a0] sm:$0xff]
  %v692 = vld [vmem:[%s7 + $0x1a8] sm:$0xff]
  %v693 = vld [vmem:[%s7 + $0x1b0] sm:$0xff]
  %v694 = vld [vmem:[%s7 + $0x1b8] sm:$0xff]
  %v695 = vld [vmem:[%s7 + $0x1c0] sm:$0xff]
  %v696 = vld [vmem:[%s7 + $0x1c8] sm:$0xff]
  %v697 = vld [vmem:[%s7 + $0x1d0] sm:$0xff]
  %v698 = vld [vmem:[%s7 + $0x1d8] sm:$0xff]
  %v699 = vld [vmem:[%s7 + $0x1e0] sm:$0xff]
  %v700 = vld [vmem:[%s7 + $0x1e8] sm:$0xff]
  %v701 = vld [vmem:[%s7 + $0x1f0] sm:$0xff]
  %v702 = vld [vmem:[%s7 + $0x1f8] sm:$0xff]
  %v703 = vld [vmem:[%s8] sm:$0xf]
  %v705 = vperm.slane %v703, 0
  %v706 = vperm.slane %v703, 1
  %v707 = vperm.slane %v703, 2
  %v708 = vperm.slane %v703, 3
  %v777 = vunpack.c.l.b16 %v639
  %v778 = vunpack.c.h.b16 %v639
  %v779 = vunpack.c.l.b16 %v640
  %v780 = vunpack.c.h.b16 %v640
  %v781 = vunpack.c.l.b16 %v641
  %v782 = vunpack.c.h.b16 %v641
  %v783 = vunpack.c.l.b16 %v642
  %v784 = vunpack.c.h.b16 %v642
  %v785 = vunpack.c.l.b16 %v643
  %v786 = vunpack.c.h.b16 %v643
  %v787 = vunpack.c.l.b16 %v644
  %v788 = vunpack.c.h.b16 %v644
  %v789 = vunpack.c.l.b16 %v645
  %v790 = vunpack.c.h.b16 %v645
  %v791 = vunpack.c.l.b16 %v646
  %v792 = vunpack.c.h.b16 %v646
  %v793 = vunpack.c.l.b16 %v647
  %v794 = vunpack.c.h.b16 %v647
  %v795 = vunpack.c.l.b16 %v648
  %v796 = vunpack.c.h.b16 %v648
  %v797 = vunpack.c.l.b16 %v649
  %v798 = vunpack.c.h.b16 %v649
  %v799 = vunpack.c.l.b16 %v650
  %v800 = vunpack.c.h.b16 %v650
  %v801 = vunpack.c.l.b16 %v651
  %v802 = vunpack.c.h.b16 %v651
  %v803 = vunpack.c.l.b16 %v652
  %v804 = vunpack.c.h.b16 %v652
  %v805 = vunpack.c.l.b16 %v653
  %v806 = vunpack.c.h.b16 %v653
  %v807 = vunpack.c.l.b16 %v654
  %v808 = vunpack.c.h.b16 %v654
  %v809 = vunpack.c.l.b16 %v655
  %v810 = vunpack.c.h.b16 %v655
  %v811 = vunpack.c.l.b16 %v656
  %v812 = vunpack.c.h.b16 %v656
  %v813 = vunpack.c.l.b16 %v657
  %v814 = vunpack.c.h.b16 %v657
  %v815 = vunpack.c.l.b16 %v658
  %v816 = vunpack.c.h.b16 %v658
  %v817 = vunpack.c.l.b16 %v659
  %v818 = vunpack.c.h.b16 %v659
  %v819 = vunpack.c.l.b16 %v660
  %v820 = vunpack.c.h.b16 %v660
  %v821 = vunpack.c.l.b16 %v661
  %v822 = vunpack.c.h.b16 %v661
  %v823 = vunpack.c.l.b16 %v662
  %v824 = vunpack.c.h.b16 %v662
  %v825 = vunpack.c.l.b16 %v663
  %v826 = vunpack.c.h.b16 %v663
  %v827 = vunpack.c.l.b16 %v664
  %v828 = vunpack.c.h.b16 %v664
  %v829 = vunpack.c.l.b16 %v665
  %v830 = vunpack.c.h.b16 %v665
  %v831 = vunpack.c.l.b16 %v666
  %v832 = vunpack.c.h.b16 %v666
  %v833 = vunpack.c.l.b16 %v667
  %v834 = vunpack.c.h.b16 %v667
  %v835 = vunpack.c.l.b16 %v668
  %v836 = vunpack.c.h.b16 %v668
  %v837 = vunpack.c.l.b16 %v669
  %v838 = vunpack.c.h.b16 %v669
  %v839 = vunpack.c.l.b16 %v670
  %v840 = vunpack.c.h.b16 %v670
  %v841 = vunpack.c.l.b16 %v671
  %v842 = vunpack.c.h.b16 %v671
  %v843 = vunpack.c.l.b16 %v672
  %v844 = vunpack.c.h.b16 %v672
  %v845 = vunpack.c.l.b16 %v673
  %v846 = vunpack.c.h.b16 %v673
  %v847 = vunpack.c.l.b16 %v674
  %v848 = vunpack.c.h.b16 %v674
  %v849 = vunpack.c.l.b16 %v675
  %v850 = vunpack.c.h.b16 %v675
  %v851 = vunpack.c.l.b16 %v676
  %v852 = vunpack.c.h.b16 %v676
  %v853 = vunpack.c.l.b16 %v677
  %v854 = vunpack.c.h.b16 %v677
  %v855 = vunpack.c.l.b16 %v678
  %v856 = vunpack.c.h.b16 %v678
  %v857 = vunpack.c.l.b16 %v679
  %v858 = vunpack.c.h.b16 %v679
  %v859 = vunpack.c.l.b16 %v680
  %v860 = vunpack.c.h.b16 %v680
  %v861 = vunpack.c.l.b16 %v681
  %v862 = vunpack.c.h.b16 %v681
  %v863 = vunpack.c.l.b16 %v682
  %v864 = vunpack.c.h.b16 %v682
  %v865 = vunpack.c.l.b16 %v683
  %v866 = vunpack.c.h.b16 %v683
  %v867 = vunpack.c.l.b16 %v684
  %v868 = vunpack.c.h.b16 %v684
  %v869 = vunpack.c.l.b16 %v685
  %v870 = vunpack.c.h.b16 %v685
  %v871 = vunpack.c.l.b16 %v686
  %v872 = vunpack.c.h.b16 %v686
  %v873 = vunpack.c.l.b16 %v687
  %v874 = vunpack.c.h.b16 %v687
  %v875 = vunpack.c.l.b16 %v688
  %v876 = vunpack.c.h.b16 %v688
  %v877 = vunpack.c.l.b16 %v689
  %v878 = vunpack.c.h.b16 %v689
  %v879 = vunpack.c.l.b16 %v690
  %v880 = vunpack.c.h.b16 %v690
  %v881 = vunpack.c.l.b16 %v691
  %v882 = vunpack.c.h.b16 %v691
  %v883 = vunpack.c.l.b16 %v692
  %v884 = vunpack.c.h.b16 %v692
  %v885 = vunpack.c.l.b16 %v693
  %v886 = vunpack.c.h.b16 %v693
  %v887 = vunpack.c.l.b16 %v694
  %v888 = vunpack.c.h.b16 %v694
  %v889 = vunpack.c.l.b16 %v695
  %v890 = vunpack.c.h.b16 %v695
  %v891 = vunpack.c.l.b16 %v696
  %v892 = vunpack.c.h.b16 %v696
  %v893 = vunpack.c.l.b16 %v697
  %v894 = vunpack.c.h.b16 %v697
  %v895 = vunpack.c.l.b16 %v698
  %v896 = vunpack.c.h.b16 %v698
  %v897 = vunpack.c.l.b16 %v699
  %v898 = vunpack.c.h.b16 %v699
  %v899 = vunpack.c.l.b16 %v700
  %v900 = vunpack.c.h.b16 %v700
  %v901 = vunpack.c.l.b16 %v701
  %v902 = vunpack.c.h.b16 %v701
  %v903 = vunpack.c.l.b16 %v702
  %v904 = vunpack.c.h.b16 %v702
  %v905 = vpack.c.b16 %v781, %v777
  %v906 = vpack.c.b16 %v782, %v778
  %v907 = vpack.c.b16 %v783, %v779
  %v908 = vpack.c.b16 %v784, %v780
  %v909 = vpack.c.b16 %v789, %v785
  %v910 = vpack.c.b16 %v790, %v786
  %v911 = vpack.c.b16 %v791, %v787
  %v912 = vpack.c.b16 %v792, %v788
  %v913 = vpack.c.b16 %v797, %v793
  %v914 = vpack.c.b16 %v798, %v794
  %v915 = vpack.c.b16 %v799, %v795
  %v916 = vpack.c.b16 %v800, %v796
  %v917 = vpack.c.b16 %v805, %v801
  %v918 = vpack.c.b16 %v806, %v802
  %v919 = vpack.c.b16 %v807, %v803
  %v920 = vpack.c.b16 %v808, %v804
  %v921 = vpack.c.b16 %v813, %v809
  %v922 = vpack.c.b16 %v814, %v810
  %v923 = vpack.c.b16 %v815, %v811
  %v924 = vpack.c.b16 %v816, %v812
  %v925 = vpack.c.b16 %v821, %v817
  %v926 = vpack.c.b16 %v822, %v818
  %v927 = vpack.c.b16 %v823, %v819
  %v928 = vpack.c.b16 %v824, %v820
  %v929 = vpack.c.b16 %v829, %v825
  %v930 = vpack.c.b16 %v830, %v826
  %v931 = vpack.c.b16 %v831, %v827
  %v932 = vpack.c.b16 %v832, %v828
  %v933 = vpack.c.b16 %v837, %v833
  %v934 = vpack.c.b16 %v838, %v834
  %v935 = vpack.c.b16 %v839, %v835
  %v936 = vpack.c.b16 %v840, %v836
  %v937 = vpack.c.b16 %v845, %v841
  %v938 = vpack.c.b16 %v846, %v842
  %v939 = vpack.c.b16 %v847, %v843
  %v940 = vpack.c.b16 %v848, %v844
  %v941 = vpack.c.b16 %v853, %v849
  %v942 = vpack.c.b16 %v854, %v850
  %v943 = vpack.c.b16 %v855, %v851
  %v944 = vpack.c.b16 %v856, %v852
  %v945 = vpack.c.b16 %v861, %v857
  %v946 = vpack.c.b16 %v862, %v858
  %v947 = vpack.c.b16 %v863, %v859
  %v948 = vpack.c.b16 %v864, %v860
  %v949 = vpack.c.b16 %v869, %v865
  %v950 = vpack.c.b16 %v870, %v866
  %v951 = vpack.c.b16 %v871, %v867
  %v952 = vpack.c.b16 %v872, %v868
  %v953 = vpack.c.b16 %v877, %v873
  %v954 = vpack.c.b16 %v878, %v874
  %v955 = vpack.c.b16 %v879, %v875
  %v956 = vpack.c.b16 %v880, %v876
  %v957 = vpack.c.b16 %v885, %v881
  %v958 = vpack.c.b16 %v886, %v882
  %v959 = vpack.c.b16 %v887, %v883
  %v960 = vpack.c.b16 %v888, %v884
  %v961 = vpack.c.b16 %v893, %v889
  %v962 = vpack.c.b16 %v894, %v890
  %v963 = vpack.c.b16 %v895, %v891
  %v964 = vpack.c.b16 %v896, %v892
  %v965 = vpack.c.b16 %v901, %v897
  %v966 = vpack.c.b16 %v902, %v898
  %v967 = vpack.c.b16 %v903, %v899
  %v968 = vpack.c.b16 %v904, %v900
  %1033 = vmatpush.bf16.msra.mxu0 %v933
  %1034 = vmatpush.bf16.msra.mxu0 %v929
  %1035 = vmatpush.bf16.msra.mxu0 %v925
  %1036 = vmatpush.bf16.msra.mxu0 %v921
  %1037 = vmatpush.bf16.msra.mxu0 %v917
  %1038 = vmatpush.bf16.msra.mxu0 %v913
  %1039 = vmatpush.bf16.msra.mxu0 %v909
  %1040 = vmatpush.bf16.msra.mxu0 %v905
  %1041 = vmatmul.bf16.gmra.mxu0 %v635
  %v1042 = vpop.f32.mrf.mxu0
  %v1043 = vadd.f32 %v705, %v1042
  %v1044 = vpop.f32.mrf.mxu0
  %v1045 = vadd.f32 %v705, %v1044
  %1046 = vmatmul.bf16.gmra.mxu0 %v637
  %v1047 = vpop.f32.mrf.mxu0
  %v1048 = vadd.f32 %v705, %v1047
  %v1049 = vpop.f32.mrf.mxu0
  %v1050 = vadd.f32 %v705, %v1049
  %1051 = vdwg.mxu0
  %1052 = vmatpush.bf16.msra.mxu0 %v965
  %1053 = vmatpush.bf16.msra.mxu0 %v961
  %1054 = vmatpush.bf16.msra.mxu0 %v957
  %1055 = vmatpush.bf16.msra.mxu0 %v953
  %1056 = vmatpush.bf16.msra.mxu0 %v949
  %1057 = vmatpush.bf16.msra.mxu0 %v945
  %1058 = vmatpush.bf16.msra.mxu0 %v941
  %1059 = vmatpush.bf16.msra.mxu0 %v937
  %1060 = vmatmul.bf16.gmra.mxu0 %v636
  %v1061 = vpop.f32.mrf.mxu0
  %v1062 = vadd.f32 %v1043, %v1061
  %v1063 = vpop.f32.mrf.mxu0
  %v1064 = vadd.f32 %v1045, %v1063
  %1065 = vmatmul.bf16.gmra.mxu0 %v638
  %v1066 = vpop.f32.mrf.mxu0
  %v1067 = vadd.f32 %v1048, %v1066
  %v1068 = vpop.f32.mrf.mxu0
  %v1069 = vadd.f32 %v1050, %v1068
  %1070 = vdwg.mxu0
  %1071 = vmatpush.bf16.msra.mxu0 %v934
  %1072 = vmatpush.bf16.msra.mxu0 %v930
  %1073 = vmatpush.bf16.msra.mxu0 %v926
  %1074 = vmatpush.bf16.msra.mxu0 %v922
  %1075 = vmatpush.bf16.msra.mxu0 %v918
  %1076 = vmatpush.bf16.msra.mxu0 %v914
  %1077 = vmatpush.bf16.msra.mxu0 %v910
  %1078 = vmatpush.bf16.msra.mxu0 %v906
  %1079 = vmatmul.bf16.gmra.mxu0 %v635
  %v1080 = vpop.f32.mrf.mxu0
  %v1081 = vadd.f32 %v706, %v1080
  %v1082 = vpop.f32.mrf.mxu0
  %v1083 = vadd.f32 %v706, %v1082
  %1084 = vmatmul.bf16.gmra.mxu0 %v637
  %v1085 = vpop.f32.mrf.mxu0
  %v1086 = vadd.f32 %v706, %v1085
  %v1087 = vpop.f32.mrf.mxu0
  %v1088 = vadd.f32 %v706, %v1087
  %1089 = vdwg.mxu0
  %1090 = vmatpush.bf16.msra.mxu0 %v966
  %1091 = vmatpush.bf16.msra.mxu0 %v962
  %1092 = vmatpush.bf16.msra.mxu0 %v958
  %1093 = vmatpush.bf16.msra.mxu0 %v954
  %1094 = vmatpush.bf16.msra.mxu0 %v950
  %1095 = vmatpush.bf16.msra.mxu0 %v946
  %1096 = vmatpush.bf16.msra.mxu0 %v942
  %1097 = vmatpush.bf16.msra.mxu0 %v938
  %1098 = vmatmul.bf16.gmra.mxu0 %v636
  %v1099 = vpop.f32.mrf.mxu0
  %v1100 = vadd.f32 %v1081, %v1099
  %v1101 = vpop.f32.mrf.mxu0
  %v1102 = vadd.f32 %v1083, %v1101
  %1103 = vmatmul.bf16.gmra.mxu0 %v638
  %v1104 = vpop.f32.mrf.mxu0
  %v1105 = vadd.f32 %v1086, %v1104
  %v1106 = vpop.f32.mrf.mxu0
  %v1107 = vadd.f32 %v1088, %v1106
  %1108 = vdwg.mxu0
  %1109 = vmatpush.bf16.msra.mxu0 %v935
  %1110 = vmatpush.bf16.msra.mxu0 %v931
  %1111 = vmatpush.bf16.msra.mxu0 %v927
  %1112 = vmatpush.bf16.msra.mxu0 %v923
  %1113 = vmatpush.bf16.msra.mxu0 %v919
  %1114 = vmatpush.bf16.msra.mxu0 %v915
  %1115 = vmatpush.bf16.msra.mxu0 %v911
  %1116 = vmatpush.bf16.msra.mxu0 %v907
  %1117 = vmatmul.bf16.gmra.mxu0 %v635
  %v1118 = vpop.f32.mrf.mxu0
  %v1119 = vadd.f32 %v707, %v1118
  %v1120 = vpop.f32.mrf.mxu0
  %v1121 = vadd.f32 %v707, %v1120
  %1122 = vmatmul.bf16.gmra.mxu0 %v637
  %v1123 = vpop.f32.mrf.mxu0
  %v1124 = vadd.f32 %v707, %v1123
  %v1125 = vpop.f32.mrf.mxu0
  %v1126 = vadd.f32 %v707, %v1125
  %1127 = vdwg.mxu0
  %1128 = vmatpush.bf16.msra.mxu0 %v967
  %1129 = vmatpush.bf16.msra.mxu0 %v963
  %1130 = vmatpush.bf16.msra.mxu0 %v959
  %1131 = vmatpush.bf16.msra.mxu0 %v955
  %1132 = vmatpush.bf16.msra.mxu0 %v951
  %1133 = vmatpush.bf16.msra.mxu0 %v947
  %1134 = vmatpush.bf16.msra.mxu0 %v943
  %1135 = vmatpush.bf16.msra.mxu0 %v939
  %1136 = vmatmul.bf16.gmra.mxu0 %v636
  %v1137 = vpop.f32.mrf.mxu0
  %v1138 = vadd.f32 %v1119, %v1137
  %v1139 = vpop.f32.mrf.mxu0
  %v1140 = vadd.f32 %v1121, %v1139
  %1141 = vmatmul.bf16.gmra.mxu0 %v638
  %v1142 = vpop.f32.mrf.mxu0
  %v1143 = vadd.f32 %v1124, %v1142
  %v1144 = vpop.f32.mrf.mxu0
  %v1145 = vadd.f32 %v1126, %v1144
  %1146 = vdwg.mxu0
  %1147 = vmatpush.bf16.msra.mxu0 %v936
  %1148 = vmatpush.bf16.msra.mxu0 %v932
  %1149 = vmatpush.bf16.msra.mxu0 %v928
  %1150 = vmatpush.bf16.msra.mxu0 %v924
  %1151 = vmatpush.bf16.msra.mxu0 %v920
  %1152 = vmatpush.bf16.msra.mxu0 %v916
  %1153 = vmatpush.bf16.msra.mxu0 %v912
  %1154 = vmatpush.bf16.msra.mxu0 %v908
  %1155 = vmatmul.bf16.gmra.mxu0 %v635
  %v1156 = vpop.f32.mrf.mxu0
  %v1157 = vadd.f32 %v708, %v1156
  %v1158 = vpop.f32.mrf.mxu0
  %v1159 = vadd.f32 %v708, %v1158
  %1160 = vmatmul.bf16.gmra.mxu0 %v637
  %v1161 = vpop.f32.mrf.mxu0
  %v1162 = vadd.f32 %v708, %v1161
  %v1163 = vpop.f32.mrf.mxu0
  %v1164 = vadd.f32 %v708, %v1163
  %1165 = vdwg.mxu0
  %1166 = vmatpush.bf16.msra.mxu0 %v968
  %1167 = vmatpush.bf16.msra.mxu0 %v964
  %1168 = vmatpush.bf16.msra.mxu0 %v960
  %1169 = vmatpush.bf16.msra.mxu0 %v956
  %1170 = vmatpush.bf16.msra.mxu0 %v952
  %1171 = vmatpush.bf16.msra.mxu0 %v948
  %1172 = vmatpush.bf16.msra.mxu0 %v944
  %1173 = vmatpush.bf16.msra.mxu0 %v940
  %1174 = vmatmul.bf16.gmra.mxu0 %v636
  %v1175 = vpop.f32.mrf.mxu0
  %v1176 = vadd.f32 %v1157, %v1175
  %v1177 = vpop.f32.mrf.mxu0
  %v1178 = vadd.f32 %v1159, %v1177
  %1179 = vmatmul.bf16.gmra.mxu0 %v638
  %v1180 = vpop.f32.mrf.mxu0
  %v1181 = vadd.f32 %v1162, %v1180
  %v1182 = vpop.f32.mrf.mxu0
  %v1183 = vadd.f32 %v1164, %v1182
  %1184 = vdwg.mxu0
  %v1185 = vpack.c.bf16 %v1100, %v1062
  %v1186 = vpack.c.bf16 %v1176, %v1138
  %v1187 = vpack.c.bf16 %v1102, %v1064
  %v1188 = vpack.c.bf16 %v1178, %v1140
  %v1189 = vpack.c.bf16 %v1105, %v1067
  %v1190 = vpack.c.bf16 %v1181, %v1143
  %v1191 = vpack.c.bf16 %v1107, %v1069
  %v1192 = vpack.c.bf16 %v1183, %v1145
  %v1193 = vld [vmem:[%s1] sm:$0xf]
  %v1194 = vld [vmem:[%s1 + $0x4] sm:$0xf]
  %v1195 = vld [vmem:[%s1 + $0x8] sm:$0xf]
  %v1196 = vld [vmem:[%s1 + $0xc] sm:$0xf]
  %v1197 = vld [vmem:[%s2] sm:$0xf]
  %v1198 = vld [vmem:[%s2 + $0x4] sm:$0xf]
  %v1199 = vld [vmem:[%s2 + $0x8] sm:$0xf]
  %v1200 = vld [vmem:[%s2 + $0xc] sm:$0xf]
  %v1201 = vld [vmem:[%s13] sm:$0xf]
  %v1202 = vld [vmem:[%s13 + $0x4] sm:$0xf]
  %v1203 = vld [vmem:[%s13 + $0x8] sm:$0xf]
  %v1204 = vld [vmem:[%s13 + $0xc] sm:$0xf]
  %v1205 = vld [vmem:[%s13 + $0x10] sm:$0xf]
  %v1206 = vld [vmem:[%s13 + $0x14] sm:$0xf]
  %v1207 = vld [vmem:[%s13 + $0x18] sm:$0xf]
  %v1208 = vld [vmem:[%s13 + $0x1c] sm:$0xf]
  %v1209 = vld [vmem:[%s13 + $0x20] sm:$0xf]
  %v1210 = vld [vmem:[%s13 + $0x24] sm:$0xf]
  %v1211 = vld [vmem:[%s13 + $0x28] sm:$0xf]
  %v1212 = vld [vmem:[%s13 + $0x2c] sm:$0xf]
  %v1213 = vld [vmem:[%s13 + $0x30] sm:$0xf]
  %v1214 = vld [vmem:[%s13 + $0x34] sm:$0xf]
  %v1215 = vld [vmem:[%s13 + $0x38] sm:$0xf]
  %v1216 = vld [vmem:[%s13 + $0x3c] sm:$0xf]
  %v1221 = vunpack.c.l.b16 %v1197
  %v1222 = vunpack.c.l.b16 %v1198
  %v1223 = vunpack.c.l.b16 %v1199
  %v1224 = vunpack.c.l.b16 %v1200
  %v1225 = vpack.c.b16 %v1222, %v1221
  %v1226 = vpack.c.b16 %v1224, %v1223
  %v1245 = vunpack.c.l.b16 %v1201
  %v1246 = vunpack.c.l.b16 %v1202
  %v1247 = vunpack.c.l.b16 %v1203
  %v1248 = vunpack.c.l.b16 %v1204
  %v1249 = vunpack.c.l.b16 %v1205
  %v1250 = vunpack.c.l.b16 %v1206
  %v1251 = vunpack.c.l.b16 %v1207
  %v1252 = vunpack.c.l.b16 %v1208
  %v1253 = vunpack.c.l.b16 %v1209
  %v1254 = vunpack.c.l.b16 %v1210
  %v1255 = vunpack.c.l.b16 %v1211
  %v1256 = vunpack.c.l.b16 %v1212
  %v1257 = vunpack.c.l.b16 %v1213
  %v1258 = vunpack.c.l.b16 %v1214
  %v1259 = vunpack.c.l.b16 %v1215
  %v1260 = vunpack.c.l.b16 %v1216
  %v1261 = vpack.c.b16 %v1246, %v1245
  %v1262 = vpack.c.b16 %v1248, %v1247
  %v1263 = vpack.c.b16 %v1250, %v1249
  %v1264 = vpack.c.b16 %v1252, %v1251
  %v1265 = vpack.c.b16 %v1254, %v1253
  %v1266 = vpack.c.b16 %v1256, %v1255
  %v1267 = vpack.c.b16 %v1258, %v1257
  %v1268 = vpack.c.b16 %v1260, %v1259
  %1277 = vmatpush.bf16.msra.mxu0 %v1268
  %1278 = vmatpush.bf16.msra.mxu0 %v1267
  %1279 = vmatpush.bf16.msra.mxu0 %v1266
  %1280 = vmatpush.bf16.msra.mxu0 %v1265
  %1281 = vmatpush.bf16.msra.mxu0 %v1264
  %1282 = vmatpush.bf16.msra.mxu0 %v1263
  %1283 = vmatpush.bf16.msra.mxu0 %v1262
  %1284 = vmatpush.bf16.msra.mxu0 %v1261
  %1285 = vmatmul.bf16.gmra.mxu0 %v1225
  %v1286 = vpop.f32.mrf.mxu0
  %v1287 = vadd.f32 0.0, %v1286
  %v1288 = vpop.f32.mrf.mxu0
  %v1289 = vadd.f32 0.0, %v1288
  %1290 = vmatmul.bf16.gmra.mxu0 %v1226
  %v1291 = vpop.f32.mrf.mxu0
  %v1292 = vadd.f32 0.0, %v1291
  %v1293 = vpop.f32.mrf.mxu0
  %v1294 = vadd.f32 0.0, %v1293
  %1295 = vdwg.mxu0
  %v1296 = vld [vmem:[%s9] sm:$0xff]
  %v1297 = vld [vmem:[%s9 + $0x8] sm:$0xff]
  %v1298 = vld [vmem:[%s9 + $0x10] sm:$0xff]
  %v1299 = vld [vmem:[%s9 + $0x18] sm:$0xff]
  %v1300 = vld [vmem:[%s9 + $0x20] sm:$0xff]
  %v1301 = vld [vmem:[%s9 + $0x28] sm:$0xff]
  %v1302 = vld [vmem:[%s9 + $0x30] sm:$0xff]
  %v1303 = vld [vmem:[%s9 + $0x38] sm:$0xff]
  %v1304 = vld [vmem:[%s9 + $0x40] sm:$0xff]
  %v1305 = vld [vmem:[%s9 + $0x48] sm:$0xff]
  %v1306 = vld [vmem:[%s9 + $0x50] sm:$0xff]
  %v1307 = vld [vmem:[%s9 + $0x58] sm:$0xff]
  %v1308 = vld [vmem:[%s9 + $0x60] sm:$0xff]
  %v1309 = vld [vmem:[%s9 + $0x68] sm:$0xff]
  %v1310 = vld [vmem:[%s9 + $0x70] sm:$0xff]
  %v1311 = vld [vmem:[%s9 + $0x78] sm:$0xff]
  %v1312 = vld [vmem:[%s9 + $0x80] sm:$0xff]
  %v1313 = vld [vmem:[%s9 + $0x88] sm:$0xff]
  %v1314 = vld [vmem:[%s9 + $0x90] sm:$0xff]
  %v1315 = vld [vmem:[%s9 + $0x98] sm:$0xff]
  %v1316 = vld [vmem:[%s9 + $0xa0] sm:$0xff]
  %v1317 = vld [vmem:[%s9 + $0xa8] sm:$0xff]
  %v1318 = vld [vmem:[%s9 + $0xb0] sm:$0xff]
  %v1319 = vld [vmem:[%s9 + $0xb8] sm:$0xff]
  %v1320 = vld [vmem:[%s9 + $0xc0] sm:$0xff]
  %v1321 = vld [vmem:[%s9 + $0xc8] sm:$0xff]
  %v1322 = vld [vmem:[%s9 + $0xd0] sm:$0xff]
  %v1323 = vld [vmem:[%s9 + $0xd8] sm:$0xff]
  %v1324 = vld [vmem:[%s9 + $0xe0] sm:$0xff]
  %v1325 = vld [vmem:[%s9 + $0xe8] sm:$0xff]
  %v1326 = vld [vmem:[%s9 + $0xf0] sm:$0xff]
  %v1327 = vld [vmem:[%s9 + $0xf8] sm:$0xff]
  %v1328 = vld [vmem:[%s9 + $0x100] sm:$0xff]
  %v1329 = vld [vmem:[%s9 + $0x108] sm:$0xff]
  %v1330 = vld [vmem:[%s9 + $0x110] sm:$0xff]
  %v1331 = vld [vmem:[%s9 + $0x118] sm:$0xff]
  %v1332 = vld [vmem:[%s9 + $0x120] sm:$0xff]
  %v1333 = vld [vmem:[%s9 + $0x128] sm:$0xff]
  %v1334 = vld [vmem:[%s9 + $0x130] sm:$0xff]
  %v1335 = vld [vmem:[%s9 + $0x138] sm:$0xff]
  %v1336 = vld [vmem:[%s9 + $0x140] sm:$0xff]
  %v1337 = vld [vmem:[%s9 + $0x148] sm:$0xff]
  %v1338 = vld [vmem:[%s9 + $0x150] sm:$0xff]
  %v1339 = vld [vmem:[%s9 + $0x158] sm:$0xff]
  %v1340 = vld [vmem:[%s9 + $0x160] sm:$0xff]
  %v1341 = vld [vmem:[%s9 + $0x168] sm:$0xff]
  %v1342 = vld [vmem:[%s9 + $0x170] sm:$0xff]
  %v1343 = vld [vmem:[%s9 + $0x178] sm:$0xff]
  %v1344 = vld [vmem:[%s9 + $0x180] sm:$0xff]
  %v1345 = vld [vmem:[%s9 + $0x188] sm:$0xff]
  %v1346 = vld [vmem:[%s9 + $0x190] sm:$0xff]
  %v1347 = vld [vmem:[%s9 + $0x198] sm:$0xff]
  %v1348 = vld [vmem:[%s9 + $0x1a0] sm:$0xff]
  %v1349 = vld [vmem:[%s9 + $0x1a8] sm:$0xff]
  %v1350 = vld [vmem:[%s9 + $0x1b0] sm:$0xff]
  %v1351 = vld [vmem:[%s9 + $0x1b8] sm:$0xff]
  %v1352 = vld [vmem:[%s9 + $0x1c0] sm:$0xff]
  %v1353 = vld [vmem:[%s9 + $0x1c8] sm:$0xff]
  %v1354 = vld [vmem:[%s9 + $0x1d0] sm:$0xff]
  %v1355 = vld [vmem:[%s9 + $0x1d8] sm:$0xff]
  %v1356 = vld [vmem:[%s9 + $0x1e0] sm:$0xff]
  %v1357 = vld [vmem:[%s9 + $0x1e8] sm:$0xff]
  %v1358 = vld [vmem:[%s9 + $0x1f0] sm:$0xff]
  %v1359 = vld [vmem:[%s9 + $0x1f8] sm:$0xff]
  %v1360 = vld [vmem:[%s10] sm:$0xff]
  %v1361 = vld [vmem:[%s10 + $0x8] sm:$0xff]
  %v1362 = vld [vmem:[%s10 + $0x10] sm:$0xff]
  %v1363 = vld [vmem:[%s10 + $0x18] sm:$0xff]
  %v1368 = vunpack.c.l.b16 %v1193
  %v1369 = vunpack.c.l.b16 %v1194
  %v1370 = vunpack.c.l.b16 %v1195
  %v1371 = vunpack.c.l.b16 %v1196
  %v1372 = vpack.c.b16 %v1369, %v1368
  %v1373 = vpack.c.b16 %v1371, %v1370
  %v1378 = vunpack.c.l.b16 %v1360
  %v1379 = vunpack.c.h.b16 %v1360
  %v1380 = vunpack.c.l.b16 %v1361
  %v1381 = vunpack.c.h.b16 %v1361
  %v1382 = vunpack.c.l.b16 %v1362
  %v1383 = vunpack.c.h.b16 %v1362
  %v1384 = vunpack.c.l.b16 %v1363
  %v1385 = vunpack.c.h.b16 %v1363
  %v1386 = vpack.c.b16 %v1378, %v1378
  %v1387 = vpack.c.b16 %v1379, %v1379
  %v1388 = vpack.c.b16 %v1380, %v1380
  %v1389 = vpack.c.b16 %v1381, %v1381
  %v1390 = vpack.c.b16 %v1382, %v1382
  %v1391 = vpack.c.b16 %v1383, %v1383
  %v1392 = vpack.c.b16 %v1384, %v1384
  %v1393 = vpack.c.b16 %v1385, %v1385
  %vm1394 = vcmask 64512
  %v1396 = vsel %vm1394, %v1372, 0
  %v1399 = vsel %vm1394, %v1373, 0
  %vm1401 = vcmask 1043456
  %v1403 = vsel %vm1401, %v1386, 0
  %v1406 = vsel %vm1401, %v1387, 0
  %v1409 = vsel %vm1401, %v1388, 0
  %v1412 = vsel %vm1401, %v1389, 0
  %v1415 = vsel %vm1401, %v1390, 0
  %v1418 = vsel %vm1401, %v1391, 0
  %v1421 = vsel %vm1401, %v1392, 0
  %v1424 = vsel %vm1401, %v1393, 0
  %1426 = vmatpush.bf16.msra.mxu0 0
  %1427 = vmatpush.bf16.msra.mxu0 0
  %1428 = vmatpush.bf16.msra.mxu0 0
  %1429 = vmatpush.bf16.msra.mxu0 0
  %1430 = vmatpush.bf16.msra.mxu0 0
  %1431 = vmatpush.bf16.msra.mxu0 0
  %1432 = vmatpush.bf16.msra.mxu0 0
  %1433 = vmatpush.bf16.msra.mxu0 %v1403
  %1434 = vmatmul.bf16.gmra.mxu0 %v1396
  %v1435 = vpop.f32.mrf.mxu0
  %v1436 = vadd.f32 0.0, %v1435
  %v1437 = vpop.f32.mrf.mxu0
  %v1438 = vadd.f32 0.0, %v1437
  %1439 = vmatmul.bf16.gmra.mxu0 %v1399
  %v1440 = vpop.f32.mrf.mxu0
  %v1441 = vadd.f32 0.0, %v1440
  %v1442 = vpop.f32.mrf.mxu0
  %v1443 = vadd.f32 0.0, %v1442
  %1444 = vdwg.mxu0
  %1445 = vmatpush.bf16.msra.mxu0 0
  %1446 = vmatpush.bf16.msra.mxu0 0
  %1447 = vmatpush.bf16.msra.mxu0 0
  %1448 = vmatpush.bf16.msra.mxu0 0
  %1449 = vmatpush.bf16.msra.mxu0 0
  %1450 = vmatpush.bf16.msra.mxu0 0
  %1451 = vmatpush.bf16.msra.mxu0 0
  %1452 = vmatpush.bf16.msra.mxu0 %v1406
  %1453 = vmatmul.bf16.gmra.mxu0 %v1396
  %v1454 = vpop.f32.mrf.mxu0
  %v1455 = vadd.f32 0.0, %v1454
  %v1456 = vpop.f32.mrf.mxu0
  %v1457 = vadd.f32 0.0, %v1456
  %1458 = vmatmul.bf16.gmra.mxu0 %v1399
  %v1459 = vpop.f32.mrf.mxu0
  %v1460 = vadd.f32 0.0, %v1459
  %v1461 = vpop.f32.mrf.mxu0
  %v1462 = vadd.f32 0.0, %v1461
  %1463 = vdwg.mxu0
  %1464 = vmatpush.bf16.msra.mxu0 0
  %1465 = vmatpush.bf16.msra.mxu0 0
  %1466 = vmatpush.bf16.msra.mxu0 0
  %1467 = vmatpush.bf16.msra.mxu0 0
  %1468 = vmatpush.bf16.msra.mxu0 0
  %1469 = vmatpush.bf16.msra.mxu0 0
  %1470 = vmatpush.bf16.msra.mxu0 0
  %1471 = vmatpush.bf16.msra.mxu0 %v1409
  %1472 = vmatmul.bf16.gmra.mxu0 %v1396
  %v1473 = vpop.f32.mrf.mxu0
  %v1474 = vadd.f32 0.0, %v1473
  %v1475 = vpop.f32.mrf.mxu0
  %v1476 = vadd.f32 0.0, %v1475
  %1477 = vmatmul.bf16.gmra.mxu0 %v1399
  %v1478 = vpop.f32.mrf.mxu0
  %v1479 = vadd.f32 0.0, %v1478
  %v1480 = vpop.f32.mrf.mxu0
  %v1481 = vadd.f32 0.0, %v1480
  %1482 = vdwg.mxu0
  %1483 = vmatpush.bf16.msra.mxu0 0
  %1484 = vmatpush.bf16.msra.mxu0 0
  %1485 = vmatpush.bf16.msra.mxu0 0
  %1486 = vmatpush.bf16.msra.mxu0 0
  %1487 = vmatpush.bf16.msra.mxu0 0
  %1488 = vmatpush.bf16.msra.mxu0 0
  %1489 = vmatpush.bf16.msra.mxu0 0
  %1490 = vmatpush.bf16.msra.mxu0 %v1412
  %1491 = vmatmul.bf16.gmra.mxu0 %v1396
  %v1492 = vpop.f32.mrf.mxu0
  %v1493 = vadd.f32 0.0, %v1492
  %v1494 = vpop.f32.mrf.mxu0
  %v1495 = vadd.f32 0.0, %v1494
  %1496 = vmatmul.bf16.gmra.mxu0 %v1399
  %v1497 = vpop.f32.mrf.mxu0
  %v1498 = vadd.f32 0.0, %v1497
  %v1499 = vpop.f32.mrf.mxu0
  %v1500 = vadd.f32 0.0, %v1499
  %1501 = vdwg.mxu0
  %1502 = vmatpush.bf16.msra.mxu0 0
  %1503 = vmatpush.bf16.msra.mxu0 0
  %1504 = vmatpush.bf16.msra.mxu0 0
  %1505 = vmatpush.bf16.msra.mxu0 0
  %1506 = vmatpush.bf16.msra.mxu0 0
  %1507 = vmatpush.bf16.msra.mxu0 0
  %1508 = vmatpush.bf16.msra.mxu0 0
  %1509 = vmatpush.bf16.msra.mxu0 %v1415
  %1510 = vmatmul.bf16.gmra.mxu0 %v1396
  %v1511 = vpop.f32.mrf.mxu0
  %v1512 = vadd.f32 0.0, %v1511
  %v1513 = vpop.f32.mrf.mxu0
  %v1514 = vadd.f32 0.0, %v1513
  %1515 = vmatmul.bf16.gmra.mxu0 %v1399
  %v1516 = vpop.f32.mrf.mxu0
  %v1517 = vadd.f32 0.0, %v1516
  %v1518 = vpop.f32.mrf.mxu0
  %v1519 = vadd.f32 0.0, %v1518
  %1520 = vdwg.mxu0
  %1521 = vmatpush.bf16.msra.mxu0 0
  %1522 = vmatpush.bf16.msra.mxu0 0
  %1523 = vmatpush.bf16.msra.mxu0 0
  %1524 = vmatpush.bf16.msra.mxu0 0
  %1525 = vmatpush.bf16.msra.mxu0 0
  %1526 = vmatpush.bf16.msra.mxu0 0
  %1527 = vmatpush.bf16.msra.mxu0 0
  %1528 = vmatpush.bf16.msra.mxu0 %v1418
  %1529 = vmatmul.bf16.gmra.mxu0 %v1396
  %v1530 = vpop.f32.mrf.mxu0
  %v1531 = vadd.f32 0.0, %v1530
  %v1532 = vpop.f32.mrf.mxu0
  %v1533 = vadd.f32 0.0, %v1532
  %1534 = vmatmul.bf16.gmra.mxu0 %v1399
  %v1535 = vpop.f32.mrf.mxu0
  %v1536 = vadd.f32 0.0, %v1535
  %v1537 = vpop.f32.mrf.mxu0
  %v1538 = vadd.f32 0.0, %v1537
  %1539 = vdwg.mxu0
  %1540 = vmatpush.bf16.msra.mxu0 0
  %1541 = vmatpush.bf16.msra.mxu0 0
  %1542 = vmatpush.bf16.msra.mxu0 0
  %1543 = vmatpush.bf16.msra.mxu0 0
  %1544 = vmatpush.bf16.msra.mxu0 0
  %1545 = vmatpush.bf16.msra.mxu0 0
  %1546 = vmatpush.bf16.msra.mxu0 0
  %1547 = vmatpush.bf16.msra.mxu0 %v1421
  %1548 = vmatmul.bf16.gmra.mxu0 %v1396
  %v1549 = vpop.f32.mrf.mxu0
  %v1550 = vadd.f32 0.0, %v1549
  %v1551 = vpop.f32.mrf.mxu0
  %v1552 = vadd.f32 0.0, %v1551
  %1553 = vmatmul.bf16.gmra.mxu0 %v1399
  %v1554 = vpop.f32.mrf.mxu0
  %v1555 = vadd.f32 0.0, %v1554
  %v1556 = vpop.f32.mrf.mxu0
  %v1557 = vadd.f32 0.0, %v1556
  %1558 = vdwg.mxu0
  %1559 = vmatpush.bf16.msra.mxu0 0
  %1560 = vmatpush.bf16.msra.mxu0 0
  %1561 = vmatpush.bf16.msra.mxu0 0
  %1562 = vmatpush.bf16.msra.mxu0 0
  %1563 = vmatpush.bf16.msra.mxu0 0
  %1564 = vmatpush.bf16.msra.mxu0 0
  %1565 = vmatpush.bf16.msra.mxu0 0
  %1566 = vmatpush.bf16.msra.mxu0 %v1424
  %1567 = vmatmul.bf16.gmra.mxu0 %v1396
  %v1568 = vpop.f32.mrf.mxu0
  %v1569 = vadd.f32 0.0, %v1568
  %v1570 = vpop.f32.mrf.mxu0
  %v1571 = vadd.f32 0.0, %v1570
  %1572 = vmatmul.bf16.gmra.mxu0 %v1399
  %v1573 = vpop.f32.mrf.mxu0
  %v1574 = vadd.f32 0.0, %v1573
  %v1575 = vpop.f32.mrf.mxu0
  %v1576 = vadd.f32 0.0, %v1575
  %1577 = vdwg.mxu0
  %v1582 = vunpack.c.l.b16 %v1185
  %v1583 = vunpack.c.l.b16 %v1187
  %v1584 = vunpack.c.l.b16 %v1189
  %v1585 = vunpack.c.l.b16 %v1191
  %v1586 = vpack.c.b16 %v1583, %v1582
  %v1587 = vpack.c.b16 %v1585, %v1584
  %v1654 = vunpack.c.l.b16 %v1296
  %v1655 = vunpack.c.h.b16 %v1296
  %v1656 = vunpack.c.l.b16 %v1297
  %v1657 = vunpack.c.h.b16 %v1297
  %v1658 = vunpack.c.l.b16 %v1298
  %v1659 = vunpack.c.h.b16 %v1298
  %v1660 = vunpack.c.l.b16 %v1299
  %v1661 = vunpack.c.h.b16 %v1299
  %v1662 = vunpack.c.l.b16 %v1300
  %v1663 = vunpack.c.h.b16 %v1300
  %v1664 = vunpack.c.l.b16 %v1301
  %v1665 = vunpack.c.h.b16 %v1301
  %v1666 = vunpack.c.l.b16 %v1302
  %v1667 = vunpack.c.h.b16 %v1302
  %v1668 = vunpack.c.l.b16 %v1303
  %v1669 = vunpack.c.h.b16 %v1303
  %v1670 = vunpack.c.l.b16 %v1304
  %v1671 = vunpack.c.h.b16 %v1304
  %v1672 = vunpack.c.l.b16 %v1305
  %v1673 = vunpack.c.h.b16 %v1305
  %v1674 = vunpack.c.l.b16 %v1306
  %v1675 = vunpack.c.h.b16 %v1306
  %v1676 = vunpack.c.l.b16 %v1307
  %v1677 = vunpack.c.h.b16 %v1307
  %v1678 = vunpack.c.l.b16 %v1308
  %v1679 = vunpack.c.h.b16 %v1308
  %v1680 = vunpack.c.l.b16 %v1309
  %v1681 = vunpack.c.h.b16 %v1309
  %v1682 = vunpack.c.l.b16 %v1310
  %v1683 = vunpack.c.h.b16 %v1310
  %v1684 = vunpack.c.l.b16 %v1311
  %v1685 = vunpack.c.h.b16 %v1311
  %v1686 = vunpack.c.l.b16 %v1312
  %v1687 = vunpack.c.h.b16 %v1312
  %v1688 = vunpack.c.l.b16 %v1313
  %v1689 = vunpack.c.h.b16 %v1313
  %v1690 = vunpack.c.l.b16 %v1314
  %v1691 = vunpack.c.h.b16 %v1314
  %v1692 = vunpack.c.l.b16 %v1315
  %v1693 = vunpack.c.h.b16 %v1315
  %v1694 = vunpack.c.l.b16 %v1316
  %v1695 = vunpack.c.h.b16 %v1316
  %v1696 = vunpack.c.l.b16 %v1317
  %v1697 = vunpack.c.h.b16 %v1317
  %v1698 = vunpack.c.l.b16 %v1318
  %v1699 = vunpack.c.h.b16 %v1318
  %v1700 = vunpack.c.l.b16 %v1319
  %v1701 = vunpack.c.h.b16 %v1319
  %v1702 = vunpack.c.l.b16 %v1320
  %v1703 = vunpack.c.h.b16 %v1320
  %v1704 = vunpack.c.l.b16 %v1321
  %v1705 = vunpack.c.h.b16 %v1321
  %v1706 = vunpack.c.l.b16 %v1322
  %v1707 = vunpack.c.h.b16 %v1322
  %v1708 = vunpack.c.l.b16 %v1323
  %v1709 = vunpack.c.h.b16 %v1323
  %v1710 = vunpack.c.l.b16 %v1324
  %v1711 = vunpack.c.h.b16 %v1324
  %v1712 = vunpack.c.l.b16 %v1325
  %v1713 = vunpack.c.h.b16 %v1325
  %v1714 = vunpack.c.l.b16 %v1326
  %v1715 = vunpack.c.h.b16 %v1326
  %v1716 = vunpack.c.l.b16 %v1327
  %v1717 = vunpack.c.h.b16 %v1327
  %v1718 = vunpack.c.l.b16 %v1328
  %v1719 = vunpack.c.h.b16 %v1328
  %v1720 = vunpack.c.l.b16 %v1329
  %v1721 = vunpack.c.h.b16 %v1329
  %v1722 = vunpack.c.l.b16 %v1330
  %v1723 = vunpack.c.h.b16 %v1330
  %v1724 = vunpack.c.l.b16 %v1331
  %v1725 = vunpack.c.h.b16 %v1331
  %v1726 = vunpack.c.l.b16 %v1332
  %v1727 = vunpack.c.h.b16 %v1332
  %v1728 = vunpack.c.l.b16 %v1333
  %v1729 = vunpack.c.h.b16 %v1333
  %v1730 = vunpack.c.l.b16 %v1334
  %v1731 = vunpack.c.h.b16 %v1334
  %v1732 = vunpack.c.l.b16 %v1335
  %v1733 = vunpack.c.h.b16 %v1335
  %v1734 = vunpack.c.l.b16 %v1336
  %v1735 = vunpack.c.h.b16 %v1336
  %v1736 = vunpack.c.l.b16 %v1337
  %v1737 = vunpack.c.h.b16 %v1337
  %v1738 = vunpack.c.l.b16 %v1338
  %v1739 = vunpack.c.h.b16 %v1338
  %v1740 = vunpack.c.l.b16 %v1339
  %v1741 = vunpack.c.h.b16 %v1339
  %v1742 = vunpack.c.l.b16 %v1340
  %v1743 = vunpack.c.h.b16 %v1340
  %v1744 = vunpack.c.l.b16 %v1341
  %v1745 = vunpack.c.h.b16 %v1341
  %v1746 = vunpack.c.l.b16 %v1342
  %v1747 = vunpack.c.h.b16 %v1342
  %v1748 = vunpack.c.l.b16 %v1343
  %v1749 = vunpack.c.h.b16 %v1343
  %v1750 = vunpack.c.l.b16 %v1344
  %v1751 = vunpack.c.h.b16 %v1344
  %v1752 = vunpack.c.l.b16 %v1345
  %v1753 = vunpack.c.h.b16 %v1345
  %v1754 = vunpack.c.l.b16 %v1346
  %v1755 = vunpack.c.h.b16 %v1346
  %v1756 = vunpack.c.l.b16 %v1347
  %v1757 = vunpack.c.h.b16 %v1347
  %v1758 = vunpack.c.l.b16 %v1348
  %v1759 = vunpack.c.h.b16 %v1348
  %v1760 = vunpack.c.l.b16 %v1349
  %v1761 = vunpack.c.h.b16 %v1349
  %v1762 = vunpack.c.l.b16 %v1350
  %v1763 = vunpack.c.h.b16 %v1350
  %v1764 = vunpack.c.l.b16 %v1351
  %v1765 = vunpack.c.h.b16 %v1351
  %v1766 = vunpack.c.l.b16 %v1352
  %v1767 = vunpack.c.h.b16 %v1352
  %v1768 = vunpack.c.l.b16 %v1353
  %v1769 = vunpack.c.h.b16 %v1353
  %v1770 = vunpack.c.l.b16 %v1354
  %v1771 = vunpack.c.h.b16 %v1354
  %v1772 = vunpack.c.l.b16 %v1355
  %v1773 = vunpack.c.h.b16 %v1355
  %v1774 = vunpack.c.l.b16 %v1356
  %v1775 = vunpack.c.h.b16 %v1356
  %v1776 = vunpack.c.l.b16 %v1357
  %v1777 = vunpack.c.h.b16 %v1357
  %v1778 = vunpack.c.l.b16 %v1358
  %v1779 = vunpack.c.h.b16 %v1358
  %v1780 = vunpack.c.l.b16 %v1359
  %v1781 = vunpack.c.h.b16 %v1359
  %v1782 = vpack.c.b16 %v1662, %v1654
  %v1783 = vpack.c.b16 %v1663, %v1655
  %v1784 = vpack.c.b16 %v1664, %v1656
  %v1785 = vpack.c.b16 %v1665, %v1657
  %v1786 = vpack.c.b16 %v1666, %v1658
  %v1787 = vpack.c.b16 %v1667, %v1659
  %v1788 = vpack.c.b16 %v1668, %v1660
  %v1789 = vpack.c.b16 %v1669, %v1661
  %v1790 = vpack.c.b16 %v1678, %v1670
  %v1791 = vpack.c.b16 %v1679, %v1671
  %v1792 = vpack.c.b16 %v1680, %v1672
  %v1793 = vpack.c.b16 %v1681, %v1673
  %v1794 = vpack.c.b16 %v1682, %v1674
  %v1795 = vpack.c.b16 %v1683, %v1675
  %v1796 = vpack.c.b16 %v1684, %v1676
  %v1797 = vpack.c.b16 %v1685, %v1677
  %v1798 = vpack.c.b16 %v1694, %v1686
  %v1799 = vpack.c.b16 %v1695, %v1687
  %v1800 = vpack.c.b16 %v1696, %v1688
  %v1801 = vpack.c.b16 %v1697, %v1689
  %v1802 = vpack.c.b16 %v1698, %v1690
  %v1803 = vpack.c.b16 %v1699, %v1691
  %v1804 = vpack.c.b16 %v1700, %v1692
  %v1805 = vpack.c.b16 %v1701, %v1693
  %v1806 = vpack.c.b16 %v1710, %v1702
  %v1807 = vpack.c.b16 %v1711, %v1703
  %v1808 = vpack.c.b16 %v1712, %v1704
  %v1809 = vpack.c.b16 %v1713, %v1705
  %v1810 = vpack.c.b16 %v1714, %v1706
  %v1811 = vpack.c.b16 %v1715, %v1707
  %v1812 = vpack.c.b16 %v1716, %v1708
  %v1813 = vpack.c.b16 %v1717, %v1709
  %v1814 = vpack.c.b16 %v1726, %v1718
  %v1815 = vpack.c.b16 %v1727, %v1719
  %v1816 = vpack.c.b16 %v1728, %v1720
  %v1817 = vpack.c.b16 %v1729, %v1721
  %v1818 = vpack.c.b16 %v1730, %v1722
  %v1819 = vpack.c.b16 %v1731, %v1723
  %v1820 = vpack.c.b16 %v1732, %v1724
  %v1821 = vpack.c.b16 %v1733, %v1725
  %v1822 = vpack.c.b16 %v1742, %v1734
  %v1823 = vpack.c.b16 %v1743, %v1735
  %v1824 = vpack.c.b16 %v1744, %v1736
  %v1825 = vpack.c.b16 %v1745, %v1737
  %v1826 = vpack.c.b16 %v1746, %v1738
  %v1827 = vpack.c.b16 %v1747, %v1739
  %v1828 = vpack.c.b16 %v1748, %v1740
  %v1829 = vpack.c.b16 %v1749, %v1741
  %v1830 = vpack.c.b16 %v1758, %v1750
  %v1831 = vpack.c.b16 %v1759, %v1751
  %v1832 = vpack.c.b16 %v1760, %v1752
  %v1833 = vpack.c.b16 %v1761, %v1753
  %v1834 = vpack.c.b16 %v1762, %v1754
  %v1835 = vpack.c.b16 %v1763, %v1755
  %v1836 = vpack.c.b16 %v1764, %v1756
  %v1837 = vpack.c.b16 %v1765, %v1757
  %v1838 = vpack.c.b16 %v1774, %v1766
  %v1839 = vpack.c.b16 %v1775, %v1767
  %v1840 = vpack.c.b16 %v1776, %v1768
  %v1841 = vpack.c.b16 %v1777, %v1769
  %v1842 = vpack.c.b16 %v1778, %v1770
  %v1843 = vpack.c.b16 %v1779, %v1771
  %v1844 = vpack.c.b16 %v1780, %v1772
  %v1845 = vpack.c.b16 %v1781, %v1773
  %1910 = vmatpush.bf16.msra.mxu0 %v1838
  %1911 = vmatpush.bf16.msra.mxu0 %v1830
  %1912 = vmatpush.bf16.msra.mxu0 %v1822
  %1913 = vmatpush.bf16.msra.mxu0 %v1814
  %1914 = vmatpush.bf16.msra.mxu0 %v1806
  %1915 = vmatpush.bf16.msra.mxu0 %v1798
  %1916 = vmatpush.bf16.msra.mxu0 %v1790
  %1917 = vmatpush.bf16.msra.mxu0 %v1782
  %1918 = vmatmul.bf16.gmra.mxu0 %v1586
  %v1919 = vpop.f32.mrf.mxu0
  %v1920 = vadd.f32 %v1436, %v1919
  %v1921 = vpop.f32.mrf.mxu0
  %v1922 = vadd.f32 %v1438, %v1921
  %1923 = vmatmul.bf16.gmra.mxu0 %v1587
  %v1924 = vpop.f32.mrf.mxu0
  %v1925 = vadd.f32 %v1441, %v1924
  %v1926 = vpop.f32.mrf.mxu0
  %v1927 = vadd.f32 %v1443, %v1926
  %1928 = vdwg.mxu0
  %1929 = vmatpush.bf16.msra.mxu0 %v1839
  %1930 = vmatpush.bf16.msra.mxu0 %v1831
  %1931 = vmatpush.bf16.msra.mxu0 %v1823
  %1932 = vmatpush.bf16.msra.mxu0 %v1815
  %1933 = vmatpush.bf16.msra.mxu0 %v1807
  %1934 = vmatpush.bf16.msra.mxu0 %v1799
  %1935 = vmatpush.bf16.msra.mxu0 %v1791
  %1936 = vmatpush.bf16.msra.mxu0 %v1783
  %1937 = vmatmul.bf16.gmra.mxu0 %v1586
  %v1938 = vpop.f32.mrf.mxu0
  %v1939 = vadd.f32 %v1455, %v1938
  %v1940 = vpop.f32.mrf.mxu0
  %v1941 = vadd.f32 %v1457, %v1940
  %1942 = vmatmul.bf16.gmra.mxu0 %v1587
  %v1943 = vpop.f32.mrf.mxu0
  %v1944 = vadd.f32 %v1460, %v1943
  %v1945 = vpop.f32.mrf.mxu0
  %v1946 = vadd.f32 %v1462, %v1945
  %1947 = vdwg.mxu0
  %1948 = vmatpush.bf16.msra.mxu0 %v1840
  %1949 = vmatpush.bf16.msra.mxu0 %v1832
  %1950 = vmatpush.bf16.msra.mxu0 %v1824
  %1951 = vmatpush.bf16.msra.mxu0 %v1816
  %1952 = vmatpush.bf16.msra.mxu0 %v1808
  %1953 = vmatpush.bf16.msra.mxu0 %v1800
  %1954 = vmatpush.bf16.msra.mxu0 %v1792
  %1955 = vmatpush.bf16.msra.mxu0 %v1784
  %1956 = vmatmul.bf16.gmra.mxu0 %v1586
  %v1957 = vpop.f32.mrf.mxu0
  %v1958 = vadd.f32 %v1474, %v1957
  %v1959 = vpop.f32.mrf.mxu0
  %v1960 = vadd.f32 %v1476, %v1959
  %1961 = vmatmul.bf16.gmra.mxu0 %v1587
  %v1962 = vpop.f32.mrf.mxu0
  %v1963 = vadd.f32 %v1479, %v1962
  %v1964 = vpop.f32.mrf.mxu0
  %v1965 = vadd.f32 %v1481, %v1964
  %1966 = vdwg.mxu0
  %1967 = vmatpush.bf16.msra.mxu0 %v1841
  %1968 = vmatpush.bf16.msra.mxu0 %v1833
  %1969 = vmatpush.bf16.msra.mxu0 %v1825
  %1970 = vmatpush.bf16.msra.mxu0 %v1817
  %1971 = vmatpush.bf16.msra.mxu0 %v1809
  %1972 = vmatpush.bf16.msra.mxu0 %v1801
  %1973 = vmatpush.bf16.msra.mxu0 %v1793
  %1974 = vmatpush.bf16.msra.mxu0 %v1785
  %1975 = vmatmul.bf16.gmra.mxu0 %v1586
  %v1976 = vpop.f32.mrf.mxu0
  %v1977 = vadd.f32 %v1493, %v1976
  %v1978 = vpop.f32.mrf.mxu0
  %v1979 = vadd.f32 %v1495, %v1978
  %1980 = vmatmul.bf16.gmra.mxu0 %v1587
  %v1981 = vpop.f32.mrf.mxu0
  %v1982 = vadd.f32 %v1498, %v1981
  %v1983 = vpop.f32.mrf.mxu0
  %v1984 = vadd.f32 %v1500, %v1983
  %1985 = vdwg.mxu0
  %1986 = vmatpush.bf16.msra.mxu0 %v1842
  %1987 = vmatpush.bf16.msra.mxu0 %v1834
  %1988 = vmatpush.bf16.msra.mxu0 %v1826
  %1989 = vmatpush.bf16.msra.mxu0 %v1818
  %1990 = vmatpush.bf16.msra.mxu0 %v1810
  %1991 = vmatpush.bf16.msra.mxu0 %v1802
  %1992 = vmatpush.bf16.msra.mxu0 %v1794
  %1993 = vmatpush.bf16.msra.mxu0 %v1786
  %1994 = vmatmul.bf16.gmra.mxu0 %v1586
  %v1995 = vpop.f32.mrf.mxu0
  %v1996 = vadd.f32 %v1512, %v1995
  %v1997 = vpop.f32.mrf.mxu0
  %v1998 = vadd.f32 %v1514, %v1997
  %1999 = vmatmul.bf16.gmra.mxu0 %v1587
  %v2000 = vpop.f32.mrf.mxu0
  %v2001 = vadd.f32 %v1517, %v2000
  %v2002 = vpop.f32.mrf.mxu0
  %v2003 = vadd.f32 %v1519, %v2002
  %2004 = vdwg.mxu0
  %2005 = vmatpush.bf16.msra.mxu0 %v1843
  %2006 = vmatpush.bf16.msra.mxu0 %v1835
  %2007 = vmatpush.bf16.msra.mxu0 %v1827
  %2008 = vmatpush.bf16.msra.mxu0 %v1819
  %2009 = vmatpush.bf16.msra.mxu0 %v1811
  %2010 = vmatpush.bf16.msra.mxu0 %v1803
  %2011 = vmatpush.bf16.msra.mxu0 %v1795
  %2012 = vmatpush.bf16.msra.mxu0 %v1787
  %2013 = vmatmul.bf16.gmra.mxu0 %v1586
  %v2014 = vpop.f32.mrf.mxu0
  %v2015 = vadd.f32 %v1531, %v2014
  %v2016 = vpop.f32.mrf.mxu0
  %v2017 = vadd.f32 %v1533, %v2016
  %2018 = vmatmul.bf16.gmra.mxu0 %v1587
  %v2019 = vpop.f32.mrf.mxu0
  %v2020 = vadd.f32 %v1536, %v2019
  %v2021 = vpop.f32.mrf.mxu0
  %v2022 = vadd.f32 %v1538, %v2021
  %2023 = vdwg.mxu0
  %2024 = vmatpush.bf16.msra.mxu0 %v1844
  %2025 = vmatpush.bf16.msra.mxu0 %v1836
  %2026 = vmatpush.bf16.msra.mxu0 %v1828
  %2027 = vmatpush.bf16.msra.mxu0 %v1820
  %2028 = vmatpush.bf16.msra.mxu0 %v1812
  %2029 = vmatpush.bf16.msra.mxu0 %v1804
  %2030 = vmatpush.bf16.msra.mxu0 %v1796
  %2031 = vmatpush.bf16.msra.mxu0 %v1788
  %2032 = vmatmul.bf16.gmra.mxu0 %v1586
  %v2033 = vpop.f32.mrf.mxu0
  %v2034 = vadd.f32 %v1550, %v2033
  %v2035 = vpop.f32.mrf.mxu0
  %v2036 = vadd.f32 %v1552, %v2035
  %2037 = vmatmul.bf16.gmra.mxu0 %v1587
  %v2038 = vpop.f32.mrf.mxu0
  %v2039 = vadd.f32 %v1555, %v2038
  %v2040 = vpop.f32.mrf.mxu0
  %v2041 = vadd.f32 %v1557, %v2040
  %2042 = vdwg.mxu0
  %2043 = vmatpush.bf16.msra.mxu0 %v1845
  %2044 = vmatpush.bf16.msra.mxu0 %v1837
  %2045 = vmatpush.bf16.msra.mxu0 %v1829
  %2046 = vmatpush.bf16.msra.mxu0 %v1821
  %2047 = vmatpush.bf16.msra.mxu0 %v1813
  %2048 = vmatpush.bf16.msra.mxu0 %v1805
  %2049 = vmatpush.bf16.msra.mxu0 %v1797
  %2050 = vmatpush.bf16.msra.mxu0 %v1789
  %2051 = vmatmul.bf16.gmra.mxu0 %v1586
  %v2052 = vpop.f32.mrf.mxu0
  %v2053 = vadd.f32 %v1569, %v2052
  %v2054 = vpop.f32.mrf.mxu0
  %v2055 = vadd.f32 %v1571, %v2054
  %2056 = vmatmul.bf16.gmra.mxu0 %v1587
  %v2057 = vpop.f32.mrf.mxu0
  %v2058 = vadd.f32 %v1574, %v2057
  %v2059 = vpop.f32.mrf.mxu0
  %v2060 = vadd.f32 %v1576, %v2059
  %2061 = vdwg.mxu0
  %v2062 = vld [vmem:[%s11] sm:$0xff]
  %v2064 = vperm.slane %v2062, 0
  %v2065 = vperm.slane %v2062, 1
  %v2066 = vperm.slane %v2062, 2
  %v2067 = vperm.slane %v2062, 3
  %v2068 = vperm.slane %v2062, 4
  %v2069 = vperm.slane %v2062, 5
  %v2070 = vperm.slane %v2062, 6
  %v2071 = vperm.slane %v2062, 7
  %v2080 = vadd.f32 %v1920, %v2064
  %v2081 = vadd.f32 %v1939, %v2065
  %v2082 = vadd.f32 %v1958, %v2066
  %v2083 = vadd.f32 %v1977, %v2067
  %v2084 = vadd.f32 %v1996, %v2068
  %v2085 = vadd.f32 %v2015, %v2069
  %v2086 = vadd.f32 %v2034, %v2070
  %v2087 = vadd.f32 %v2053, %v2071
  %v2088 = vadd.f32 %v1922, %v2064
  %v2089 = vadd.f32 %v1941, %v2065
  %v2090 = vadd.f32 %v1960, %v2066
  %v2091 = vadd.f32 %v1979, %v2067
  %v2092 = vadd.f32 %v1998, %v2068
  %v2093 = vadd.f32 %v2017, %v2069
  %v2094 = vadd.f32 %v2036, %v2070
  %v2095 = vadd.f32 %v2055, %v2071
  %v2096 = vadd.f32 %v1925, %v2064
  %v2097 = vadd.f32 %v1944, %v2065
  %v2098 = vadd.f32 %v1963, %v2066
  %v2099 = vadd.f32 %v1982, %v2067
  %v2100 = vadd.f32 %v2001, %v2068
  %v2101 = vadd.f32 %v2020, %v2069
  %v2102 = vadd.f32 %v2039, %v2070
  %v2103 = vadd.f32 %v2058, %v2071
  %v2104 = vadd.f32 %v1927, %v2064
  %v2105 = vadd.f32 %v1946, %v2065
  %v2106 = vadd.f32 %v1965, %v2066
  %v2107 = vadd.f32 %v1984, %v2067
  %v2108 = vadd.f32 %v2003, %v2068
  %v2109 = vadd.f32 %v2022, %v2069
  %v2110 = vadd.f32 %v2041, %v2070
  %v2111 = vadd.f32 %v2060, %v2071
  %v2112 = vpack.c.bf16 %v2088, %v2080
  %v2113 = vpack.c.bf16 %v2089, %v2081
  %v2114 = vpack.c.bf16 %v2090, %v2082
  %v2115 = vpack.c.bf16 %v2091, %v2083
  %v2116 = vpack.c.bf16 %v2092, %v2084
  %v2117 = vpack.c.bf16 %v2093, %v2085
  %v2118 = vpack.c.bf16 %v2094, %v2086
  %v2119 = vpack.c.bf16 %v2095, %v2087
  %v2120 = vpack.c.bf16 %v2104, %v2096
  %v2121 = vpack.c.bf16 %v2105, %v2097
  %v2122 = vpack.c.bf16 %v2106, %v2098
  %v2123 = vpack.c.bf16 %v2107, %v2099
  %v2124 = vpack.c.bf16 %v2108, %v2100
  %v2125 = vpack.c.bf16 %v2109, %v2101
  %v2126 = vpack.c.bf16 %v2110, %v2102
  %v2127 = vpack.c.bf16 %v2111, %v2103
  %v2128 = vld [vmem:[%s12] sm:$0xf]
  %v2129 = vld [vmem:[%s12 + $0x4] sm:$0xf]
  %v2130 = vld [vmem:[%s12 + $0x8] sm:$0xf]
  %v2131 = vld [vmem:[%s12 + $0xc] sm:$0xf]
  %v2132 = vld [vmem:[%s12 + $0x10] sm:$0xf]
  %v2133 = vld [vmem:[%s12 + $0x14] sm:$0xf]
  %v2134 = vld [vmem:[%s12 + $0x18] sm:$0xf]
  %v2135 = vld [vmem:[%s12 + $0x1c] sm:$0xf]
  %v2136 = vld [vmem:[%s12 + $0x20] sm:$0xf]
  %v2137 = vld [vmem:[%s12 + $0x24] sm:$0xf]
  %v2138 = vld [vmem:[%s12 + $0x28] sm:$0xf]
  %v2139 = vld [vmem:[%s12 + $0x2c] sm:$0xf]
  %v2140 = vld [vmem:[%s12 + $0x30] sm:$0xf]
  %v2141 = vld [vmem:[%s12 + $0x34] sm:$0xf]
  %v2142 = vld [vmem:[%s12 + $0x38] sm:$0xf]
  %v2143 = vld [vmem:[%s12 + $0x3c] sm:$0xf]
  %v2144 = vld [vmem:[%s12 + $0x40] sm:$0xf]
  %v2145 = vld [vmem:[%s12 + $0x44] sm:$0xf]
  %v2146 = vld [vmem:[%s12 + $0x48] sm:$0xf]
  %v2147 = vld [vmem:[%s12 + $0x4c] sm:$0xf]
  %v2148 = vld [vmem:[%s12 + $0x50] sm:$0xf]
  %v2149 = vld [vmem:[%s12 + $0x54] sm:$0xf]
  %v2150 = vld [vmem:[%s12 + $0x58] sm:$0xf]
  %v2151 = vld [vmem:[%s12 + $0x5c] sm:$0xf]
  %v2152 = vld [vmem:[%s12 + $0x60] sm:$0xf]
  %v2153 = vld [vmem:[%s12 + $0x64] sm:$0xf]
  %v2154 = vld [vmem:[%s12 + $0x68] sm:$0xf]
  %v2155 = vld [vmem:[%s12 + $0x6c] sm:$0xf]
  %v2156 = vld [vmem:[%s12 + $0x70] sm:$0xf]
  %v2157 = vld [vmem:[%s12 + $0x74] sm:$0xf]
  %v2158 = vld [vmem:[%s12 + $0x78] sm:$0xf]
  %v2159 = vld [vmem:[%s12 + $0x7c] sm:$0xf]
  %v2160 = vld [vmem:[%s12 + $0x80] sm:$0xf]
  %v2161 = vld [vmem:[%s12 + $0x84] sm:$0xf]
  %v2162 = vld [vmem:[%s12 + $0x88] sm:$0xf]
  %v2163 = vld [vmem:[%s12 + $0x8c] sm:$0xf]
  %v2164 = vld [vmem:[%s12 + $0x90] sm:$0xf]
  %v2165 = vld [vmem:[%s12 + $0x94] sm:$0xf]
  %v2166 = vld [vmem:[%s12 + $0x98] sm:$0xf]
  %v2167 = vld [vmem:[%s12 + $0x9c] sm:$0xf]
  %v2168 = vld [vmem:[%s12 + $0xa0] sm:$0xf]
  %v2169 = vld [vmem:[%s12 + $0xa4] sm:$0xf]
  %v2170 = vld [vmem:[%s12 + $0xa8] sm:$0xf]
  %v2171 = vld [vmem:[%s12 + $0xac] sm:$0xf]
  %v2172 = vld [vmem:[%s12 + $0xb0] sm:$0xf]
  %v2173 = vld [vmem:[%s12 + $0xb4] sm:$0xf]
  %v2174 = vld [vmem:[%s12 + $0xb8] sm:$0xf]
  %v2175 = vld [vmem:[%s12 + $0xbc] sm:$0xf]
  %v2176 = vld [vmem:[%s12 + $0xc0] sm:$0xf]
  %v2177 = vld [vmem:[%s12 + $0xc4] sm:$0xf]
  %v2178 = vld [vmem:[%s12 + $0xc8] sm:$0xf]
  %v2179 = vld [vmem:[%s12 + $0xcc] sm:$0xf]
  %v2180 = vld [vmem:[%s12 + $0xd0] sm:$0xf]
  %v2181 = vld [vmem:[%s12 + $0xd4] sm:$0xf]
  %v2182 = vld [vmem:[%s12 + $0xd8] sm:$0xf]
  %v2183 = vld [vmem:[%s12 + $0xdc] sm:$0xf]
  %v2184 = vld [vmem:[%s12 + $0xe0] sm:$0xf]
  %v2185 = vld [vmem:[%s12 + $0xe4] sm:$0xf]
  %v2186 = vld [vmem:[%s12 + $0xe8] sm:$0xf]
  %v2187 = vld [vmem:[%s12 + $0xec] sm:$0xf]
  %v2188 = vld [vmem:[%s12 + $0xf0] sm:$0xf]
  %v2189 = vld [vmem:[%s12 + $0xf4] sm:$0xf]
  %v2190 = vld [vmem:[%s12 + $0xf8] sm:$0xf]
  %v2191 = vld [vmem:[%s12 + $0xfc] sm:$0xf]
  %v2192 = vld [vmem:[%s12 + $0x100] sm:$0xf]
  %v2193 = vld [vmem:[%s12 + $0x104] sm:$0xf]
  %v2194 = vld [vmem:[%s12 + $0x108] sm:$0xf]
  %v2195 = vld [vmem:[%s12 + $0x10c] sm:$0xf]
  %v2196 = vld [vmem:[%s12 + $0x110] sm:$0xf]
  %v2197 = vld [vmem:[%s12 + $0x114] sm:$0xf]
  %v2198 = vld [vmem:[%s12 + $0x118] sm:$0xf]
  %v2199 = vld [vmem:[%s12 + $0x11c] sm:$0xf]
  %v2200 = vld [vmem:[%s12 + $0x120] sm:$0xf]
  %v2201 = vld [vmem:[%s12 + $0x124] sm:$0xf]
  %v2202 = vld [vmem:[%s12 + $0x128] sm:$0xf]
  %v2203 = vld [vmem:[%s12 + $0x12c] sm:$0xf]
  %v2204 = vld [vmem:[%s12 + $0x130] sm:$0xf]
  %v2205 = vld [vmem:[%s12 + $0x134] sm:$0xf]
  %v2206 = vld [vmem:[%s12 + $0x138] sm:$0xf]
  %v2207 = vld [vmem:[%s12 + $0x13c] sm:$0xf]
  %v2208 = vld [vmem:[%s12 + $0x140] sm:$0xf]
  %v2209 = vld [vmem:[%s12 + $0x144] sm:$0xf]
  %v2210 = vld [vmem:[%s12 + $0x148] sm:$0xf]
  %v2211 = vld [vmem:[%s12 + $0x14c] sm:$0xf]
  %v2212 = vld [vmem:[%s12 + $0x150] sm:$0xf]
  %v2213 = vld [vmem:[%s12 + $0x154] sm:$0xf]
  %v2214 = vld [vmem:[%s12 + $0x158] sm:$0xf]
  %v2215 = vld [vmem:[%s12 + $0x15c] sm:$0xf]
  %v2216 = vld [vmem:[%s12 + $0x160] sm:$0xf]
  %v2217 = vld [vmem:[%s12 + $0x164] sm:$0xf]
  %v2218 = vld [vmem:[%s12 + $0x168] sm:$0xf]
  %v2219 = vld [vmem:[%s12 + $0x16c] sm:$0xf]
  %v2220 = vld [vmem:[%s12 + $0x170] sm:$0xf]
  %v2221 = vld [vmem:[%s12 + $0x174] sm:$0xf]
  %v2222 = vld [vmem:[%s12 + $0x178] sm:$0xf]
  %v2223 = vld [vmem:[%s12 + $0x17c] sm:$0xf]
  %v2224 = vld [vmem:[%s12 + $0x180] sm:$0xf]
  %v2225 = vld [vmem:[%s12 + $0x184] sm:$0xf]
  %v2226 = vld [vmem:[%s12 + $0x188] sm:$0xf]
  %v2227 = vld [vmem:[%s12 + $0x18c] sm:$0xf]
  %v2228 = vld [vmem:[%s12 + $0x190] sm:$0xf]
  %v2229 = vld [vmem:[%s12 + $0x194] sm:$0xf]
  %v2230 = vld [vmem:[%s12 + $0x198] sm:$0xf]
  %v2231 = vld [vmem:[%s12 + $0x19c] sm:$0xf]
  %v2232 = vld [vmem:[%s12 + $0x1a0] sm:$0xf]
  %v2233 = vld [vmem:[%s12 + $0x1a4] sm:$0xf]
  %v2234 = vld [vmem:[%s12 + $0x1a8] sm:$0xf]
  %v2235 = vld [vmem:[%s12 + $0x1ac] sm:$0xf]
  %v2236 = vld [vmem:[%s12 + $0x1b0] sm:$0xf]
  %v2237 = vld [vmem:[%s12 + $0x1b4] sm:$0xf]
  %v2238 = vld [vmem:[%s12 + $0x1b8] sm:$0xf]
  %v2239 = vld [vmem:[%s12 + $0x1bc] sm:$0xf]
  %v2240 = vld [vmem:[%s12 + $0x1c0] sm:$0xf]
  %v2241 = vld [vmem:[%s12 + $0x1c4] sm:$0xf]
  %v2242 = vld [vmem:[%s12 + $0x1c8] sm:$0xf]
  %v2243 = vld [vmem:[%s12 + $0x1cc] sm:$0xf]
  %v2244 = vld [vmem:[%s12 + $0x1d0] sm:$0xf]
  %v2245 = vld [vmem:[%s12 + $0x1d4] sm:$0xf]
  %v2246 = vld [vmem:[%s12 + $0x1d8] sm:$0xf]
  %v2247 = vld [vmem:[%s12 + $0x1dc] sm:$0xf]
  %v2248 = vld [vmem:[%s12 + $0x1e0] sm:$0xf]
  %v2249 = vld [vmem:[%s12 + $0x1e4] sm:$0xf]
  %v2250 = vld [vmem:[%s12 + $0x1e8] sm:$0xf]
  %v2251 = vld [vmem:[%s12 + $0x1ec] sm:$0xf]
  %v2252 = vld [vmem:[%s12 + $0x1f0] sm:$0xf]
  %v2253 = vld [vmem:[%s12 + $0x1f4] sm:$0xf]
  %v2254 = vld [vmem:[%s12 + $0x1f8] sm:$0xf]
  %v2255 = vld [vmem:[%s12 + $0x1fc] sm:$0xf]
  %v2384 = vunpack.c.l.b16 %v2128
  %v2385 = vunpack.c.l.b16 %v2129
  %v2386 = vunpack.c.l.b16 %v2130
  %v2387 = vunpack.c.l.b16 %v2131
  %v2388 = vunpack.c.l.b16 %v2132
  %v2389 = vunpack.c.l.b16 %v2133
  %v2390 = vunpack.c.l.b16 %v2134
  %v2391 = vunpack.c.l.b16 %v2135
  %v2392 = vunpack.c.l.b16 %v2136
  %v2393 = vunpack.c.l.b16 %v2137
  %v2394 = vunpack.c.l.b16 %v2138
  %v2395 = vunpack.c.l.b16 %v2139
  %v2396 = vunpack.c.l.b16 %v2140
  %v2397 = vunpack.c.l.b16 %v2141
  %v2398 = vunpack.c.l.b16 %v2142
  %v2399 = vunpack.c.l.b16 %v2143
  %v2400 = vunpack.c.l.b16 %v2144
  %v2401 = vunpack.c.l.b16 %v2145
  %v2402 = vunpack.c.l.b16 %v2146
  %v2403 = vunpack.c.l.b16 %v2147
  %v2404 = vunpack.c.l.b16 %v2148
  %v2405 = vunpack.c.l.b16 %v2149
  %v2406 = vunpack.c.l.b16 %v2150
  %v2407 = vunpack.c.l.b16 %v2151
  %v2408 = vunpack.c.l.b16 %v2152
  %v2409 = vunpack.c.l.b16 %v2153
  %v2410 = vunpack.c.l.b16 %v2154
  %v2411 = vunpack.c.l.b16 %v2155
  %v2412 = vunpack.c.l.b16 %v2156
  %v2413 = vunpack.c.l.b16 %v2157
  %v2414 = vunpack.c.l.b16 %v2158
  %v2415 = vunpack.c.l.b16 %v2159
  %v2416 = vunpack.c.l.b16 %v2160
  %v2417 = vunpack.c.l.b16 %v2161
  %v2418 = vunpack.c.l.b16 %v2162
  %v2419 = vunpack.c.l.b16 %v2163
  %v2420 = vunpack.c.l.b16 %v2164
  %v2421 = vunpack.c.l.b16 %v2165
  %v2422 = vunpack.c.l.b16 %v2166
  %v2423 = vunpack.c.l.b16 %v2167
  %v2424 = vunpack.c.l.b16 %v2168
  %v2425 = vunpack.c.l.b16 %v2169
  %v2426 = vunpack.c.l.b16 %v2170
  %v2427 = vunpack.c.l.b16 %v2171
  %v2428 = vunpack.c.l.b16 %v2172
  %v2429 = vunpack.c.l.b16 %v2173
  %v2430 = vunpack.c.l.b16 %v2174
  %v2431 = vunpack.c.l.b16 %v2175
  %v2432 = vunpack.c.l.b16 %v2176
  %v2433 = vunpack.c.l.b16 %v2177
  %v2434 = vunpack.c.l.b16 %v2178
  %v2435 = vunpack.c.l.b16 %v2179
  %v2436 = vunpack.c.l.b16 %v2180
  %v2437 = vunpack.c.l.b16 %v2181
  %v2438 = vunpack.c.l.b16 %v2182
  %v2439 = vunpack.c.l.b16 %v2183
  %v2440 = vunpack.c.l.b16 %v2184
  %v2441 = vunpack.c.l.b16 %v2185
  %v2442 = vunpack.c.l.b16 %v2186
  %v2443 = vunpack.c.l.b16 %v2187
  %v2444 = vunpack.c.l.b16 %v2188
  %v2445 = vunpack.c.l.b16 %v2189
  %v2446 = vunpack.c.l.b16 %v2190
  %v2447 = vunpack.c.l.b16 %v2191
  %v2448 = vunpack.c.l.b16 %v2192
  %v2449 = vunpack.c.l.b16 %v2193
  %v2450 = vunpack.c.l.b16 %v2194
  %v2451 = vunpack.c.l.b16 %v2195
  %v2452 = vunpack.c.l.b16 %v2196
  %v2453 = vunpack.c.l.b16 %v2197
  %v2454 = vunpack.c.l.b16 %v2198
  %v2455 = vunpack.c.l.b16 %v2199
  %v2456 = vunpack.c.l.b16 %v2200
  %v2457 = vunpack.c.l.b16 %v2201
  %v2458 = vunpack.c.l.b16 %v2202
  %v2459 = vunpack.c.l.b16 %v2203
  %v2460 = vunpack.c.l.b16 %v2204
  %v2461 = vunpack.c.l.b16 %v2205
  %v2462 = vunpack.c.l.b16 %v2206
  %v2463 = vunpack.c.l.b16 %v2207
  %v2464 = vunpack.c.l.b16 %v2208
  %v2465 = vunpack.c.l.b16 %v2209
  %v2466 = vunpack.c.l.b16 %v2210
  %v2467 = vunpack.c.l.b16 %v2211
  %v2468 = vunpack.c.l.b16 %v2212
  %v2469 = vunpack.c.l.b16 %v2213
  %v2470 = vunpack.c.l.b16 %v2214
  %v2471 = vunpack.c.l.b16 %v2215
  %v2472 = vunpack.c.l.b16 %v2216
  %v2473 = vunpack.c.l.b16 %v2217
  %v2474 = vunpack.c.l.b16 %v2218
  %v2475 = vunpack.c.l.b16 %v2219
  %v2476 = vunpack.c.l.b16 %v2220
  %v2477 = vunpack.c.l.b16 %v2221
  %v2478 = vunpack.c.l.b16 %v2222
  %v2479 = vunpack.c.l.b16 %v2223
  %v2480 = vunpack.c.l.b16 %v2224
  %v2481 = vunpack.c.l.b16 %v2225
  %v2482 = vunpack.c.l.b16 %v2226
  %v2483 = vunpack.c.l.b16 %v2227
  %v2484 = vunpack.c.l.b16 %v2228
  %v2485 = vunpack.c.l.b16 %v2229
  %v2486 = vunpack.c.l.b16 %v2230
  %v2487 = vunpack.c.l.b16 %v2231
  %v2488 = vunpack.c.l.b16 %v2232
  %v2489 = vunpack.c.l.b16 %v2233
  %v2490 = vunpack.c.l.b16 %v2234
  %v2491 = vunpack.c.l.b16 %v2235
  %v2492 = vunpack.c.l.b16 %v2236
  %v2493 = vunpack.c.l.b16 %v2237
  %v2494 = vunpack.c.l.b16 %v2238
  %v2495 = vunpack.c.l.b16 %v2239
  %v2496 = vunpack.c.l.b16 %v2240
  %v2497 = vunpack.c.l.b16 %v2241
  %v2498 = vunpack.c.l.b16 %v2242
  %v2499 = vunpack.c.l.b16 %v2243
  %v2500 = vunpack.c.l.b16 %v2244
  %v2501 = vunpack.c.l.b16 %v2245
  %v2502 = vunpack.c.l.b16 %v2246
  %v2503 = vunpack.c.l.b16 %v2247
  %v2504 = vunpack.c.l.b16 %v2248
  %v2505 = vunpack.c.l.b16 %v2249
  %v2506 = vunpack.c.l.b16 %v2250
  %v2507 = vunpack.c.l.b16 %v2251
  %v2508 = vunpack.c.l.b16 %v2252
  %v2509 = vunpack.c.l.b16 %v2253
  %v2510 = vunpack.c.l.b16 %v2254
  %v2511 = vunpack.c.l.b16 %v2255
  %v2512 = vpack.c.b16 %v2385, %v2384
  %v2513 = vpack.c.b16 %v2387, %v2386
  %v2514 = vpack.c.b16 %v2389, %v2388
  %v2515 = vpack.c.b16 %v2391, %v2390
  %v2516 = vpack.c.b16 %v2393, %v2392
  %v2517 = vpack.c.b16 %v2395, %v2394
  %v2518 = vpack.c.b16 %v2397, %v2396
  %v2519 = vpack.c.b16 %v2399, %v2398
  %v2520 = vpack.c.b16 %v2401, %v2400
  %v2521 = vpack.c.b16 %v2403, %v2402
  %v2522 = vpack.c.b16 %v2405, %v2404
  %v2523 = vpack.c.b16 %v2407, %v2406
  %v2524 = vpack.c.b16 %v2409, %v2408
  %v2525 = vpack.c.b16 %v2411, %v2410
  %v2526 = vpack.c.b16 %v2413, %v2412
  %v2527 = vpack.c.b16 %v2415, %v2414
  %v2528 = vpack.c.b16 %v2417, %v2416
  %v2529 = vpack.c.b16 %v2419, %v2418
  %v2530 = vpack.c.b16 %v2421, %v2420
  %v2531 = vpack.c.b16 %v2423, %v2422
  %v2532 = vpack.c.b16 %v2425, %v2424
  %v2533 = vpack.c.b16 %v2427, %v2426
  %v2534 = vpack.c.b16 %v2429, %v2428
  %v2535 = vpack.c.b16 %v2431, %v2430
  %v2536 = vpack.c.b16 %v2433, %v2432
  %v2537 = vpack.c.b16 %v2435, %v2434
  %v2538 = vpack.c.b16 %v2437, %v2436
  %v2539 = vpack.c.b16 %v2439, %v2438
  %v2540 = vpack.c.b16 %v2441, %v2440
  %v2541 = vpack.c.b16 %v2443, %v2442
  %v2542 = vpack.c.b16 %v2445, %v2444
  %v2543 = vpack.c.b16 %v2447, %v2446
  %v2544 = vpack.c.b16 %v2449, %v2448
  %v2545 = vpack.c.b16 %v2451, %v2450
  %v2546 = vpack.c.b16 %v2453, %v2452
  %v2547 = vpack.c.b16 %v2455, %v2454
  %v2548 = vpack.c.b16 %v2457, %v2456
  %v2549 = vpack.c.b16 %v2459, %v2458
  %v2550 = vpack.c.b16 %v2461, %v2460
  %v2551 = vpack.c.b16 %v2463, %v2462
  %v2552 = vpack.c.b16 %v2465, %v2464
  %v2553 = vpack.c.b16 %v2467, %v2466
  %v2554 = vpack.c.b16 %v2469, %v2468
  %v2555 = vpack.c.b16 %v2471, %v2470
  %v2556 = vpack.c.b16 %v2473, %v2472
  %v2557 = vpack.c.b16 %v2475, %v2474
  %v2558 = vpack.c.b16 %v2477, %v2476
  %v2559 = vpack.c.b16 %v2479, %v2478
  %v2560 = vpack.c.b16 %v2481, %v2480
  %v2561 = vpack.c.b16 %v2483, %v2482
  %v2562 = vpack.c.b16 %v2485, %v2484
  %v2563 = vpack.c.b16 %v2487, %v2486
  %v2564 = vpack.c.b16 %v2489, %v2488
  %v2565 = vpack.c.b16 %v2491, %v2490
  %v2566 = vpack.c.b16 %v2493, %v2492
  %v2567 = vpack.c.b16 %v2495, %v2494
  %v2568 = vpack.c.b16 %v2497, %v2496
  %v2569 = vpack.c.b16 %v2499, %v2498
  %v2570 = vpack.c.b16 %v2501, %v2500
  %v2571 = vpack.c.b16 %v2503, %v2502
  %v2572 = vpack.c.b16 %v2505, %v2504
  %v2573 = vpack.c.b16 %v2507, %v2506
  %v2574 = vpack.c.b16 %v2509, %v2508
  %v2575 = vpack.c.b16 %v2511, %v2510
  %2640 = vmatpush.bf16.msra.mxu0 %v2519
  %2641 = vmatpush.bf16.msra.mxu0 %v2518
  %2642 = vmatpush.bf16.msra.mxu0 %v2517
  %2643 = vmatpush.bf16.msra.mxu0 %v2516
  %2644 = vmatpush.bf16.msra.mxu0 %v2515
  %2645 = vmatpush.bf16.msra.mxu0 %v2514
  %2646 = vmatpush.bf16.msra.mxu0 %v2513
  %2647 = vmatpush.bf16.msra.mxu0 %v2512
  %2648 = vmatmul.bf16.gmra.mxu0 %v2112
  %v2649 = vpop.f32.mrf.mxu0
  %v2650 = vadd.f32 %v1287, %v2649
  %v2651 = vpop.f32.mrf.mxu0
  %v2652 = vadd.f32 %v1289, %v2651
  %2653 = vmatmul.bf16.gmra.mxu0 %v2120
  %v2654 = vpop.f32.mrf.mxu0
  %v2655 = vadd.f32 %v1292, %v2654
  %v2656 = vpop.f32.mrf.mxu0
  %v2657 = vadd.f32 %v1294, %v2656
  %2658 = vdwg.mxu0
  %2659 = vmatpush.bf16.msra.mxu0 %v2527
  %2660 = vmatpush.bf16.msra.mxu0 %v2526
  %2661 = vmatpush.bf16.msra.mxu0 %v2525
  %2662 = vmatpush.bf16.msra.mxu0 %v2524
  %2663 = vmatpush.bf16.msra.mxu0 %v2523
  %2664 = vmatpush.bf16.msra.mxu0 %v2522
  %2665 = vmatpush.bf16.msra.mxu0 %v2521
  %2666 = vmatpush.bf16.msra.mxu0 %v2520
  %2667 = vmatmul.bf16.gmra.mxu0 %v2113
  %v2668 = vpop.f32.mrf.mxu0
  %v2669 = vadd.f32 %v2650, %v2668
  %v2670 = vpop.f32.mrf.mxu0
  %v2671 = vadd.f32 %v2652, %v2670
  %2672 = vmatmul.bf16.gmra.mxu0 %v2121
  %v2673 = vpop.f32.mrf.mxu0
  %v2674 = vadd.f32 %v2655, %v2673
  %v2675 = vpop.f32.mrf.mxu0
  %v2676 = vadd.f32 %v2657, %v2675
  %2677 = vdwg.mxu0
  %2678 = vmatpush.bf16.msra.mxu0 %v2535
  %2679 = vmatpush.bf16.msra.mxu0 %v2534
  %2680 = vmatpush.bf16.msra.mxu0 %v2533
  %2681 = vmatpush.bf16.msra.mxu0 %v2532
  %2682 = vmatpush.bf16.msra.mxu0 %v2531
  %2683 = vmatpush.bf16.msra.mxu0 %v2530
  %2684 = vmatpush.bf16.msra.mxu0 %v2529
  %2685 = vmatpush.bf16.msra.mxu0 %v2528
  %2686 = vmatmul.bf16.gmra.mxu0 %v2114
  %v2687 = vpop.f32.mrf.mxu0
  %v2688 = vadd.f32 %v2669, %v2687
  %v2689 = vpop.f32.mrf.mxu0
  %v2690 = vadd.f32 %v2671, %v2689
  %2691 = vmatmul.bf16.gmra.mxu0 %v2122
  %v2692 = vpop.f32.mrf.mxu0
  %v2693 = vadd.f32 %v2674, %v2692
  %v2694 = vpop.f32.mrf.mxu0
  %v2695 = vadd.f32 %v2676, %v2694
  %2696 = vdwg.mxu0
  %2697 = vmatpush.bf16.msra.mxu0 %v2543
  %2698 = vmatpush.bf16.msra.mxu0 %v2542
  %2699 = vmatpush.bf16.msra.mxu0 %v2541
  %2700 = vmatpush.bf16.msra.mxu0 %v2540
  %2701 = vmatpush.bf16.msra.mxu0 %v2539
  %2702 = vmatpush.bf16.msra.mxu0 %v2538
  %2703 = vmatpush.bf16.msra.mxu0 %v2537
  %2704 = vmatpush.bf16.msra.mxu0 %v2536
  %2705 = vmatmul.bf16.gmra.mxu0 %v2115
  %v2706 = vpop.f32.mrf.mxu0
  %v2707 = vadd.f32 %v2688, %v2706
  %v2708 = vpop.f32.mrf.mxu0
  %v2709 = vadd.f32 %v2690, %v2708
  %2710 = vmatmul.bf16.gmra.mxu0 %v2123
  %v2711 = vpop.f32.mrf.mxu0
  %v2712 = vadd.f32 %v2693, %v2711
  %v2713 = vpop.f32.mrf.mxu0
  %v2714 = vadd.f32 %v2695, %v2713
  %2715 = vdwg.mxu0
  %2716 = vmatpush.bf16.msra.mxu0 %v2551
  %2717 = vmatpush.bf16.msra.mxu0 %v2550
  %2718 = vmatpush.bf16.msra.mxu0 %v2549
  %2719 = vmatpush.bf16.msra.mxu0 %v2548
  %2720 = vmatpush.bf16.msra.mxu0 %v2547
  %2721 = vmatpush.bf16.msra.mxu0 %v2546
  %2722 = vmatpush.bf16.msra.mxu0 %v2545
  %2723 = vmatpush.bf16.msra.mxu0 %v2544
  %2724 = vmatmul.bf16.gmra.mxu0 %v2116
  %v2725 = vpop.f32.mrf.mxu0
  %v2726 = vadd.f32 %v2707, %v2725
  %v2727 = vpop.f32.mrf.mxu0
  %v2728 = vadd.f32 %v2709, %v2727
  %2729 = vmatmul.bf16.gmra.mxu0 %v2124
  %v2730 = vpop.f32.mrf.mxu0
  %v2731 = vadd.f32 %v2712, %v2730
  %v2732 = vpop.f32.mrf.mxu0
  %v2733 = vadd.f32 %v2714, %v2732
  %2734 = vdwg.mxu0
  %2735 = vmatpush.bf16.msra.mxu0 %v2559
  %2736 = vmatpush.bf16.msra.mxu0 %v2558
  %2737 = vmatpush.bf16.msra.mxu0 %v2557
  %2738 = vmatpush.bf16.msra.mxu0 %v2556
  %2739 = vmatpush.bf16.msra.mxu0 %v2555
  %2740 = vmatpush.bf16.msra.mxu0 %v2554
  %2741 = vmatpush.bf16.msra.mxu0 %v2553
  %2742 = vmatpush.bf16.msra.mxu0 %v2552
  %2743 = vmatmul.bf16.gmra.mxu0 %v2117
  %v2744 = vpop.f32.mrf.mxu0
  %v2745 = vadd.f32 %v2726, %v2744
  %v2746 = vpop.f32.mrf.mxu0
  %v2747 = vadd.f32 %v2728, %v2746
  %2748 = vmatmul.bf16.gmra.mxu0 %v2125
  %v2749 = vpop.f32.mrf.mxu0
  %v2750 = vadd.f32 %v2731, %v2749
  %v2751 = vpop.f32.mrf.mxu0
  %v2752 = vadd.f32 %v2733, %v2751
  %2753 = vdwg.mxu0
  %2754 = vmatpush.bf16.msra.mxu0 %v2567
  %2755 = vmatpush.bf16.msra.mxu0 %v2566
  %2756 = vmatpush.bf16.msra.mxu0 %v2565
  %2757 = vmatpush.bf16.msra.mxu0 %v2564
  %2758 = vmatpush.bf16.msra.mxu0 %v2563
  %2759 = vmatpush.bf16.msra.mxu0 %v2562
  %2760 = vmatpush.bf16.msra.mxu0 %v2561
  %2761 = vmatpush.bf16.msra.mxu0 %v2560
  %2762 = vmatmul.bf16.gmra.mxu0 %v2118
  %v2763 = vpop.f32.mrf.mxu0
  %v2764 = vadd.f32 %v2745, %v2763
  %v2765 = vpop.f32.mrf.mxu0
  %v2766 = vadd.f32 %v2747, %v2765
  %2767 = vmatmul.bf16.gmra.mxu0 %v2126
  %v2768 = vpop.f32.mrf.mxu0
  %v2769 = vadd.f32 %v2750, %v2768
  %v2770 = vpop.f32.mrf.mxu0
  %v2771 = vadd.f32 %v2752, %v2770
  %2772 = vdwg.mxu0
  %2773 = vmatpush.bf16.msra.mxu0 %v2575
  %2774 = vmatpush.bf16.msra.mxu0 %v2574
  %2775 = vmatpush.bf16.msra.mxu0 %v2573
  %2776 = vmatpush.bf16.msra.mxu0 %v2572
  %2777 = vmatpush.bf16.msra.mxu0 %v2571
  %2778 = vmatpush.bf16.msra.mxu0 %v2570
  %2779 = vmatpush.bf16.msra.mxu0 %v2569
  %2780 = vmatpush.bf16.msra.mxu0 %v2568
  %2781 = vmatmul.bf16.gmra.mxu0 %v2119
  %v2782 = vpop.f32.mrf.mxu0
  %v2783 = vadd.f32 %v2764, %v2782
  %v2784 = vpop.f32.mrf.mxu0
  %v2785 = vadd.f32 %v2766, %v2784
  %2786 = vmatmul.bf16.gmra.mxu0 %v2127
  %v2787 = vpop.f32.mrf.mxu0
  %v2788 = vadd.f32 %v2769, %v2787
  %v2789 = vpop.f32.mrf.mxu0
  %v2790 = vadd.f32 %v2771, %v2789
  %2791 = vdwg.mxu0
  %v2792 = vld [vmem:[%s14] sm:$0x1]
  %v2794 = vperm.slane %v2792, 0
  %v2796 = vadd.f32 %v2783, %v2794
  %v2797 = vadd.f32 %v2785, %v2794
  %v2798 = vadd.f32 %v2788, %v2794
  %v2799 = vadd.f32 %v2790, %v2794
  %2800 = vrot.lane.b32.xlu0 %v1372, 120
  %v2801 = vpop.permute.xlu0 %2800
  %2802 = vrot.lane.b32.xlu0 %v1373, 120
  %v2803 = vpop.permute.xlu0 %2802
  %v2805 = vsel %vm1394, %v2801, 0
  %v2808 = vsel %vm1394, %v2803, 0
  %2810 = vmatpush.bf16.msra.mxu0 0
  %2811 = vmatpush.bf16.msra.mxu0 0
  %2812 = vmatpush.bf16.msra.mxu0 0
  %2813 = vmatpush.bf16.msra.mxu0 0
  %2814 = vmatpush.bf16.msra.mxu0 0
  %2815 = vmatpush.bf16.msra.mxu0 0
  %2816 = vmatpush.bf16.msra.mxu0 0
  %2817 = vmatpush.bf16.msra.mxu0 %v1403
  %2818 = vmatmul.bf16.gmra.mxu0 %v2805
  %v2819 = vpop.f32.mrf.mxu0
  %v2820 = vadd.f32 0.0, %v2819
  %v2821 = vpop.f32.mrf.mxu0
  %v2822 = vadd.f32 0.0, %v2821
  %2823 = vmatmul.bf16.gmra.mxu0 %v2808
  %v2824 = vpop.f32.mrf.mxu0
  %v2825 = vadd.f32 0.0, %v2824
  %v2826 = vpop.f32.mrf.mxu0
  %v2827 = vadd.f32 0.0, %v2826
  %2828 = vdwg.mxu0
  %2829 = vmatpush.bf16.msra.mxu0 0
  %2830 = vmatpush.bf16.msra.mxu0 0
  %2831 = vmatpush.bf16.msra.mxu0 0
  %2832 = vmatpush.bf16.msra.mxu0 0
  %2833 = vmatpush.bf16.msra.mxu0 0
  %2834 = vmatpush.bf16.msra.mxu0 0
  %2835 = vmatpush.bf16.msra.mxu0 0
  %2836 = vmatpush.bf16.msra.mxu0 %v1406
  %2837 = vmatmul.bf16.gmra.mxu0 %v2805
  %v2838 = vpop.f32.mrf.mxu0
  %v2839 = vadd.f32 0.0, %v2838
  %v2840 = vpop.f32.mrf.mxu0
  %v2841 = vadd.f32 0.0, %v2840
  %2842 = vmatmul.bf16.gmra.mxu0 %v2808
  %v2843 = vpop.f32.mrf.mxu0
  %v2844 = vadd.f32 0.0, %v2843
  %v2845 = vpop.f32.mrf.mxu0
  %v2846 = vadd.f32 0.0, %v2845
  %2847 = vdwg.mxu0
  %2848 = vmatpush.bf16.msra.mxu0 0
  %2849 = vmatpush.bf16.msra.mxu0 0
  %2850 = vmatpush.bf16.msra.mxu0 0
  %2851 = vmatpush.bf16.msra.mxu0 0
  %2852 = vmatpush.bf16.msra.mxu0 0
  %2853 = vmatpush.bf16.msra.mxu0 0
  %2854 = vmatpush.bf16.msra.mxu0 0
  %2855 = vmatpush.bf16.msra.mxu0 %v1409
  %2856 = vmatmul.bf16.gmra.mxu0 %v2805
  %v2857 = vpop.f32.mrf.mxu0
  %v2858 = vadd.f32 0.0, %v2857
  %v2859 = vpop.f32.mrf.mxu0
  %v2860 = vadd.f32 0.0, %v2859
  %2861 = vmatmul.bf16.gmra.mxu0 %v2808
  %v2862 = vpop.f32.mrf.mxu0
  %v2863 = vadd.f32 0.0, %v2862
  %v2864 = vpop.f32.mrf.mxu0
  %v2865 = vadd.f32 0.0, %v2864
  %2866 = vdwg.mxu0
  %2867 = vmatpush.bf16.msra.mxu0 0
  %2868 = vmatpush.bf16.msra.mxu0 0
  %2869 = vmatpush.bf16.msra.mxu0 0
  %2870 = vmatpush.bf16.msra.mxu0 0
  %2871 = vmatpush.bf16.msra.mxu0 0
  %2872 = vmatpush.bf16.msra.mxu0 0
  %2873 = vmatpush.bf16.msra.mxu0 0
  %2874 = vmatpush.bf16.msra.mxu0 %v1412
  %2875 = vmatmul.bf16.gmra.mxu0 %v2805
  %v2876 = vpop.f32.mrf.mxu0
  %v2877 = vadd.f32 0.0, %v2876
  %v2878 = vpop.f32.mrf.mxu0
  %v2879 = vadd.f32 0.0, %v2878
  %2880 = vmatmul.bf16.gmra.mxu0 %v2808
  %v2881 = vpop.f32.mrf.mxu0
  %v2882 = vadd.f32 0.0, %v2881
  %v2883 = vpop.f32.mrf.mxu0
  %v2884 = vadd.f32 0.0, %v2883
  %2885 = vdwg.mxu0
  %2886 = vmatpush.bf16.msra.mxu0 0
  %2887 = vmatpush.bf16.msra.mxu0 0
  %2888 = vmatpush.bf16.msra.mxu0 0
  %2889 = vmatpush.bf16.msra.mxu0 0
  %2890 = vmatpush.bf16.msra.mxu0 0
  %2891 = vmatpush.bf16.msra.mxu0 0
  %2892 = vmatpush.bf16.msra.mxu0 0
  %2893 = vmatpush.bf16.msra.mxu0 %v1415
  %2894 = vmatmul.bf16.gmra.mxu0 %v2805
  %v2895 = vpop.f32.mrf.mxu0
  %v2896 = vadd.f32 0.0, %v2895
  %v2897 = vpop.f32.mrf.mxu0
  %v2898 = vadd.f32 0.0, %v2897
  %2899 = vmatmul.bf16.gmra.mxu0 %v2808
  %v2900 = vpop.f32.mrf.mxu0
  %v2901 = vadd.f32 0.0, %v2900
  %v2902 = vpop.f32.mrf.mxu0
  %v2903 = vadd.f32 0.0, %v2902
  %2904 = vdwg.mxu0
  %2905 = vmatpush.bf16.msra.mxu0 0
  %2906 = vmatpush.bf16.msra.mxu0 0
  %2907 = vmatpush.bf16.msra.mxu0 0
  %2908 = vmatpush.bf16.msra.mxu0 0
  %2909 = vmatpush.bf16.msra.mxu0 0
  %2910 = vmatpush.bf16.msra.mxu0 0
  %2911 = vmatpush.bf16.msra.mxu0 0
  %2912 = vmatpush.bf16.msra.mxu0 %v1418
  %2913 = vmatmul.bf16.gmra.mxu0 %v2805
  %v2914 = vpop.f32.mrf.mxu0
  %v2915 = vadd.f32 0.0, %v2914
  %v2916 = vpop.f32.mrf.mxu0
  %v2917 = vadd.f32 0.0, %v2916
  %2918 = vmatmul.bf16.gmra.mxu0 %v2808
  %v2919 = vpop.f32.mrf.mxu0
  %v2920 = vadd.f32 0.0, %v2919
  %v2921 = vpop.f32.mrf.mxu0
  %v2922 = vadd.f32 0.0, %v2921
  %2923 = vdwg.mxu0
  %2924 = vmatpush.bf16.msra.mxu0 0
  %2925 = vmatpush.bf16.msra.mxu0 0
  %2926 = vmatpush.bf16.msra.mxu0 0
  %2927 = vmatpush.bf16.msra.mxu0 0
  %2928 = vmatpush.bf16.msra.mxu0 0
  %2929 = vmatpush.bf16.msra.mxu0 0
  %2930 = vmatpush.bf16.msra.mxu0 0
  %2931 = vmatpush.bf16.msra.mxu0 %v1421
  %2932 = vmatmul.bf16.gmra.mxu0 %v2805
  %v2933 = vpop.f32.mrf.mxu0
  %v2934 = vadd.f32 0.0, %v2933
  %v2935 = vpop.f32.mrf.mxu0
  %v2936 = vadd.f32 0.0, %v2935
  %2937 = vmatmul.bf16.gmra.mxu0 %v2808
  %v2938 = vpop.f32.mrf.mxu0
  %v2939 = vadd.f32 0.0, %v2938
  %v2940 = vpop.f32.mrf.mxu0
  %v2941 = vadd.f32 0.0, %v2940
  %2942 = vdwg.mxu0
  %2943 = vmatpush.bf16.msra.mxu0 0
  %2944 = vmatpush.bf16.msra.mxu0 0
  %2945 = vmatpush.bf16.msra.mxu0 0
  %2946 = vmatpush.bf16.msra.mxu0 0
  %2947 = vmatpush.bf16.msra.mxu0 0
  %2948 = vmatpush.bf16.msra.mxu0 0
  %2949 = vmatpush.bf16.msra.mxu0 0
  %2950 = vmatpush.bf16.msra.mxu0 %v1424
  %2951 = vmatmul.bf16.gmra.mxu0 %v2805
  %v2952 = vpop.f32.mrf.mxu0
  %v2953 = vadd.f32 0.0, %v2952
  %v2954 = vpop.f32.mrf.mxu0
  %v2955 = vadd.f32 0.0, %v2954
  %2956 = vmatmul.bf16.gmra.mxu0 %v2808
  %v2957 = vpop.f32.mrf.mxu0
  %v2958 = vadd.f32 0.0, %v2957
  %v2959 = vpop.f32.mrf.mxu0
  %v2960 = vadd.f32 0.0, %v2959
  %2961 = vdwg.mxu0
  %v2962 = vunpack.c.h.b16 %v1185
  %v2963 = vunpack.c.h.b16 %v1187
  %v2964 = vunpack.c.h.b16 %v1189
  %v2965 = vunpack.c.h.b16 %v1191
  %v2966 = vpack.c.b16 %v2963, %v2962
  %v2967 = vpack.c.b16 %v2965, %v2964
  %2970 = vmatpush.bf16.msra.mxu0 %v1838
  %2971 = vmatpush.bf16.msra.mxu0 %v1830
  %2972 = vmatpush.bf16.msra.mxu0 %v1822
  %2973 = vmatpush.bf16.msra.mxu0 %v1814
  %2974 = vmatpush.bf16.msra.mxu0 %v1806
  %2975 = vmatpush.bf16.msra.mxu0 %v1798
  %2976 = vmatpush.bf16.msra.mxu0 %v1790
  %2977 = vmatpush.bf16.msra.mxu0 %v1782
  %2978 = vmatmul.bf16.gmra.mxu0 %v2966
  %v2979 = vpop.f32.mrf.mxu0
  %v2980 = vadd.f32 %v2820, %v2979
  %v2981 = vpop.f32.mrf.mxu0
  %v2982 = vadd.f32 %v2822, %v2981
  %2983 = vmatmul.bf16.gmra.mxu0 %v2967
  %v2984 = vpop.f32.mrf.mxu0
  %v2985 = vadd.f32 %v2825, %v2984
  %v2986 = vpop.f32.mrf.mxu0
  %v2987 = vadd.f32 %v2827, %v2986
  %2988 = vdwg.mxu0
  %2989 = vmatpush.bf16.msra.mxu0 %v1839
  %2990 = vmatpush.bf16.msra.mxu0 %v1831
  %2991 = vmatpush.bf16.msra.mxu0 %v1823
  %2992 = vmatpush.bf16.msra.mxu0 %v1815
  %2993 = vmatpush.bf16.msra.mxu0 %v1807
  %2994 = vmatpush.bf16.msra.mxu0 %v1799
  %2995 = vmatpush.bf16.msra.mxu0 %v1791
  %2996 = vmatpush.bf16.msra.mxu0 %v1783
  %2997 = vmatmul.bf16.gmra.mxu0 %v2966
  %v2998 = vpop.f32.mrf.mxu0
  %v2999 = vadd.f32 %v2839, %v2998
  %v3000 = vpop.f32.mrf.mxu0
  %v3001 = vadd.f32 %v2841, %v3000
  %3002 = vmatmul.bf16.gmra.mxu0 %v2967
  %v3003 = vpop.f32.mrf.mxu0
  %v3004 = vadd.f32 %v2844, %v3003
  %v3005 = vpop.f32.mrf.mxu0
  %v3006 = vadd.f32 %v2846, %v3005
  %3007 = vdwg.mxu0
  %3008 = vmatpush.bf16.msra.mxu0 %v1840
  %3009 = vmatpush.bf16.msra.mxu0 %v1832
  %3010 = vmatpush.bf16.msra.mxu0 %v1824
  %3011 = vmatpush.bf16.msra.mxu0 %v1816
  %3012 = vmatpush.bf16.msra.mxu0 %v1808
  %3013 = vmatpush.bf16.msra.mxu0 %v1800
  %3014 = vmatpush.bf16.msra.mxu0 %v1792
  %3015 = vmatpush.bf16.msra.mxu0 %v1784
  %3016 = vmatmul.bf16.gmra.mxu0 %v2966
  %v3017 = vpop.f32.mrf.mxu0
  %v3018 = vadd.f32 %v2858, %v3017
  %v3019 = vpop.f32.mrf.mxu0
  %v3020 = vadd.f32 %v2860, %v3019
  %3021 = vmatmul.bf16.gmra.mxu0 %v2967
  %v3022 = vpop.f32.mrf.mxu0
  %v3023 = vadd.f32 %v2863, %v3022
  %v3024 = vpop.f32.mrf.mxu0
  %v3025 = vadd.f32 %v2865, %v3024
  %3026 = vdwg.mxu0
  %3027 = vmatpush.bf16.msra.mxu0 %v1841
  %3028 = vmatpush.bf16.msra.mxu0 %v1833
  %3029 = vmatpush.bf16.msra.mxu0 %v1825
  %3030 = vmatpush.bf16.msra.mxu0 %v1817
  %3031 = vmatpush.bf16.msra.mxu0 %v1809
  %3032 = vmatpush.bf16.msra.mxu0 %v1801
  %3033 = vmatpush.bf16.msra.mxu0 %v1793
  %3034 = vmatpush.bf16.msra.mxu0 %v1785
  %3035 = vmatmul.bf16.gmra.mxu0 %v2966
  %v3036 = vpop.f32.mrf.mxu0
  %v3037 = vadd.f32 %v2877, %v3036
  %v3038 = vpop.f32.mrf.mxu0
  %v3039 = vadd.f32 %v2879, %v3038
  %3040 = vmatmul.bf16.gmra.mxu0 %v2967
  %v3041 = vpop.f32.mrf.mxu0
  %v3042 = vadd.f32 %v2882, %v3041
  %v3043 = vpop.f32.mrf.mxu0
  %v3044 = vadd.f32 %v2884, %v3043
  %3045 = vdwg.mxu0
  %3046 = vmatpush.bf16.msra.mxu0 %v1842
  %3047 = vmatpush.bf16.msra.mxu0 %v1834
  %3048 = vmatpush.bf16.msra.mxu0 %v1826
  %3049 = vmatpush.bf16.msra.mxu0 %v1818
  %3050 = vmatpush.bf16.msra.mxu0 %v1810
  %3051 = vmatpush.bf16.msra.mxu0 %v1802
  %3052 = vmatpush.bf16.msra.mxu0 %v1794
  %3053 = vmatpush.bf16.msra.mxu0 %v1786
  %3054 = vmatmul.bf16.gmra.mxu0 %v2966
  %v3055 = vpop.f32.mrf.mxu0
  %v3056 = vadd.f32 %v2896, %v3055
  %v3057 = vpop.f32.mrf.mxu0
  %v3058 = vadd.f32 %v2898, %v3057
  %3059 = vmatmul.bf16.gmra.mxu0 %v2967
  %v3060 = vpop.f32.mrf.mxu0
  %v3061 = vadd.f32 %v2901, %v3060
  %v3062 = vpop.f32.mrf.mxu0
  %v3063 = vadd.f32 %v2903, %v3062
  %3064 = vdwg.mxu0
  %3065 = vmatpush.bf16.msra.mxu0 %v1843
  %3066 = vmatpush.bf16.msra.mxu0 %v1835
  %3067 = vmatpush.bf16.msra.mxu0 %v1827
  %3068 = vmatpush.bf16.msra.mxu0 %v1819
  %3069 = vmatpush.bf16.msra.mxu0 %v1811
  %3070 = vmatpush.bf16.msra.mxu0 %v1803
  %3071 = vmatpush.bf16.msra.mxu0 %v1795
  %3072 = vmatpush.bf16.msra.mxu0 %v1787
  %3073 = vmatmul.bf16.gmra.mxu0 %v2966
  %v3074 = vpop.f32.mrf.mxu0
  %v3075 = vadd.f32 %v2915, %v3074
  %v3076 = vpop.f32.mrf.mxu0
  %v3077 = vadd.f32 %v2917, %v3076
  %3078 = vmatmul.bf16.gmra.mxu0 %v2967
  %v3079 = vpop.f32.mrf.mxu0
  %v3080 = vadd.f32 %v2920, %v3079
  %v3081 = vpop.f32.mrf.mxu0
  %v3082 = vadd.f32 %v2922, %v3081
  %3083 = vdwg.mxu0
  %3084 = vmatpush.bf16.msra.mxu0 %v1844
  %3085 = vmatpush.bf16.msra.mxu0 %v1836
  %3086 = vmatpush.bf16.msra.mxu0 %v1828
  %3087 = vmatpush.bf16.msra.mxu0 %v1820
  %3088 = vmatpush.bf16.msra.mxu0 %v1812
  %3089 = vmatpush.bf16.msra.mxu0 %v1804
  %3090 = vmatpush.bf16.msra.mxu0 %v1796
  %3091 = vmatpush.bf16.msra.mxu0 %v1788
  %3092 = vmatmul.bf16.gmra.mxu0 %v2966
  %v3093 = vpop.f32.mrf.mxu0
  %v3094 = vadd.f32 %v2934, %v3093
  %v3095 = vpop.f32.mrf.mxu0
  %v3096 = vadd.f32 %v2936, %v3095
  %3097 = vmatmul.bf16.gmra.mxu0 %v2967
  %v3098 = vpop.f32.mrf.mxu0
  %v3099 = vadd.f32 %v2939, %v3098
  %v3100 = vpop.f32.mrf.mxu0
  %v3101 = vadd.f32 %v2941, %v3100
  %3102 = vdwg.mxu0
  %3103 = vmatpush.bf16.msra.mxu0 %v1845
  %3104 = vmatpush.bf16.msra.mxu0 %v1837
  %3105 = vmatpush.bf16.msra.mxu0 %v1829
  %3106 = vmatpush.bf16.msra.mxu0 %v1821
  %3107 = vmatpush.bf16.msra.mxu0 %v1813
  %3108 = vmatpush.bf16.msra.mxu0 %v1805
  %3109 = vmatpush.bf16.msra.mxu0 %v1797
  %3110 = vmatpush.bf16.msra.mxu0 %v1789
  %3111 = vmatmul.bf16.gmra.mxu0 %v2966
  %v3112 = vpop.f32.mrf.mxu0
  %v3113 = vadd.f32 %v2953, %v3112
  %v3114 = vpop.f32.mrf.mxu0
  %v3115 = vadd.f32 %v2955, %v3114
  %3116 = vmatmul.bf16.gmra.mxu0 %v2967
  %v3117 = vpop.f32.mrf.mxu0
  %v3118 = vadd.f32 %v2958, %v3117
  %v3119 = vpop.f32.mrf.mxu0
  %v3120 = vadd.f32 %v2960, %v3119
  %3121 = vdwg.mxu0
  %v3122 = vadd.f32 %v2980, %v2064
  %v3123 = vadd.f32 %v2999, %v2065
  %v3124 = vadd.f32 %v3018, %v2066
  %v3125 = vadd.f32 %v3037, %v2067
  %v3126 = vadd.f32 %v3056, %v2068
  %v3127 = vadd.f32 %v3075, %v2069
  %v3128 = vadd.f32 %v3094, %v2070
  %v3129 = vadd.f32 %v3113, %v2071
  %v3130 = vadd.f32 %v2982, %v2064
  %v3131 = vadd.f32 %v3001, %v2065
  %v3132 = vadd.f32 %v3020, %v2066
  %v3133 = vadd.f32 %v3039, %v2067
  %v3134 = vadd.f32 %v3058, %v2068
  %v3135 = vadd.f32 %v3077, %v2069
  %v3136 = vadd.f32 %v3096, %v2070
  %v3137 = vadd.f32 %v3115, %v2071
  %v3138 = vadd.f32 %v2985, %v2064
  %v3139 = vadd.f32 %v3004, %v2065
  %v3140 = vadd.f32 %v3023, %v2066
  %v3141 = vadd.f32 %v3042, %v2067
  %v3142 = vadd.f32 %v3061, %v2068
  %v3143 = vadd.f32 %v3080, %v2069
  %v3144 = vadd.f32 %v3099, %v2070
  %v3145 = vadd.f32 %v3118, %v2071
  %v3146 = vadd.f32 %v2987, %v2064
  %v3147 = vadd.f32 %v3006, %v2065
  %v3148 = vadd.f32 %v3025, %v2066
  %v3149 = vadd.f32 %v3044, %v2067
  %v3150 = vadd.f32 %v3063, %v2068
  %v3151 = vadd.f32 %v3082, %v2069
  %v3152 = vadd.f32 %v3101, %v2070
  %v3153 = vadd.f32 %v3120, %v2071
  %v3154 = vpack.c.bf16 %v3130, %v3122
  %v3155 = vpack.c.bf16 %v3131, %v3123
  %v3156 = vpack.c.bf16 %v3132, %v3124
  %v3157 = vpack.c.bf16 %v3133, %v3125
  %v3158 = vpack.c.bf16 %v3134, %v3126
  %v3159 = vpack.c.bf16 %v3135, %v3127
  %v3160 = vpack.c.bf16 %v3136, %v3128
  %v3161 = vpack.c.bf16 %v3137, %v3129
  %v3162 = vpack.c.bf16 %v3146, %v3138
  %v3163 = vpack.c.bf16 %v3147, %v3139
  %v3164 = vpack.c.bf16 %v3148, %v3140
  %v3165 = vpack.c.bf16 %v3149, %v3141
  %v3166 = vpack.c.bf16 %v3150, %v3142
  %v3167 = vpack.c.bf16 %v3151, %v3143
  %v3168 = vpack.c.bf16 %v3152, %v3144
  %v3169 = vpack.c.bf16 %v3153, %v3145
  %3174 = vrot.lane.b32.xlu0 %v1287, 112
  %v3175 = vpop.permute.xlu0 %3174
  %3176 = vrot.lane.b32.xlu0 %v1289, 112
  %v3177 = vpop.permute.xlu0 %3176
  %3178 = vrot.lane.b32.xlu0 %v1292, 112
  %v3179 = vpop.permute.xlu0 %3178
  %3180 = vrot.lane.b32.xlu0 %v1294, 112
  %v3181 = vpop.permute.xlu0 %3180
  %3186 = vmatpush.bf16.msra.mxu0 %v2519
  %3187 = vmatpush.bf16.msra.mxu0 %v2518
  %3188 = vmatpush.bf16.msra.mxu0 %v2517
  %3189 = vmatpush.bf16.msra.mxu0 %v2516
  %3190 = vmatpush.bf16.msra.mxu0 %v2515
  %3191 = vmatpush.bf16.msra.mxu0 %v2514
  %3192 = vmatpush.bf16.msra.mxu0 %v2513
  %3193 = vmatpush.bf16.msra.mxu0 %v2512
  %3194 = vmatmul.bf16.gmra.mxu0 %v3154
  %v3195 = vpop.f32.mrf.mxu0
  %v3196 = vadd.f32 %v3175, %v3195
  %v3197 = vpop.f32.mrf.mxu0
  %v3198 = vadd.f32 %v3177, %v3197
  %3199 = vmatmul.bf16.gmra.mxu0 %v3162
  %v3200 = vpop.f32.mrf.mxu0
  %v3201 = vadd.f32 %v3179, %v3200
  %v3202 = vpop.f32.mrf.mxu0
  %v3203 = vadd.f32 %v3181, %v3202
  %3204 = vdwg.mxu0
  %3205 = vmatpush.bf16.msra.mxu0 %v2527
  %3206 = vmatpush.bf16.msra.mxu0 %v2526
  %3207 = vmatpush.bf16.msra.mxu0 %v2525
  %3208 = vmatpush.bf16.msra.mxu0 %v2524
  %3209 = vmatpush.bf16.msra.mxu0 %v2523
  %3210 = vmatpush.bf16.msra.mxu0 %v2522
  %3211 = vmatpush.bf16.msra.mxu0 %v2521
  %3212 = vmatpush.bf16.msra.mxu0 %v2520
  %3213 = vmatmul.bf16.gmra.mxu0 %v3155
  %v3214 = vpop.f32.mrf.mxu0
  %v3215 = vadd.f32 %v3196, %v3214
  %v3216 = vpop.f32.mrf.mxu0
  %v3217 = vadd.f32 %v3198, %v3216
  %3218 = vmatmul.bf16.gmra.mxu0 %v3163
  %v3219 = vpop.f32.mrf.mxu0
  %v3220 = vadd.f32 %v3201, %v3219
  %v3221 = vpop.f32.mrf.mxu0
  %v3222 = vadd.f32 %v3203, %v3221
  %3223 = vdwg.mxu0
  %3224 = vmatpush.bf16.msra.mxu0 %v2535
  %3225 = vmatpush.bf16.msra.mxu0 %v2534
  %3226 = vmatpush.bf16.msra.mxu0 %v2533
  %3227 = vmatpush.bf16.msra.mxu0 %v2532
  %3228 = vmatpush.bf16.msra.mxu0 %v2531
  %3229 = vmatpush.bf16.msra.mxu0 %v2530
  %3230 = vmatpush.bf16.msra.mxu0 %v2529
  %3231 = vmatpush.bf16.msra.mxu0 %v2528
  %3232 = vmatmul.bf16.gmra.mxu0 %v3156
  %v3233 = vpop.f32.mrf.mxu0
  %v3234 = vadd.f32 %v3215, %v3233
  %v3235 = vpop.f32.mrf.mxu0
  %v3236 = vadd.f32 %v3217, %v3235
  %3237 = vmatmul.bf16.gmra.mxu0 %v3164
  %v3238 = vpop.f32.mrf.mxu0
  %v3239 = vadd.f32 %v3220, %v3238
  %v3240 = vpop.f32.mrf.mxu0
  %v3241 = vadd.f32 %v3222, %v3240
  %3242 = vdwg.mxu0
  %3243 = vmatpush.bf16.msra.mxu0 %v2543
  %3244 = vmatpush.bf16.msra.mxu0 %v2542
  %3245 = vmatpush.bf16.msra.mxu0 %v2541
  %3246 = vmatpush.bf16.msra.mxu0 %v2540
  %3247 = vmatpush.bf16.msra.mxu0 %v2539
  %3248 = vmatpush.bf16.msra.mxu0 %v2538
  %3249 = vmatpush.bf16.msra.mxu0 %v2537
  %3250 = vmatpush.bf16.msra.mxu0 %v2536
  %3251 = vmatmul.bf16.gmra.mxu0 %v3157
  %v3252 = vpop.f32.mrf.mxu0
  %v3253 = vadd.f32 %v3234, %v3252
  %v3254 = vpop.f32.mrf.mxu0
  %v3255 = vadd.f32 %v3236, %v3254
  %3256 = vmatmul.bf16.gmra.mxu0 %v3165
  %v3257 = vpop.f32.mrf.mxu0
  %v3258 = vadd.f32 %v3239, %v3257
  %v3259 = vpop.f32.mrf.mxu0
  %v3260 = vadd.f32 %v3241, %v3259
  %3261 = vdwg.mxu0
  %3262 = vmatpush.bf16.msra.mxu0 %v2551
  %3263 = vmatpush.bf16.msra.mxu0 %v2550
  %3264 = vmatpush.bf16.msra.mxu0 %v2549
  %3265 = vmatpush.bf16.msra.mxu0 %v2548
  %3266 = vmatpush.bf16.msra.mxu0 %v2547
  %3267 = vmatpush.bf16.msra.mxu0 %v2546
  %3268 = vmatpush.bf16.msra.mxu0 %v2545
  %3269 = vmatpush.bf16.msra.mxu0 %v2544
  %3270 = vmatmul.bf16.gmra.mxu0 %v3158
  %v3271 = vpop.f32.mrf.mxu0
  %v3272 = vadd.f32 %v3253, %v3271
  %v3273 = vpop.f32.mrf.mxu0
  %v3274 = vadd.f32 %v3255, %v3273
  %3275 = vmatmul.bf16.gmra.mxu0 %v3166
  %v3276 = vpop.f32.mrf.mxu0
  %v3277 = vadd.f32 %v3258, %v3276
  %v3278 = vpop.f32.mrf.mxu0
  %v3279 = vadd.f32 %v3260, %v3278
  %3280 = vdwg.mxu0
  %3281 = vmatpush.bf16.msra.mxu0 %v2559
  %3282 = vmatpush.bf16.msra.mxu0 %v2558
  %3283 = vmatpush.bf16.msra.mxu0 %v2557
  %3284 = vmatpush.bf16.msra.mxu0 %v2556
  %3285 = vmatpush.bf16.msra.mxu0 %v2555
  %3286 = vmatpush.bf16.msra.mxu0 %v2554
  %3287 = vmatpush.bf16.msra.mxu0 %v2553
  %3288 = vmatpush.bf16.msra.mxu0 %v2552
  %3289 = vmatmul.bf16.gmra.mxu0 %v3159
  %v3290 = vpop.f32.mrf.mxu0
  %v3291 = vadd.f32 %v3272, %v3290
  %v3292 = vpop.f32.mrf.mxu0
  %v3293 = vadd.f32 %v3274, %v3292
  %3294 = vmatmul.bf16.gmra.mxu0 %v3167
  %v3295 = vpop.f32.mrf.mxu0
  %v3296 = vadd.f32 %v3277, %v3295
  %v3297 = vpop.f32.mrf.mxu0
  %v3298 = vadd.f32 %v3279, %v3297
  %3299 = vdwg.mxu0
  %3300 = vmatpush.bf16.msra.mxu0 %v2567
  %3301 = vmatpush.bf16.msra.mxu0 %v2566
  %3302 = vmatpush.bf16.msra.mxu0 %v2565
  %3303 = vmatpush.bf16.msra.mxu0 %v2564
  %3304 = vmatpush.bf16.msra.mxu0 %v2563
  %3305 = vmatpush.bf16.msra.mxu0 %v2562
  %3306 = vmatpush.bf16.msra.mxu0 %v2561
  %3307 = vmatpush.bf16.msra.mxu0 %v2560
  %3308 = vmatmul.bf16.gmra.mxu0 %v3160
  %v3309 = vpop.f32.mrf.mxu0
  %v3310 = vadd.f32 %v3291, %v3309
  %v3311 = vpop.f32.mrf.mxu0
  %v3312 = vadd.f32 %v3293, %v3311
  %3313 = vmatmul.bf16.gmra.mxu0 %v3168
  %v3314 = vpop.f32.mrf.mxu0
  %v3315 = vadd.f32 %v3296, %v3314
  %v3316 = vpop.f32.mrf.mxu0
  %v3317 = vadd.f32 %v3298, %v3316
  %3318 = vdwg.mxu0
  %3319 = vmatpush.bf16.msra.mxu0 %v2575
  %3320 = vmatpush.bf16.msra.mxu0 %v2574
  %3321 = vmatpush.bf16.msra.mxu0 %v2573
  %3322 = vmatpush.bf16.msra.mxu0 %v2572
  %3323 = vmatpush.bf16.msra.mxu0 %v2571
  %3324 = vmatpush.bf16.msra.mxu0 %v2570
  %3325 = vmatpush.bf16.msra.mxu0 %v2569
  %3326 = vmatpush.bf16.msra.mxu0 %v2568
  %3327 = vmatmul.bf16.gmra.mxu0 %v3161
  %v3328 = vpop.f32.mrf.mxu0
  %v3329 = vadd.f32 %v3310, %v3328
  %v3330 = vpop.f32.mrf.mxu0
  %v3331 = vadd.f32 %v3312, %v3330
  %3332 = vmatmul.bf16.gmra.mxu0 %v3169
  %v3333 = vpop.f32.mrf.mxu0
  %v3334 = vadd.f32 %v3315, %v3333
  %v3335 = vpop.f32.mrf.mxu0
  %v3336 = vadd.f32 %v3317, %v3335
  %3337 = vdwg.mxu0
  %v3338 = vadd.f32 %v3329, %v2794
  %v3339 = vadd.f32 %v3331, %v2794
  %v3340 = vadd.f32 %v3334, %v2794
  %v3341 = vadd.f32 %v3336, %v2794
  %3342 = vrot.lane.b32.xlu0 %v1372, 112
  %v3343 = vpop.permute.xlu0 %3342
  %3344 = vrot.lane.b32.xlu0 %v1373, 112
  %v3345 = vpop.permute.xlu0 %3344
  %v3347 = vsel %vm1394, %v3343, 0
  %v3350 = vsel %vm1394, %v3345, 0
  %3352 = vmatpush.bf16.msra.mxu0 0
  %3353 = vmatpush.bf16.msra.mxu0 0
  %3354 = vmatpush.bf16.msra.mxu0 0
  %3355 = vmatpush.bf16.msra.mxu0 0
  %3356 = vmatpush.bf16.msra.mxu0 0
  %3357 = vmatpush.bf16.msra.mxu0 0
  %3358 = vmatpush.bf16.msra.mxu0 0
  %3359 = vmatpush.bf16.msra.mxu0 %v1403
  %3360 = vmatmul.bf16.gmra.mxu0 %v3347
  %v3361 = vpop.f32.mrf.mxu0
  %v3362 = vadd.f32 0.0, %v3361
  %v3363 = vpop.f32.mrf.mxu0
  %v3364 = vadd.f32 0.0, %v3363
  %3365 = vmatmul.bf16.gmra.mxu0 %v3350
  %v3366 = vpop.f32.mrf.mxu0
  %v3367 = vadd.f32 0.0, %v3366
  %v3368 = vpop.f32.mrf.mxu0
  %v3369 = vadd.f32 0.0, %v3368
  %3370 = vdwg.mxu0
  %3371 = vmatpush.bf16.msra.mxu0 0
  %3372 = vmatpush.bf16.msra.mxu0 0
  %3373 = vmatpush.bf16.msra.mxu0 0
  %3374 = vmatpush.bf16.msra.mxu0 0
  %3375 = vmatpush.bf16.msra.mxu0 0
  %3376 = vmatpush.bf16.msra.mxu0 0
  %3377 = vmatpush.bf16.msra.mxu0 0
  %3378 = vmatpush.bf16.msra.mxu0 %v1406
  %3379 = vmatmul.bf16.gmra.mxu0 %v3347
  %v3380 = vpop.f32.mrf.mxu0
  %v3381 = vadd.f32 0.0, %v3380
  %v3382 = vpop.f32.mrf.mxu0
  %v3383 = vadd.f32 0.0, %v3382
  %3384 = vmatmul.bf16.gmra.mxu0 %v3350
  %v3385 = vpop.f32.mrf.mxu0
  %v3386 = vadd.f32 0.0, %v3385
  %v3387 = vpop.f32.mrf.mxu0
  %v3388 = vadd.f32 0.0, %v3387
  %3389 = vdwg.mxu0
  %3390 = vmatpush.bf16.msra.mxu0 0
  %3391 = vmatpush.bf16.msra.mxu0 0
  %3392 = vmatpush.bf16.msra.mxu0 0
  %3393 = vmatpush.bf16.msra.mxu0 0
  %3394 = vmatpush.bf16.msra.mxu0 0
  %3395 = vmatpush.bf16.msra.mxu0 0
  %3396 = vmatpush.bf16.msra.mxu0 0
  %3397 = vmatpush.bf16.msra.mxu0 %v1409
  %3398 = vmatmul.bf16.gmra.mxu0 %v3347
  %v3399 = vpop.f32.mrf.mxu0
  %v3400 = vadd.f32 0.0, %v3399
  %v3401 = vpop.f32.mrf.mxu0
  %v3402 = vadd.f32 0.0, %v3401
  %3403 = vmatmul.bf16.gmra.mxu0 %v3350
  %v3404 = vpop.f32.mrf.mxu0
  %v3405 = vadd.f32 0.0, %v3404
  %v3406 = vpop.f32.mrf.mxu0
  %v3407 = vadd.f32 0.0, %v3406
  %3408 = vdwg.mxu0
  %3409 = vmatpush.bf16.msra.mxu0 0
  %3410 = vmatpush.bf16.msra.mxu0 0
  %3411 = vmatpush.bf16.msra.mxu0 0
  %3412 = vmatpush.bf16.msra.mxu0 0
  %3413 = vmatpush.bf16.msra.mxu0 0
  %3414 = vmatpush.bf16.msra.mxu0 0
  %3415 = vmatpush.bf16.msra.mxu0 0
  %3416 = vmatpush.bf16.msra.mxu0 %v1412
  %3417 = vmatmul.bf16.gmra.mxu0 %v3347
  %v3418 = vpop.f32.mrf.mxu0
  %v3419 = vadd.f32 0.0, %v3418
  %v3420 = vpop.f32.mrf.mxu0
  %v3421 = vadd.f32 0.0, %v3420
  %3422 = vmatmul.bf16.gmra.mxu0 %v3350
  %v3423 = vpop.f32.mrf.mxu0
  %v3424 = vadd.f32 0.0, %v3423
  %v3425 = vpop.f32.mrf.mxu0
  %v3426 = vadd.f32 0.0, %v3425
  %3427 = vdwg.mxu0
  %3428 = vmatpush.bf16.msra.mxu0 0
  %3429 = vmatpush.bf16.msra.mxu0 0
  %3430 = vmatpush.bf16.msra.mxu0 0
  %3431 = vmatpush.bf16.msra.mxu0 0
  %3432 = vmatpush.bf16.msra.mxu0 0
  %3433 = vmatpush.bf16.msra.mxu0 0
  %3434 = vmatpush.bf16.msra.mxu0 0
  %3435 = vmatpush.bf16.msra.mxu0 %v1415
  %3436 = vmatmul.bf16.gmra.mxu0 %v3347
  %v3437 = vpop.f32.mrf.mxu0
  %v3438 = vadd.f32 0.0, %v3437
  %v3439 = vpop.f32.mrf.mxu0
  %v3440 = vadd.f32 0.0, %v3439
  %3441 = vmatmul.bf16.gmra.mxu0 %v3350
  %v3442 = vpop.f32.mrf.mxu0
  %v3443 = vadd.f32 0.0, %v3442
  %v3444 = vpop.f32.mrf.mxu0
  %v3445 = vadd.f32 0.0, %v3444
  %3446 = vdwg.mxu0
  %3447 = vmatpush.bf16.msra.mxu0 0
  %3448 = vmatpush.bf16.msra.mxu0 0
  %3449 = vmatpush.bf16.msra.mxu0 0
  %3450 = vmatpush.bf16.msra.mxu0 0
  %3451 = vmatpush.bf16.msra.mxu0 0
  %3452 = vmatpush.bf16.msra.mxu0 0
  %3453 = vmatpush.bf16.msra.mxu0 0
  %3454 = vmatpush.bf16.msra.mxu0 %v1418
  %3455 = vmatmul.bf16.gmra.mxu0 %v3347
  %v3456 = vpop.f32.mrf.mxu0
  %v3457 = vadd.f32 0.0, %v3456
  %v3458 = vpop.f32.mrf.mxu0
  %v3459 = vadd.f32 0.0, %v3458
  %3460 = vmatmul.bf16.gmra.mxu0 %v3350
  %v3461 = vpop.f32.mrf.mxu0
  %v3462 = vadd.f32 0.0, %v3461
  %v3463 = vpop.f32.mrf.mxu0
  %v3464 = vadd.f32 0.0, %v3463
  %3465 = vdwg.mxu0
  %3466 = vmatpush.bf16.msra.mxu0 0
  %3467 = vmatpush.bf16.msra.mxu0 0
  %3468 = vmatpush.bf16.msra.mxu0 0
  %3469 = vmatpush.bf16.msra.mxu0 0
  %3470 = vmatpush.bf16.msra.mxu0 0
  %3471 = vmatpush.bf16.msra.mxu0 0
  %3472 = vmatpush.bf16.msra.mxu0 0
  %3473 = vmatpush.bf16.msra.mxu0 %v1421
  %3474 = vmatmul.bf16.gmra.mxu0 %v3347
  %v3475 = vpop.f32.mrf.mxu0
  %v3476 = vadd.f32 0.0, %v3475
  %v3477 = vpop.f32.mrf.mxu0
  %v3478 = vadd.f32 0.0, %v3477
  %3479 = vmatmul.bf16.gmra.mxu0 %v3350
  %v3480 = vpop.f32.mrf.mxu0
  %v3481 = vadd.f32 0.0, %v3480
  %v3482 = vpop.f32.mrf.mxu0
  %v3483 = vadd.f32 0.0, %v3482
  %3484 = vdwg.mxu0
  %3485 = vmatpush.bf16.msra.mxu0 0
  %3486 = vmatpush.bf16.msra.mxu0 0
  %3487 = vmatpush.bf16.msra.mxu0 0
  %3488 = vmatpush.bf16.msra.mxu0 0
  %3489 = vmatpush.bf16.msra.mxu0 0
  %3490 = vmatpush.bf16.msra.mxu0 0
  %3491 = vmatpush.bf16.msra.mxu0 0
  %3492 = vmatpush.bf16.msra.mxu0 %v1424
  %3493 = vmatmul.bf16.gmra.mxu0 %v3347
  %v3494 = vpop.f32.mrf.mxu0
  %v3495 = vadd.f32 0.0, %v3494
  %v3496 = vpop.f32.mrf.mxu0
  %v3497 = vadd.f32 0.0, %v3496
  %3498 = vmatmul.bf16.gmra.mxu0 %v3350
  %v3499 = vpop.f32.mrf.mxu0
  %v3500 = vadd.f32 0.0, %v3499
  %v3501 = vpop.f32.mrf.mxu0
  %v3502 = vadd.f32 0.0, %v3501
  %3503 = vdwg.mxu0
  %v3508 = vunpack.c.l.b16 %v1186
  %v3509 = vunpack.c.l.b16 %v1188
  %v3510 = vunpack.c.l.b16 %v1190
  %v3511 = vunpack.c.l.b16 %v1192
  %v3512 = vpack.c.b16 %v3509, %v3508
  %v3513 = vpack.c.b16 %v3511, %v3510
  %3516 = vmatpush.bf16.msra.mxu0 %v1838
  %3517 = vmatpush.bf16.msra.mxu0 %v1830
  %3518 = vmatpush.bf16.msra.mxu0 %v1822
  %3519 = vmatpush.bf16.msra.mxu0 %v1814
  %3520 = vmatpush.bf16.msra.mxu0 %v1806
  %3521 = vmatpush.bf16.msra.mxu0 %v1798
  %3522 = vmatpush.bf16.msra.mxu0 %v1790
  %3523 = vmatpush.bf16.msra.mxu0 %v1782
  %3524 = vmatmul.bf16.gmra.mxu0 %v3512
  %v3525 = vpop.f32.mrf.mxu0
  %v3526 = vadd.f32 %v3362, %v3525
  %v3527 = vpop.f32.mrf.mxu0
  %v3528 = vadd.f32 %v3364, %v3527
  %3529 = vmatmul.bf16.gmra.mxu0 %v3513
  %v3530 = vpop.f32.mrf.mxu0
  %v3531 = vadd.f32 %v3367, %v3530
  %v3532 = vpop.f32.mrf.mxu0
  %v3533 = vadd.f32 %v3369, %v3532
  %3534 = vdwg.mxu0
  %3535 = vmatpush.bf16.msra.mxu0 %v1839
  %3536 = vmatpush.bf16.msra.mxu0 %v1831
  %3537 = vmatpush.bf16.msra.mxu0 %v1823
  %3538 = vmatpush.bf16.msra.mxu0 %v1815
  %3539 = vmatpush.bf16.msra.mxu0 %v1807
  %3540 = vmatpush.bf16.msra.mxu0 %v1799
  %3541 = vmatpush.bf16.msra.mxu0 %v1791
  %3542 = vmatpush.bf16.msra.mxu0 %v1783
  %3543 = vmatmul.bf16.gmra.mxu0 %v3512
  %v3544 = vpop.f32.mrf.mxu0
  %v3545 = vadd.f32 %v3381, %v3544
  %v3546 = vpop.f32.mrf.mxu0
  %v3547 = vadd.f32 %v3383, %v3546
  %3548 = vmatmul.bf16.gmra.mxu0 %v3513
  %v3549 = vpop.f32.mrf.mxu0
  %v3550 = vadd.f32 %v3386, %v3549
  %v3551 = vpop.f32.mrf.mxu0
  %v3552 = vadd.f32 %v3388, %v3551
  %3553 = vdwg.mxu0
  %3554 = vmatpush.bf16.msra.mxu0 %v1840
  %3555 = vmatpush.bf16.msra.mxu0 %v1832
  %3556 = vmatpush.bf16.msra.mxu0 %v1824
  %3557 = vmatpush.bf16.msra.mxu0 %v1816
  %3558 = vmatpush.bf16.msra.mxu0 %v1808
  %3559 = vmatpush.bf16.msra.mxu0 %v1800
  %3560 = vmatpush.bf16.msra.mxu0 %v1792
  %3561 = vmatpush.bf16.msra.mxu0 %v1784
  %3562 = vmatmul.bf16.gmra.mxu0 %v3512
  %v3563 = vpop.f32.mrf.mxu0
  %v3564 = vadd.f32 %v3400, %v3563
  %v3565 = vpop.f32.mrf.mxu0
  %v3566 = vadd.f32 %v3402, %v3565
  %3567 = vmatmul.bf16.gmra.mxu0 %v3513
  %v3568 = vpop.f32.mrf.mxu0
  %v3569 = vadd.f32 %v3405, %v3568
  %v3570 = vpop.f32.mrf.mxu0
  %v3571 = vadd.f32 %v3407, %v3570
  %3572 = vdwg.mxu0
  %3573 = vmatpush.bf16.msra.mxu0 %v1841
  %3574 = vmatpush.bf16.msra.mxu0 %v1833
  %3575 = vmatpush.bf16.msra.mxu0 %v1825
  %3576 = vmatpush.bf16.msra.mxu0 %v1817
  %3577 = vmatpush.bf16.msra.mxu0 %v1809
  %3578 = vmatpush.bf16.msra.mxu0 %v1801
  %3579 = vmatpush.bf16.msra.mxu0 %v1793
  %3580 = vmatpush.bf16.msra.mxu0 %v1785
  %3581 = vmatmul.bf16.gmra.mxu0 %v3512
  %v3582 = vpop.f32.mrf.mxu0
  %v3583 = vadd.f32 %v3419, %v3582
  %v3584 = vpop.f32.mrf.mxu0
  %v3585 = vadd.f32 %v3421, %v3584
  %3586 = vmatmul.bf16.gmra.mxu0 %v3513
  %v3587 = vpop.f32.mrf.mxu0
  %v3588 = vadd.f32 %v3424, %v3587
  %v3589 = vpop.f32.mrf.mxu0
  %v3590 = vadd.f32 %v3426, %v3589
  %3591 = vdwg.mxu0
  %3592 = vmatpush.bf16.msra.mxu0 %v1842
  %3593 = vmatpush.bf16.msra.mxu0 %v1834
  %3594 = vmatpush.bf16.msra.mxu0 %v1826
  %3595 = vmatpush.bf16.msra.mxu0 %v1818
  %3596 = vmatpush.bf16.msra.mxu0 %v1810
  %3597 = vmatpush.bf16.msra.mxu0 %v1802
  %3598 = vmatpush.bf16.msra.mxu0 %v1794
  %3599 = vmatpush.bf16.msra.mxu0 %v1786
  %3600 = vmatmul.bf16.gmra.mxu0 %v3512
  %v3601 = vpop.f32.mrf.mxu0
  %v3602 = vadd.f32 %v3438, %v3601
  %v3603 = vpop.f32.mrf.mxu0
  %v3604 = vadd.f32 %v3440, %v3603
  %3605 = vmatmul.bf16.gmra.mxu0 %v3513
  %v3606 = vpop.f32.mrf.mxu0
  %v3607 = vadd.f32 %v3443, %v3606
  %v3608 = vpop.f32.mrf.mxu0
  %v3609 = vadd.f32 %v3445, %v3608
  %3610 = vdwg.mxu0
  %3611 = vmatpush.bf16.msra.mxu0 %v1843
  %3612 = vmatpush.bf16.msra.mxu0 %v1835
  %3613 = vmatpush.bf16.msra.mxu0 %v1827
  %3614 = vmatpush.bf16.msra.mxu0 %v1819
  %3615 = vmatpush.bf16.msra.mxu0 %v1811
  %3616 = vmatpush.bf16.msra.mxu0 %v1803
  %3617 = vmatpush.bf16.msra.mxu0 %v1795
  %3618 = vmatpush.bf16.msra.mxu0 %v1787
  %3619 = vmatmul.bf16.gmra.mxu0 %v3512
  %v3620 = vpop.f32.mrf.mxu0
  %v3621 = vadd.f32 %v3457, %v3620
  %v3622 = vpop.f32.mrf.mxu0
  %v3623 = vadd.f32 %v3459, %v3622
  %3624 = vmatmul.bf16.gmra.mxu0 %v3513
  %v3625 = vpop.f32.mrf.mxu0
  %v3626 = vadd.f32 %v3462, %v3625
  %v3627 = vpop.f32.mrf.mxu0
  %v3628 = vadd.f32 %v3464, %v3627
  %3629 = vdwg.mxu0
  %3630 = vmatpush.bf16.msra.mxu0 %v1844
  %3631 = vmatpush.bf16.msra.mxu0 %v1836
  %3632 = vmatpush.bf16.msra.mxu0 %v1828
  %3633 = vmatpush.bf16.msra.mxu0 %v1820
  %3634 = vmatpush.bf16.msra.mxu0 %v1812
  %3635 = vmatpush.bf16.msra.mxu0 %v1804
  %3636 = vmatpush.bf16.msra.mxu0 %v1796
  %3637 = vmatpush.bf16.msra.mxu0 %v1788
  %3638 = vmatmul.bf16.gmra.mxu0 %v3512
  %v3639 = vpop.f32.mrf.mxu0
  %v3640 = vadd.f32 %v3476, %v3639
  %v3641 = vpop.f32.mrf.mxu0
  %v3642 = vadd.f32 %v3478, %v3641
  %3643 = vmatmul.bf16.gmra.mxu0 %v3513
  %v3644 = vpop.f32.mrf.mxu0
  %v3645 = vadd.f32 %v3481, %v3644
  %v3646 = vpop.f32.mrf.mxu0
  %v3647 = vadd.f32 %v3483, %v3646
  %3648 = vdwg.mxu0
  %3649 = vmatpush.bf16.msra.mxu0 %v1845
  %3650 = vmatpush.bf16.msra.mxu0 %v1837
  %3651 = vmatpush.bf16.msra.mxu0 %v1829
  %3652 = vmatpush.bf16.msra.mxu0 %v1821
  %3653 = vmatpush.bf16.msra.mxu0 %v1813
  %3654 = vmatpush.bf16.msra.mxu0 %v1805
  %3655 = vmatpush.bf16.msra.mxu0 %v1797
  %3656 = vmatpush.bf16.msra.mxu0 %v1789
  %3657 = vmatmul.bf16.gmra.mxu0 %v3512
  %v3658 = vpop.f32.mrf.mxu0
  %v3659 = vadd.f32 %v3495, %v3658
  %v3660 = vpop.f32.mrf.mxu0
  %v3661 = vadd.f32 %v3497, %v3660
  %3662 = vmatmul.bf16.gmra.mxu0 %v3513
  %v3663 = vpop.f32.mrf.mxu0
  %v3664 = vadd.f32 %v3500, %v3663
  %v3665 = vpop.f32.mrf.mxu0
  %v3666 = vadd.f32 %v3502, %v3665
  %3667 = vdwg.mxu0
  %v3668 = vadd.f32 %v3526, %v2064
  %v3669 = vadd.f32 %v3545, %v2065
  %v3670 = vadd.f32 %v3564, %v2066
  %v3671 = vadd.f32 %v3583, %v2067
  %v3672 = vadd.f32 %v3602, %v2068
  %v3673 = vadd.f32 %v3621, %v2069
  %v3674 = vadd.f32 %v3640, %v2070
  %v3675 = vadd.f32 %v3659, %v2071
  %v3676 = vadd.f32 %v3528, %v2064
  %v3677 = vadd.f32 %v3547, %v2065
  %v3678 = vadd.f32 %v3566, %v2066
  %v3679 = vadd.f32 %v3585, %v2067
  %v3680 = vadd.f32 %v3604, %v2068
  %v3681 = vadd.f32 %v3623, %v2069
  %v3682 = vadd.f32 %v3642, %v2070
  %v3683 = vadd.f32 %v3661, %v2071
  %v3684 = vadd.f32 %v3531, %v2064
  %v3685 = vadd.f32 %v3550, %v2065
  %v3686 = vadd.f32 %v3569, %v2066
  %v3687 = vadd.f32 %v3588, %v2067
  %v3688 = vadd.f32 %v3607, %v2068
  %v3689 = vadd.f32 %v3626, %v2069
  %v3690 = vadd.f32 %v3645, %v2070
  %v3691 = vadd.f32 %v3664, %v2071
  %v3692 = vadd.f32 %v3533, %v2064
  %v3693 = vadd.f32 %v3552, %v2065
  %v3694 = vadd.f32 %v3571, %v2066
  %v3695 = vadd.f32 %v3590, %v2067
  %v3696 = vadd.f32 %v3609, %v2068
  %v3697 = vadd.f32 %v3628, %v2069
  %v3698 = vadd.f32 %v3647, %v2070
  %v3699 = vadd.f32 %v3666, %v2071
  %v3700 = vpack.c.bf16 %v3676, %v3668
  %v3701 = vpack.c.bf16 %v3677, %v3669
  %v3702 = vpack.c.bf16 %v3678, %v3670
  %v3703 = vpack.c.bf16 %v3679, %v3671
  %v3704 = vpack.c.bf16 %v3680, %v3672
  %v3705 = vpack.c.bf16 %v3681, %v3673
  %v3706 = vpack.c.bf16 %v3682, %v3674
  %v3707 = vpack.c.bf16 %v3683, %v3675
  %v3708 = vpack.c.bf16 %v3692, %v3684
  %v3709 = vpack.c.bf16 %v3693, %v3685
  %v3710 = vpack.c.bf16 %v3694, %v3686
  %v3711 = vpack.c.bf16 %v3695, %v3687
  %v3712 = vpack.c.bf16 %v3696, %v3688
  %v3713 = vpack.c.bf16 %v3697, %v3689
  %v3714 = vpack.c.bf16 %v3698, %v3690
  %v3715 = vpack.c.bf16 %v3699, %v3691
  %3716 = vrot.lane.b32.xlu0 %v1287, 96
  %v3717 = vpop.permute.xlu0 %3716
  %3718 = vrot.lane.b32.xlu0 %v1289, 96
  %v3719 = vpop.permute.xlu0 %3718
  %3720 = vrot.lane.b32.xlu0 %v1292, 96
  %v3721 = vpop.permute.xlu0 %3720
  %3722 = vrot.lane.b32.xlu0 %v1294, 96
  %v3723 = vpop.permute.xlu0 %3722
  %3728 = vmatpush.bf16.msra.mxu0 %v2519
  %3729 = vmatpush.bf16.msra.mxu0 %v2518
  %3730 = vmatpush.bf16.msra.mxu0 %v2517
  %3731 = vmatpush.bf16.msra.mxu0 %v2516
  %3732 = vmatpush.bf16.msra.mxu0 %v2515
  %3733 = vmatpush.bf16.msra.mxu0 %v2514
  %3734 = vmatpush.bf16.msra.mxu0 %v2513
  %3735 = vmatpush.bf16.msra.mxu0 %v2512
  %3736 = vmatmul.bf16.gmra.mxu0 %v3700
  %v3737 = vpop.f32.mrf.mxu0
  %v3738 = vadd.f32 %v3717, %v3737
  %v3739 = vpop.f32.mrf.mxu0
  %v3740 = vadd.f32 %v3719, %v3739
  %3741 = vmatmul.bf16.gmra.mxu0 %v3708
  %v3742 = vpop.f32.mrf.mxu0
  %v3743 = vadd.f32 %v3721, %v3742
  %v3744 = vpop.f32.mrf.mxu0
  %v3745 = vadd.f32 %v3723, %v3744
  %3746 = vdwg.mxu0
  %3747 = vmatpush.bf16.msra.mxu0 %v2527
  %3748 = vmatpush.bf16.msra.mxu0 %v2526
  %3749 = vmatpush.bf16.msra.mxu0 %v2525
  %3750 = vmatpush.bf16.msra.mxu0 %v2524
  %3751 = vmatpush.bf16.msra.mxu0 %v2523
  %3752 = vmatpush.bf16.msra.mxu0 %v2522
  %3753 = vmatpush.bf16.msra.mxu0 %v2521
  %3754 = vmatpush.bf16.msra.mxu0 %v2520
  %3755 = vmatmul.bf16.gmra.mxu0 %v3701
  %v3756 = vpop.f32.mrf.mxu0
  %v3757 = vadd.f32 %v3738, %v3756
  %v3758 = vpop.f32.mrf.mxu0
  %v3759 = vadd.f32 %v3740, %v3758
  %3760 = vmatmul.bf16.gmra.mxu0 %v3709
  %v3761 = vpop.f32.mrf.mxu0
  %v3762 = vadd.f32 %v3743, %v3761
  %v3763 = vpop.f32.mrf.mxu0
  %v3764 = vadd.f32 %v3745, %v3763
  %3765 = vdwg.mxu0
  %3766 = vmatpush.bf16.msra.mxu0 %v2535
  %3767 = vmatpush.bf16.msra.mxu0 %v2534
  %3768 = vmatpush.bf16.msra.mxu0 %v2533
  %3769 = vmatpush.bf16.msra.mxu0 %v2532
  %3770 = vmatpush.bf16.msra.mxu0 %v2531
  %3771 = vmatpush.bf16.msra.mxu0 %v2530
  %3772 = vmatpush.bf16.msra.mxu0 %v2529
  %3773 = vmatpush.bf16.msra.mxu0 %v2528
  %3774 = vmatmul.bf16.gmra.mxu0 %v3702
  %v3775 = vpop.f32.mrf.mxu0
  %v3776 = vadd.f32 %v3757, %v3775
  %v3777 = vpop.f32.mrf.mxu0
  %v3778 = vadd.f32 %v3759, %v3777
  %3779 = vmatmul.bf16.gmra.mxu0 %v3710
  %v3780 = vpop.f32.mrf.mxu0
  %v3781 = vadd.f32 %v3762, %v3780
  %v3782 = vpop.f32.mrf.mxu0
  %v3783 = vadd.f32 %v3764, %v3782
  %3784 = vdwg.mxu0
  %3785 = vmatpush.bf16.msra.mxu0 %v2543
  %3786 = vmatpush.bf16.msra.mxu0 %v2542
  %3787 = vmatpush.bf16.msra.mxu0 %v2541
  %3788 = vmatpush.bf16.msra.mxu0 %v2540
  %3789 = vmatpush.bf16.msra.mxu0 %v2539
  %3790 = vmatpush.bf16.msra.mxu0 %v2538
  %3791 = vmatpush.bf16.msra.mxu0 %v2537
  %3792 = vmatpush.bf16.msra.mxu0 %v2536
  %3793 = vmatmul.bf16.gmra.mxu0 %v3703
  %v3794 = vpop.f32.mrf.mxu0
  %v3795 = vadd.f32 %v3776, %v3794
  %v3796 = vpop.f32.mrf.mxu0
  %v3797 = vadd.f32 %v3778, %v3796
  %3798 = vmatmul.bf16.gmra.mxu0 %v3711
  %v3799 = vpop.f32.mrf.mxu0
  %v3800 = vadd.f32 %v3781, %v3799
  %v3801 = vpop.f32.mrf.mxu0
  %v3802 = vadd.f32 %v3783, %v3801
  %3803 = vdwg.mxu0
  %3804 = vmatpush.bf16.msra.mxu0 %v2551
  %3805 = vmatpush.bf16.msra.mxu0 %v2550
  %3806 = vmatpush.bf16.msra.mxu0 %v2549
  %3807 = vmatpush.bf16.msra.mxu0 %v2548
  %3808 = vmatpush.bf16.msra.mxu0 %v2547
  %3809 = vmatpush.bf16.msra.mxu0 %v2546
  %3810 = vmatpush.bf16.msra.mxu0 %v2545
  %3811 = vmatpush.bf16.msra.mxu0 %v2544
  %3812 = vmatmul.bf16.gmra.mxu0 %v3704
  %v3813 = vpop.f32.mrf.mxu0
  %v3814 = vadd.f32 %v3795, %v3813
  %v3815 = vpop.f32.mrf.mxu0
  %v3816 = vadd.f32 %v3797, %v3815
  %3817 = vmatmul.bf16.gmra.mxu0 %v3712
  %v3818 = vpop.f32.mrf.mxu0
  %v3819 = vadd.f32 %v3800, %v3818
  %v3820 = vpop.f32.mrf.mxu0
  %v3821 = vadd.f32 %v3802, %v3820
  %3822 = vdwg.mxu0
  %3823 = vmatpush.bf16.msra.mxu0 %v2559
  %3824 = vmatpush.bf16.msra.mxu0 %v2558
  %3825 = vmatpush.bf16.msra.mxu0 %v2557
  %3826 = vmatpush.bf16.msra.mxu0 %v2556
  %3827 = vmatpush.bf16.msra.mxu0 %v2555
  %3828 = vmatpush.bf16.msra.mxu0 %v2554
  %3829 = vmatpush.bf16.msra.mxu0 %v2553
  %3830 = vmatpush.bf16.msra.mxu0 %v2552
  %3831 = vmatmul.bf16.gmra.mxu0 %v3705
  %v3832 = vpop.f32.mrf.mxu0
  %v3833 = vadd.f32 %v3814, %v3832
  %v3834 = vpop.f32.mrf.mxu0
  %v3835 = vadd.f32 %v3816, %v3834
  %3836 = vmatmul.bf16.gmra.mxu0 %v3713
  %v3837 = vpop.f32.mrf.mxu0
  %v3838 = vadd.f32 %v3819, %v3837
  %v3839 = vpop.f32.mrf.mxu0
  %v3840 = vadd.f32 %v3821, %v3839
  %3841 = vdwg.mxu0
  %3842 = vmatpush.bf16.msra.mxu0 %v2567
  %3843 = vmatpush.bf16.msra.mxu0 %v2566
  %3844 = vmatpush.bf16.msra.mxu0 %v2565
  %3845 = vmatpush.bf16.msra.mxu0 %v2564
  %3846 = vmatpush.bf16.msra.mxu0 %v2563
  %3847 = vmatpush.bf16.msra.mxu0 %v2562
  %3848 = vmatpush.bf16.msra.mxu0 %v2561
  %3849 = vmatpush.bf16.msra.mxu0 %v2560
  %3850 = vmatmul.bf16.gmra.mxu0 %v3706
  %v3851 = vpop.f32.mrf.mxu0
  %v3852 = vadd.f32 %v3833, %v3851
  %v3853 = vpop.f32.mrf.mxu0
  %v3854 = vadd.f32 %v3835, %v3853
  %3855 = vmatmul.bf16.gmra.mxu0 %v3714
  %v3856 = vpop.f32.mrf.mxu0
  %v3857 = vadd.f32 %v3838, %v3856
  %v3858 = vpop.f32.mrf.mxu0
  %v3859 = vadd.f32 %v3840, %v3858
  %3860 = vdwg.mxu0
  %3861 = vmatpush.bf16.msra.mxu0 %v2575
  %3862 = vmatpush.bf16.msra.mxu0 %v2574
  %3863 = vmatpush.bf16.msra.mxu0 %v2573
  %3864 = vmatpush.bf16.msra.mxu0 %v2572
  %3865 = vmatpush.bf16.msra.mxu0 %v2571
  %3866 = vmatpush.bf16.msra.mxu0 %v2570
  %3867 = vmatpush.bf16.msra.mxu0 %v2569
  %3868 = vmatpush.bf16.msra.mxu0 %v2568
  %3869 = vmatmul.bf16.gmra.mxu0 %v3707
  %v3870 = vpop.f32.mrf.mxu0
  %v3871 = vadd.f32 %v3852, %v3870
  %v3872 = vpop.f32.mrf.mxu0
  %v3873 = vadd.f32 %v3854, %v3872
  %3874 = vmatmul.bf16.gmra.mxu0 %v3715
  %v3875 = vpop.f32.mrf.mxu0
  %v3876 = vadd.f32 %v3857, %v3875
  %v3877 = vpop.f32.mrf.mxu0
  %v3878 = vadd.f32 %v3859, %v3877
  %3879 = vdwg.mxu0
  %v3880 = vadd.f32 %v3871, %v2794
  %v3881 = vadd.f32 %v3873, %v2794
  %v3882 = vadd.f32 %v3876, %v2794
  %v3883 = vadd.f32 %v3878, %v2794
  %3884 = vrot.lane.b32.xlu0 %v1372, 104
  %v3885 = vpop.permute.xlu0 %3884
  %3886 = vrot.lane.b32.xlu0 %v1373, 104
  %v3887 = vpop.permute.xlu0 %3886
  %v3889 = vsel %vm1394, %v3885, 0
  %v3892 = vsel %vm1394, %v3887, 0
  %3894 = vmatpush.bf16.msra.mxu0 0
  %3895 = vmatpush.bf16.msra.mxu0 0
  %3896 = vmatpush.bf16.msra.mxu0 0
  %3897 = vmatpush.bf16.msra.mxu0 0
  %3898 = vmatpush.bf16.msra.mxu0 0
  %3899 = vmatpush.bf16.msra.mxu0 0
  %3900 = vmatpush.bf16.msra.mxu0 0
  %3901 = vmatpush.bf16.msra.mxu0 %v1403
  %3902 = vmatmul.bf16.gmra.mxu0 %v3889
  %v3903 = vpop.f32.mrf.mxu0
  %v3904 = vadd.f32 0.0, %v3903
  %v3905 = vpop.f32.mrf.mxu0
  %v3906 = vadd.f32 0.0, %v3905
  %3907 = vmatmul.bf16.gmra.mxu0 %v3892
  %v3908 = vpop.f32.mrf.mxu0
  %v3909 = vadd.f32 0.0, %v3908
  %v3910 = vpop.f32.mrf.mxu0
  %v3911 = vadd.f32 0.0, %v3910
  %3912 = vdwg.mxu0
  %3913 = vmatpush.bf16.msra.mxu0 0
  %3914 = vmatpush.bf16.msra.mxu0 0
  %3915 = vmatpush.bf16.msra.mxu0 0
  %3916 = vmatpush.bf16.msra.mxu0 0
  %3917 = vmatpush.bf16.msra.mxu0 0
  %3918 = vmatpush.bf16.msra.mxu0 0
  %3919 = vmatpush.bf16.msra.mxu0 0
  %3920 = vmatpush.bf16.msra.mxu0 %v1406
  %3921 = vmatmul.bf16.gmra.mxu0 %v3889
  %v3922 = vpop.f32.mrf.mxu0
  %v3923 = vadd.f32 0.0, %v3922
  %v3924 = vpop.f32.mrf.mxu0
  %v3925 = vadd.f32 0.0, %v3924
  %3926 = vmatmul.bf16.gmra.mxu0 %v3892
  %v3927 = vpop.f32.mrf.mxu0
  %v3928 = vadd.f32 0.0, %v3927
  %v3929 = vpop.f32.mrf.mxu0
  %v3930 = vadd.f32 0.0, %v3929
  %3931 = vdwg.mxu0
  %3932 = vmatpush.bf16.msra.mxu0 0
  %3933 = vmatpush.bf16.msra.mxu0 0
  %3934 = vmatpush.bf16.msra.mxu0 0
  %3935 = vmatpush.bf16.msra.mxu0 0
  %3936 = vmatpush.bf16.msra.mxu0 0
  %3937 = vmatpush.bf16.msra.mxu0 0
  %3938 = vmatpush.bf16.msra.mxu0 0
  %3939 = vmatpush.bf16.msra.mxu0 %v1409
  %3940 = vmatmul.bf16.gmra.mxu0 %v3889
  %v3941 = vpop.f32.mrf.mxu0
  %v3942 = vadd.f32 0.0, %v3941
  %v3943 = vpop.f32.mrf.mxu0
  %v3944 = vadd.f32 0.0, %v3943
  %3945 = vmatmul.bf16.gmra.mxu0 %v3892
  %v3946 = vpop.f32.mrf.mxu0
  %v3947 = vadd.f32 0.0, %v3946
  %v3948 = vpop.f32.mrf.mxu0
  %v3949 = vadd.f32 0.0, %v3948
  %3950 = vdwg.mxu0
  %3951 = vmatpush.bf16.msra.mxu0 0
  %3952 = vmatpush.bf16.msra.mxu0 0
  %3953 = vmatpush.bf16.msra.mxu0 0
  %3954 = vmatpush.bf16.msra.mxu0 0
  %3955 = vmatpush.bf16.msra.mxu0 0
  %3956 = vmatpush.bf16.msra.mxu0 0
  %3957 = vmatpush.bf16.msra.mxu0 0
  %3958 = vmatpush.bf16.msra.mxu0 %v1412
  %3959 = vmatmul.bf16.gmra.mxu0 %v3889
  %v3960 = vpop.f32.mrf.mxu0
  %v3961 = vadd.f32 0.0, %v3960
  %v3962 = vpop.f32.mrf.mxu0
  %v3963 = vadd.f32 0.0, %v3962
  %3964 = vmatmul.bf16.gmra.mxu0 %v3892
  %v3965 = vpop.f32.mrf.mxu0
  %v3966 = vadd.f32 0.0, %v3965
  %v3967 = vpop.f32.mrf.mxu0
  %v3968 = vadd.f32 0.0, %v3967
  %3969 = vdwg.mxu0
  %3970 = vmatpush.bf16.msra.mxu0 0
  %3971 = vmatpush.bf16.msra.mxu0 0
  %3972 = vmatpush.bf16.msra.mxu0 0
  %3973 = vmatpush.bf16.msra.mxu0 0
  %3974 = vmatpush.bf16.msra.mxu0 0
  %3975 = vmatpush.bf16.msra.mxu0 0
  %3976 = vmatpush.bf16.msra.mxu0 0
  %3977 = vmatpush.bf16.msra.mxu0 %v1415
  %3978 = vmatmul.bf16.gmra.mxu0 %v3889
  %v3979 = vpop.f32.mrf.mxu0
  %v3980 = vadd.f32 0.0, %v3979
  %v3981 = vpop.f32.mrf.mxu0
  %v3982 = vadd.f32 0.0, %v3981
  %3983 = vmatmul.bf16.gmra.mxu0 %v3892
  %v3984 = vpop.f32.mrf.mxu0
  %v3985 = vadd.f32 0.0, %v3984
  %v3986 = vpop.f32.mrf.mxu0
  %v3987 = vadd.f32 0.0, %v3986
  %3988 = vdwg.mxu0
  %3989 = vmatpush.bf16.msra.mxu0 0
  %3990 = vmatpush.bf16.msra.mxu0 0
  %3991 = vmatpush.bf16.msra.mxu0 0
  %3992 = vmatpush.bf16.msra.mxu0 0
  %3993 = vmatpush.bf16.msra.mxu0 0
  %3994 = vmatpush.bf16.msra.mxu0 0
  %3995 = vmatpush.bf16.msra.mxu0 0
  %3996 = vmatpush.bf16.msra.mxu0 %v1418
  %3997 = vmatmul.bf16.gmra.mxu0 %v3889
  %v3998 = vpop.f32.mrf.mxu0
  %v3999 = vadd.f32 0.0, %v3998
  %v4000 = vpop.f32.mrf.mxu0
  %v4001 = vadd.f32 0.0, %v4000
  %4002 = vmatmul.bf16.gmra.mxu0 %v3892
  %v4003 = vpop.f32.mrf.mxu0
  %v4004 = vadd.f32 0.0, %v4003
  %v4005 = vpop.f32.mrf.mxu0
  %v4006 = vadd.f32 0.0, %v4005
  %4007 = vdwg.mxu0
  %4008 = vmatpush.bf16.msra.mxu0 0
  %4009 = vmatpush.bf16.msra.mxu0 0
  %4010 = vmatpush.bf16.msra.mxu0 0
  %4011 = vmatpush.bf16.msra.mxu0 0
  %4012 = vmatpush.bf16.msra.mxu0 0
  %4013 = vmatpush.bf16.msra.mxu0 0
  %4014 = vmatpush.bf16.msra.mxu0 0
  %4015 = vmatpush.bf16.msra.mxu0 %v1421
  %4016 = vmatmul.bf16.gmra.mxu0 %v3889
  %v4017 = vpop.f32.mrf.mxu0
  %v4018 = vadd.f32 0.0, %v4017
  %v4019 = vpop.f32.mrf.mxu0
  %v4020 = vadd.f32 0.0, %v4019
  %4021 = vmatmul.bf16.gmra.mxu0 %v3892
  %v4022 = vpop.f32.mrf.mxu0
  %v4023 = vadd.f32 0.0, %v4022
  %v4024 = vpop.f32.mrf.mxu0
  %v4025 = vadd.f32 0.0, %v4024
  %4026 = vdwg.mxu0
  %4027 = vmatpush.bf16.msra.mxu0 0
  %4028 = vmatpush.bf16.msra.mxu0 0
  %4029 = vmatpush.bf16.msra.mxu0 0
  %4030 = vmatpush.bf16.msra.mxu0 0
  %4031 = vmatpush.bf16.msra.mxu0 0
  %4032 = vmatpush.bf16.msra.mxu0 0
  %4033 = vmatpush.bf16.msra.mxu0 0
  %4034 = vmatpush.bf16.msra.mxu0 %v1424
  %4035 = vmatmul.bf16.gmra.mxu0 %v3889
  %v4036 = vpop.f32.mrf.mxu0
  %v4037 = vadd.f32 0.0, %v4036
  %v4038 = vpop.f32.mrf.mxu0
  %v4039 = vadd.f32 0.0, %v4038
  %4040 = vmatmul.bf16.gmra.mxu0 %v3892
  %v4041 = vpop.f32.mrf.mxu0
  %v4042 = vadd.f32 0.0, %v4041
  %v4043 = vpop.f32.mrf.mxu0
  %v4044 = vadd.f32 0.0, %v4043
  %4045 = vdwg.mxu0
  %v4046 = vunpack.c.h.b16 %v1186
  %v4047 = vunpack.c.h.b16 %v1188
  %v4048 = vunpack.c.h.b16 %v1190
  %v4049 = vunpack.c.h.b16 %v1192
  %v4050 = vpack.c.b16 %v4047, %v4046
  %v4051 = vpack.c.b16 %v4049, %v4048
  %4054 = vmatpush.bf16.msra.mxu0 %v1838
  %4055 = vmatpush.bf16.msra.mxu0 %v1830
  %4056 = vmatpush.bf16.msra.mxu0 %v1822
  %4057 = vmatpush.bf16.msra.mxu0 %v1814
  %4058 = vmatpush.bf16.msra.mxu0 %v1806
  %4059 = vmatpush.bf16.msra.mxu0 %v1798
  %4060 = vmatpush.bf16.msra.mxu0 %v1790
  %4061 = vmatpush.bf16.msra.mxu0 %v1782
  %4062 = vmatmul.bf16.gmra.mxu0 %v4050
  %v4063 = vpop.f32.mrf.mxu0
  %v4064 = vadd.f32 %v3904, %v4063
  %v4065 = vpop.f32.mrf.mxu0
  %v4066 = vadd.f32 %v3906, %v4065
  %4067 = vmatmul.bf16.gmra.mxu0 %v4051
  %v4068 = vpop.f32.mrf.mxu0
  %v4069 = vadd.f32 %v3909, %v4068
  %v4070 = vpop.f32.mrf.mxu0
  %v4071 = vadd.f32 %v3911, %v4070
  %4072 = vdwg.mxu0
  %4073 = vmatpush.bf16.msra.mxu0 %v1839
  %4074 = vmatpush.bf16.msra.mxu0 %v1831
  %4075 = vmatpush.bf16.msra.mxu0 %v1823
  %4076 = vmatpush.bf16.msra.mxu0 %v1815
  %4077 = vmatpush.bf16.msra.mxu0 %v1807
  %4078 = vmatpush.bf16.msra.mxu0 %v1799
  %4079 = vmatpush.bf16.msra.mxu0 %v1791
  %4080 = vmatpush.bf16.msra.mxu0 %v1783
  %4081 = vmatmul.bf16.gmra.mxu0 %v4050
  %v4082 = vpop.f32.mrf.mxu0
  %v4083 = vadd.f32 %v3923, %v4082
  %v4084 = vpop.f32.mrf.mxu0
  %v4085 = vadd.f32 %v3925, %v4084
  %4086 = vmatmul.bf16.gmra.mxu0 %v4051
  %v4087 = vpop.f32.mrf.mxu0
  %v4088 = vadd.f32 %v3928, %v4087
  %v4089 = vpop.f32.mrf.mxu0
  %v4090 = vadd.f32 %v3930, %v4089
  %4091 = vdwg.mxu0
  %4092 = vmatpush.bf16.msra.mxu0 %v1840
  %4093 = vmatpush.bf16.msra.mxu0 %v1832
  %4094 = vmatpush.bf16.msra.mxu0 %v1824
  %4095 = vmatpush.bf16.msra.mxu0 %v1816
  %4096 = vmatpush.bf16.msra.mxu0 %v1808
  %4097 = vmatpush.bf16.msra.mxu0 %v1800
  %4098 = vmatpush.bf16.msra.mxu0 %v1792
  %4099 = vmatpush.bf16.msra.mxu0 %v1784
  %4100 = vmatmul.bf16.gmra.mxu0 %v4050
  %v4101 = vpop.f32.mrf.mxu0
  %v4102 = vadd.f32 %v3942, %v4101
  %v4103 = vpop.f32.mrf.mxu0
  %v4104 = vadd.f32 %v3944, %v4103
  %4105 = vmatmul.bf16.gmra.mxu0 %v4051
  %v4106 = vpop.f32.mrf.mxu0
  %v4107 = vadd.f32 %v3947, %v4106
  %v4108 = vpop.f32.mrf.mxu0
  %v4109 = vadd.f32 %v3949, %v4108
  %4110 = vdwg.mxu0
  %4111 = vmatpush.bf16.msra.mxu0 %v1841
  %4112 = vmatpush.bf16.msra.mxu0 %v1833
  %4113 = vmatpush.bf16.msra.mxu0 %v1825
  %4114 = vmatpush.bf16.msra.mxu0 %v1817
  %4115 = vmatpush.bf16.msra.mxu0 %v1809
  %4116 = vmatpush.bf16.msra.mxu0 %v1801
  %4117 = vmatpush.bf16.msra.mxu0 %v1793
  %4118 = vmatpush.bf16.msra.mxu0 %v1785
  %4119 = vmatmul.bf16.gmra.mxu0 %v4050
  %v4120 = vpop.f32.mrf.mxu0
  %v4121 = vadd.f32 %v3961, %v4120
  %v4122 = vpop.f32.mrf.mxu0
  %v4123 = vadd.f32 %v3963, %v4122
  %4124 = vmatmul.bf16.gmra.mxu0 %v4051
  %v4125 = vpop.f32.mrf.mxu0
  %v4126 = vadd.f32 %v3966, %v4125
  %v4127 = vpop.f32.mrf.mxu0
  %v4128 = vadd.f32 %v3968, %v4127
  %4129 = vdwg.mxu0
  %4130 = vmatpush.bf16.msra.mxu0 %v1842
  %4131 = vmatpush.bf16.msra.mxu0 %v1834
  %4132 = vmatpush.bf16.msra.mxu0 %v1826
  %4133 = vmatpush.bf16.msra.mxu0 %v1818
  %4134 = vmatpush.bf16.msra.mxu0 %v1810
  %4135 = vmatpush.bf16.msra.mxu0 %v1802
  %4136 = vmatpush.bf16.msra.mxu0 %v1794
  %4137 = vmatpush.bf16.msra.mxu0 %v1786
  %4138 = vmatmul.bf16.gmra.mxu0 %v4050
  %v4139 = vpop.f32.mrf.mxu0
  %v4140 = vadd.f32 %v3980, %v4139
  %v4141 = vpop.f32.mrf.mxu0
  %v4142 = vadd.f32 %v3982, %v4141
  %4143 = vmatmul.bf16.gmra.mxu0 %v4051
  %v4144 = vpop.f32.mrf.mxu0
  %v4145 = vadd.f32 %v3985, %v4144
  %v4146 = vpop.f32.mrf.mxu0
  %v4147 = vadd.f32 %v3987, %v4146
  %4148 = vdwg.mxu0
  %4149 = vmatpush.bf16.msra.mxu0 %v1843
  %4150 = vmatpush.bf16.msra.mxu0 %v1835
  %4151 = vmatpush.bf16.msra.mxu0 %v1827
  %4152 = vmatpush.bf16.msra.mxu0 %v1819
  %4153 = vmatpush.bf16.msra.mxu0 %v1811
  %4154 = vmatpush.bf16.msra.mxu0 %v1803
  %4155 = vmatpush.bf16.msra.mxu0 %v1795
  %4156 = vmatpush.bf16.msra.mxu0 %v1787
  %4157 = vmatmul.bf16.gmra.mxu0 %v4050
  %v4158 = vpop.f32.mrf.mxu0
  %v4159 = vadd.f32 %v3999, %v4158
  %v4160 = vpop.f32.mrf.mxu0
  %v4161 = vadd.f32 %v4001, %v4160
  %4162 = vmatmul.bf16.gmra.mxu0 %v4051
  %v4163 = vpop.f32.mrf.mxu0
  %v4164 = vadd.f32 %v4004, %v4163
  %v4165 = vpop.f32.mrf.mxu0
  %v4166 = vadd.f32 %v4006, %v4165
  %4167 = vdwg.mxu0
  %4168 = vmatpush.bf16.msra.mxu0 %v1844
  %4169 = vmatpush.bf16.msra.mxu0 %v1836
  %4170 = vmatpush.bf16.msra.mxu0 %v1828
  %4171 = vmatpush.bf16.msra.mxu0 %v1820
  %4172 = vmatpush.bf16.msra.mxu0 %v1812
  %4173 = vmatpush.bf16.msra.mxu0 %v1804
  %4174 = vmatpush.bf16.msra.mxu0 %v1796
  %4175 = vmatpush.bf16.msra.mxu0 %v1788
  %4176 = vmatmul.bf16.gmra.mxu0 %v4050
  %v4177 = vpop.f32.mrf.mxu0
  %v4178 = vadd.f32 %v4018, %v4177
  %v4179 = vpop.f32.mrf.mxu0
  %v4180 = vadd.f32 %v4020, %v4179
  %4181 = vmatmul.bf16.gmra.mxu0 %v4051
  %v4182 = vpop.f32.mrf.mxu0
  %v4183 = vadd.f32 %v4023, %v4182
  %v4184 = vpop.f32.mrf.mxu0
  %v4185 = vadd.f32 %v4025, %v4184
  %4186 = vdwg.mxu0
  %4187 = vmatpush.bf16.msra.mxu0 %v1845
  %4188 = vmatpush.bf16.msra.mxu0 %v1837
  %4189 = vmatpush.bf16.msra.mxu0 %v1829
  %4190 = vmatpush.bf16.msra.mxu0 %v1821
  %4191 = vmatpush.bf16.msra.mxu0 %v1813
  %4192 = vmatpush.bf16.msra.mxu0 %v1805
  %4193 = vmatpush.bf16.msra.mxu0 %v1797
  %4194 = vmatpush.bf16.msra.mxu0 %v1789
  %4195 = vmatmul.bf16.gmra.mxu0 %v4050
  %v4196 = vpop.f32.mrf.mxu0
  %v4197 = vadd.f32 %v4037, %v4196
  %v4198 = vpop.f32.mrf.mxu0
  %v4199 = vadd.f32 %v4039, %v4198
  %4200 = vmatmul.bf16.gmra.mxu0 %v4051
  %v4201 = vpop.f32.mrf.mxu0
  %v4202 = vadd.f32 %v4042, %v4201
  %v4203 = vpop.f32.mrf.mxu0
  %v4204 = vadd.f32 %v4044, %v4203
  %4205 = vdwg.mxu0
  %v4206 = vadd.f32 %v4064, %v2064
  %v4207 = vadd.f32 %v4083, %v2065
  %v4208 = vadd.f32 %v4102, %v2066
  %v4209 = vadd.f32 %v4121, %v2067
  %v4210 = vadd.f32 %v4140, %v2068
  %v4211 = vadd.f32 %v4159, %v2069
  %v4212 = vadd.f32 %v4178, %v2070
  %v4213 = vadd.f32 %v4197, %v2071
  %v4214 = vadd.f32 %v4066, %v2064
  %v4215 = vadd.f32 %v4085, %v2065
  %v4216 = vadd.f32 %v4104, %v2066
  %v4217 = vadd.f32 %v4123, %v2067
  %v4218 = vadd.f32 %v4142, %v2068
  %v4219 = vadd.f32 %v4161, %v2069
  %v4220 = vadd.f32 %v4180, %v2070
  %v4221 = vadd.f32 %v4199, %v2071
  %v4222 = vadd.f32 %v4069, %v2064
  %v4223 = vadd.f32 %v4088, %v2065
  %v4224 = vadd.f32 %v4107, %v2066
  %v4225 = vadd.f32 %v4126, %v2067
  %v4226 = vadd.f32 %v4145, %v2068
  %v4227 = vadd.f32 %v4164, %v2069
  %v4228 = vadd.f32 %v4183, %v2070
  %v4229 = vadd.f32 %v4202, %v2071
  %v4230 = vadd.f32 %v4071, %v2064
  %v4231 = vadd.f32 %v4090, %v2065
  %v4232 = vadd.f32 %v4109, %v2066
  %v4233 = vadd.f32 %v4128, %v2067
  %v4234 = vadd.f32 %v4147, %v2068
  %v4235 = vadd.f32 %v4166, %v2069
  %v4236 = vadd.f32 %v4185, %v2070
  %v4237 = vadd.f32 %v4204, %v2071
  %v4238 = vpack.c.bf16 %v4214, %v4206
  %v4239 = vpack.c.bf16 %v4215, %v4207
  %v4240 = vpack.c.bf16 %v4216, %v4208
  %v4241 = vpack.c.bf16 %v4217, %v4209
  %v4242 = vpack.c.bf16 %v4218, %v4210
  %v4243 = vpack.c.bf16 %v4219, %v4211
  %v4244 = vpack.c.bf16 %v4220, %v4212
  %v4245 = vpack.c.bf16 %v4221, %v4213
  %v4246 = vpack.c.bf16 %v4230, %v4222
  %v4247 = vpack.c.bf16 %v4231, %v4223
  %v4248 = vpack.c.bf16 %v4232, %v4224
  %v4249 = vpack.c.bf16 %v4233, %v4225
  %v4250 = vpack.c.bf16 %v4234, %v4226
  %v4251 = vpack.c.bf16 %v4235, %v4227
  %v4252 = vpack.c.bf16 %v4236, %v4228
  %v4253 = vpack.c.bf16 %v4237, %v4229
  %4254 = vrot.lane.b32.xlu0 %v1287, 80
  %v4255 = vpop.permute.xlu0 %4254
  %4256 = vrot.lane.b32.xlu0 %v1289, 80
  %v4257 = vpop.permute.xlu0 %4256
  %4258 = vrot.lane.b32.xlu0 %v1292, 80
  %v4259 = vpop.permute.xlu0 %4258
  %4260 = vrot.lane.b32.xlu0 %v1294, 80
  %v4261 = vpop.permute.xlu0 %4260
  %4266 = vmatpush.bf16.msra.mxu0 %v2519
  %4267 = vmatpush.bf16.msra.mxu0 %v2518
  %4268 = vmatpush.bf16.msra.mxu0 %v2517
  %4269 = vmatpush.bf16.msra.mxu0 %v2516
  %4270 = vmatpush.bf16.msra.mxu0 %v2515
  %4271 = vmatpush.bf16.msra.mxu0 %v2514
  %4272 = vmatpush.bf16.msra.mxu0 %v2513
  %4273 = vmatpush.bf16.msra.mxu0 %v2512
  %4274 = vmatmul.bf16.gmra.mxu0 %v4238
  %v4275 = vpop.f32.mrf.mxu0
  %v4276 = vadd.f32 %v4255, %v4275
  %v4277 = vpop.f32.mrf.mxu0
  %v4278 = vadd.f32 %v4257, %v4277
  %4279 = vmatmul.bf16.gmra.mxu0 %v4246
  %v4280 = vpop.f32.mrf.mxu0
  %v4281 = vadd.f32 %v4259, %v4280
  %v4282 = vpop.f32.mrf.mxu0
  %v4283 = vadd.f32 %v4261, %v4282
  %4284 = vdwg.mxu0
  %4285 = vmatpush.bf16.msra.mxu0 %v2527
  %4286 = vmatpush.bf16.msra.mxu0 %v2526
  %4287 = vmatpush.bf16.msra.mxu0 %v2525
  %4288 = vmatpush.bf16.msra.mxu0 %v2524
  %4289 = vmatpush.bf16.msra.mxu0 %v2523
  %4290 = vmatpush.bf16.msra.mxu0 %v2522
  %4291 = vmatpush.bf16.msra.mxu0 %v2521
  %4292 = vmatpush.bf16.msra.mxu0 %v2520
  %4293 = vmatmul.bf16.gmra.mxu0 %v4239
  %v4294 = vpop.f32.mrf.mxu0
  %v4295 = vadd.f32 %v4276, %v4294
  %v4296 = vpop.f32.mrf.mxu0
  %v4297 = vadd.f32 %v4278, %v4296
  %4298 = vmatmul.bf16.gmra.mxu0 %v4247
  %v4299 = vpop.f32.mrf.mxu0
  %v4300 = vadd.f32 %v4281, %v4299
  %v4301 = vpop.f32.mrf.mxu0
  %v4302 = vadd.f32 %v4283, %v4301
  %4303 = vdwg.mxu0
  %4304 = vmatpush.bf16.msra.mxu0 %v2535
  %4305 = vmatpush.bf16.msra.mxu0 %v2534
  %4306 = vmatpush.bf16.msra.mxu0 %v2533
  %4307 = vmatpush.bf16.msra.mxu0 %v2532
  %4308 = vmatpush.bf16.msra.mxu0 %v2531
  %4309 = vmatpush.bf16.msra.mxu0 %v2530
  %4310 = vmatpush.bf16.msra.mxu0 %v2529
  %4311 = vmatpush.bf16.msra.mxu0 %v2528
  %4312 = vmatmul.bf16.gmra.mxu0 %v4240
  %v4313 = vpop.f32.mrf.mxu0
  %v4314 = vadd.f32 %v4295, %v4313
  %v4315 = vpop.f32.mrf.mxu0
  %v4316 = vadd.f32 %v4297, %v4315
  %4317 = vmatmul.bf16.gmra.mxu0 %v4248
  %v4318 = vpop.f32.mrf.mxu0
  %v4319 = vadd.f32 %v4300, %v4318
  %v4320 = vpop.f32.mrf.mxu0
  %v4321 = vadd.f32 %v4302, %v4320
  %4322 = vdwg.mxu0
  %4323 = vmatpush.bf16.msra.mxu0 %v2543
  %4324 = vmatpush.bf16.msra.mxu0 %v2542
  %4325 = vmatpush.bf16.msra.mxu0 %v2541
  %4326 = vmatpush.bf16.msra.mxu0 %v2540
  %4327 = vmatpush.bf16.msra.mxu0 %v2539
  %4328 = vmatpush.bf16.msra.mxu0 %v2538
  %4329 = vmatpush.bf16.msra.mxu0 %v2537
  %4330 = vmatpush.bf16.msra.mxu0 %v2536
  %4331 = vmatmul.bf16.gmra.mxu0 %v4241
  %v4332 = vpop.f32.mrf.mxu0
  %v4333 = vadd.f32 %v4314, %v4332
  %v4334 = vpop.f32.mrf.mxu0
  %v4335 = vadd.f32 %v4316, %v4334
  %4336 = vmatmul.bf16.gmra.mxu0 %v4249
  %v4337 = vpop.f32.mrf.mxu0
  %v4338 = vadd.f32 %v4319, %v4337
  %v4339 = vpop.f32.mrf.mxu0
  %v4340 = vadd.f32 %v4321, %v4339
  %4341 = vdwg.mxu0
  %4342 = vmatpush.bf16.msra.mxu0 %v2551
  %4343 = vmatpush.bf16.msra.mxu0 %v2550
  %4344 = vmatpush.bf16.msra.mxu0 %v2549
  %4345 = vmatpush.bf16.msra.mxu0 %v2548
  %4346 = vmatpush.bf16.msra.mxu0 %v2547
  %4347 = vmatpush.bf16.msra.mxu0 %v2546
  %4348 = vmatpush.bf16.msra.mxu0 %v2545
  %4349 = vmatpush.bf16.msra.mxu0 %v2544
  %4350 = vmatmul.bf16.gmra.mxu0 %v4242
  %v4351 = vpop.f32.mrf.mxu0
  %v4352 = vadd.f32 %v4333, %v4351
  %v4353 = vpop.f32.mrf.mxu0
  %v4354 = vadd.f32 %v4335, %v4353
  %4355 = vmatmul.bf16.gmra.mxu0 %v4250
  %v4356 = vpop.f32.mrf.mxu0
  %v4357 = vadd.f32 %v4338, %v4356
  %v4358 = vpop.f32.mrf.mxu0
  %v4359 = vadd.f32 %v4340, %v4358
  %4360 = vdwg.mxu0
  %4361 = vmatpush.bf16.msra.mxu0 %v2559
  %4362 = vmatpush.bf16.msra.mxu0 %v2558
  %4363 = vmatpush.bf16.msra.mxu0 %v2557
  %4364 = vmatpush.bf16.msra.mxu0 %v2556
  %4365 = vmatpush.bf16.msra.mxu0 %v2555
  %4366 = vmatpush.bf16.msra.mxu0 %v2554
  %4367 = vmatpush.bf16.msra.mxu0 %v2553
  %4368 = vmatpush.bf16.msra.mxu0 %v2552
  %4369 = vmatmul.bf16.gmra.mxu0 %v4243
  %v4370 = vpop.f32.mrf.mxu0
  %v4371 = vadd.f32 %v4352, %v4370
  %v4372 = vpop.f32.mrf.mxu0
  %v4373 = vadd.f32 %v4354, %v4372
  %4374 = vmatmul.bf16.gmra.mxu0 %v4251
  %v4375 = vpop.f32.mrf.mxu0
  %v4376 = vadd.f32 %v4357, %v4375
  %v4377 = vpop.f32.mrf.mxu0
  %v4378 = vadd.f32 %v4359, %v4377
  %4379 = vdwg.mxu0
  %4380 = vmatpush.bf16.msra.mxu0 %v2567
  %4381 = vmatpush.bf16.msra.mxu0 %v2566
  %4382 = vmatpush.bf16.msra.mxu0 %v2565
  %4383 = vmatpush.bf16.msra.mxu0 %v2564
  %4384 = vmatpush.bf16.msra.mxu0 %v2563
  %4385 = vmatpush.bf16.msra.mxu0 %v2562
  %4386 = vmatpush.bf16.msra.mxu0 %v2561
  %4387 = vmatpush.bf16.msra.mxu0 %v2560
  %4388 = vmatmul.bf16.gmra.mxu0 %v4244
  %v4389 = vpop.f32.mrf.mxu0
  %v4390 = vadd.f32 %v4371, %v4389
  %v4391 = vpop.f32.mrf.mxu0
  %v4392 = vadd.f32 %v4373, %v4391
  %4393 = vmatmul.bf16.gmra.mxu0 %v4252
  %v4394 = vpop.f32.mrf.mxu0
  %v4395 = vadd.f32 %v4376, %v4394
  %v4396 = vpop.f32.mrf.mxu0
  %v4397 = vadd.f32 %v4378, %v4396
  %4398 = vdwg.mxu0
  %4399 = vmatpush.bf16.msra.mxu0 %v2575
  %4400 = vmatpush.bf16.msra.mxu0 %v2574
  %4401 = vmatpush.bf16.msra.mxu0 %v2573
  %4402 = vmatpush.bf16.msra.mxu0 %v2572
  %4403 = vmatpush.bf16.msra.mxu0 %v2571
  %4404 = vmatpush.bf16.msra.mxu0 %v2570
  %4405 = vmatpush.bf16.msra.mxu0 %v2569
  %4406 = vmatpush.bf16.msra.mxu0 %v2568
  %4407 = vmatmul.bf16.gmra.mxu0 %v4245
  %v4408 = vpop.f32.mrf.mxu0
  %v4409 = vadd.f32 %v4390, %v4408
  %v4410 = vpop.f32.mrf.mxu0
  %v4411 = vadd.f32 %v4392, %v4410
  %4412 = vmatmul.bf16.gmra.mxu0 %v4253
  %v4413 = vpop.f32.mrf.mxu0
  %v4414 = vadd.f32 %v4395, %v4413
  %v4415 = vpop.f32.mrf.mxu0
  %v4416 = vadd.f32 %v4397, %v4415
  %4417 = vdwg.mxu0
  %v4418 = vadd.f32 %v4409, %v2794
  %v4419 = vadd.f32 %v4411, %v2794
  %v4420 = vadd.f32 %v4414, %v2794
  %v4421 = vadd.f32 %v4416, %v2794
  %4426 = vrot.lane.b32.xlu0 %v3338, 16
  %v4427 = vpop.permute.xlu0 %4426
  %4428 = vrot.lane.b32.xlu0 %v3339, 16
  %v4429 = vpop.permute.xlu0 %4428
  %4430 = vrot.lane.b32.xlu0 %v3340, 16
  %v4431 = vpop.permute.xlu0 %4430
  %4432 = vrot.lane.b32.xlu0 %v3341, 16
  %v4433 = vpop.permute.xlu0 %4432
  %4442 = vrot.lane.b32.xlu0 %v3880, 32
  %v4443 = vpop.permute.xlu0 %4442
  %4444 = vrot.lane.b32.xlu0 %v3881, 32
  %v4445 = vpop.permute.xlu0 %4444
  %4446 = vrot.lane.b32.xlu0 %v3882, 32
  %v4447 = vpop.permute.xlu0 %4446
  %4448 = vrot.lane.b32.xlu0 %v3883, 32
  %v4449 = vpop.permute.xlu0 %4448
  %4458 = vrot.lane.b32.xlu0 %v4418, 48
  %v4459 = vpop.permute.xlu0 %4458
  %4460 = vrot.lane.b32.xlu0 %v4419, 48
  %v4461 = vpop.permute.xlu0 %4460
  %4462 = vrot.lane.b32.xlu0 %v4420, 48
  %v4463 = vpop.permute.xlu0 %4462
  %4464 = vrot.lane.b32.xlu0 %v4421, 48
  %v4465 = vpop.permute.xlu0 %4464
  %vm4470 = vcmask 130048
  %v4471 = vsel %vm4470, %v2796, %v4427
  %v4472 = vsel %vm4470, %v2797, %v4429
  %v4473 = vsel %vm4470, %v2798, %v4431
  %v4474 = vsel %vm4470, %v2799, %v4433
  %vm4475 = vcmask 261120
  %v4476 = vsel %vm4475, %v4471, %v4443
  %v4477 = vsel %vm4475, %v4472, %v4445
  %v4478 = vsel %vm4475, %v4473, %v4447
  %v4479 = vsel %vm4475, %v4474, %v4449
  %vm4480 = vcmask 392192
  %v4481 = vsel %vm4480, %v4476, %v4459
  %v4482 = vsel %vm4480, %v4477, %v4461
  %v4483 = vsel %vm4480, %v4478, %v4463
  %v4484 = vsel %vm4480, %v4479, %v4465
  %vm4485 = vcmask 523264
  %4486 = vst.msk [vmem:[%s15] sm:$0xff] %vm4485, %v4481
  %4487 = vst.msk [vmem:[%s15 + $0x8] sm:$0xff] %vm4485, %v4482
  %4488 = vst.msk [vmem:[%s15 + $0x10] sm:$0xff] %vm4485, %v4483
  %4489 = vst.msk [vmem:[%s15 + $0x18] sm:$0xff] %vm4485, %v4484
  // Predicated region
  $region62: #{column_decoder_forward.1} parent=0 // pred_check
    _
  $region63: #{column_decoder_forward.1} parent=0 // pred_check_branch
    %4491 = sbr.rel (0) target = $region65
  $region64: #{column_decoder_forward.1} parent=0 // pred_region
    _
  $region65: #{column_decoder_forward.1} parent=0 // pred_fallthru
    _
  // Predicated region
  $region66: #{column_decoder_forward.1} parent=0 // pred_check
    _
  $region67: #{column_decoder_forward.1} parent=0 // pred_check_branch
    %4493 = sbr.rel (0) target = $region69
  $region68: #{column_decoder_forward.1} parent=0 // pred_region
    _
  $region69: #{column_decoder_forward.1} parent=0 // pred_fallthru
    _

</llo_original>
